<compile_context>
chip_gen: v7x
topology: tpu7x:2x2x1
jax: 0.10.0
libtpu: 0.0.40
codegen_flags: <defaults>
</compile_context>

<pallas_src>
import math
import functools

import jax
import jax.numpy as jnp
from jax.experimental import pallas as pl
from jax.experimental.pallas import tpu as pltpu

DEFAULT_MAX_TARGET_POSITIONS = 2000
LN_EPS = 1e-5


# ----------------------------- shared host-side helpers ----------------------

def _sinusoidal_pos(T, C, theta=DEFAULT_MAX_TARGET_POSITIONS):
    half = C // 2
    inv_freq = jnp.float32(theta) ** -(jnp.arange(half, dtype=jnp.float32) / half)
    ang = jnp.arange(T, dtype=jnp.float32)[:, None] * inv_freq[None, :]
    return jnp.concatenate([jnp.sin(ang), jnp.cos(ang)], axis=-1)      # (T, C)


def _tpu_generation():
    """(is_v5e, is_v7x, per-core VMEM bytes, tensorcores per chip)."""
    kind = ""
    try:
        kind = jax.devices()[0].device_kind.lower()
    except Exception:
        pass
    is_v5e = ("v5e" in kind) or ("v5 lite" in kind) or ("v5lite" in kind)
    is_v7 = ("v7" in kind) or ("tpu7" in kind)
    try:
        vmem_cap = int(pltpu.get_tpu_info().vmem_capacity_bytes)
    except Exception:
        vmem_cap = (64 if is_v7 else 128) * 2 ** 20
    if is_v7:
        vmem_cap = min(vmem_cap, 64 * 2 ** 20)         # per-TC VMEM on v7x
    num_cores = 2 if is_v7 else 1
    return is_v5e, is_v7, vmem_cap, num_cores


def _pick_block_b(B, T, target_rows, min_steps, fits):
    """Fold batch elements per grid step so the matmul LHS has >= target rows,
    while keeping >= min_steps grid steps (megacore) and fitting VMEM."""
    divs = sorted(d for d in range(1, B + 1) if B % d == 0)
    cands = [d for d in divs if B // d >= min_steps] or [1]
    bt = next((d for d in cands if d * T >= target_rows), cands[-1])
    while bt > cands[0] and not fits(bt):
        bt = max(d for d in cands if d < bt)
    return bt


# ----------------------------- the Pallas kernel ------------------------------

def _decoder_kernel(kernel_sizes, c_real, lens_ref, x_ref, pos_ref,
                    ln_ref, dw_ref, pw_ref, pb_ref, out_ref):
    """One grid step = one block of BT batch elements (whole sequence).
    Runs: pos-emb add, pad mask, all EncSepConvLayer blocks
    (LN -> mask -> sepconv -> relu -> sepconv -> relu -> residual)
    and the final LayerNorm.  Compute is carried as a flat (BT*T, CP) slab."""
    BT, T, CP = x_ref.shape
    BTT = BT * T
    L = len(kernel_sizes)
    inv_c = 1.0 / float(c_real)

    bb = pl.program_id(0)

    # --- keep mask / in-sequence row index as lane-replicated columns --------
    t_iota = jax.lax.broadcasted_iota(jnp.int32, (BT, T, 1), 1)
    b_iota = jax.lax.broadcasted_iota(jnp.int32, (BT, T, 1), 0)
    len_b = jnp.zeros((BT, T, 1), jnp.int32)
    for i in range(BT):                                # BT cheap SMEM scalar reads
        len_b = jnp.where(b_iota == i, lens_ref[bb * BT + i], len_b)
    keep_col = (t_iota < len_b).astype(jnp.float32).reshape(BTT, 1)
    rows_col = t_iota.reshape(BTT, 1)

    # channel mask: real channels vs. lane padding (for LayerNorm stats)
    cmask = (jax.lax.broadcasted_iota(jnp.int32, (1, CP), 1) < c_real
             ).astype(jnp.float32)

    # --- hoisted depthwise edge masks: one column per distinct shift ---------
    shifts = sorted({(k // 2) - j for k in kernel_sizes for j in range(k)} - {0})
    edge = {}
    for d in shifts:
        m = (rows_col >= d) if d > 0 else (rows_col < T + d)
        edge[d] = m.astype(jnp.float32)

    # --- x = (x + positions) * (1 - padding_mask); dropout = eval no-op ------
    x = (x_ref[...].astype(jnp.float32) + pos_ref[...][None, :, :]
         ).reshape(BTT, CP) * keep_col                                 # (BTT, CP)

    def layernorm(v, g, b):
        # stats over the c_real real channels; padded lanes of v are zero.
        mu = jnp.sum(v, axis=-1, keepdims=True) * inv_c
        xc = (v - mu) * cmask
        var = jnp.sum(xc * xc, axis=-1, keepdims=True) * inv_c
        return xc * jax.lax.rsqrt(var + LN_EPS) * g + b

    def sepconv(v, l, c, k):
        # Depthwise taps: roll along the time/sublane axis (XLU) + hoisted
        # edge-mask multiply.  Batch boundaries inside the slab are handled by
        # the same in-sequence edge mask.  Pointwise 1x1: bf16 MXU matmul with
        # f32 accumulation; depthwise bias pre-folded into pb.
        pad = k // 2
        dw_lc = dw_ref[l, c]                                           # (Kmax, CP) f32
        acc = v * dw_lc[pad:pad + 1, :]                                # d == 0 tap
        for j in range(k):                                             # static taps
            d = pad - j                                                # static shift
            if d == 0:
                continue
            rolled = pltpu.roll(v, shift=d % BTT, axis=0)
            acc = acc + rolled * dw_lc[j:j + 1, :] * edge[d]
        # TODO(synk): for large k (>=13) switch to lax.fori_loop(..., unroll=4)
        # with a dynamic roll shift to bound live ranges / VMEM temp pressure.
        # TODO(synk): run the tap loop in bf16 on v6e/v7x once packed-sublane
        # 16-bit rolls are verified on the deployed Mosaic version.
        y = jnp.dot(acc.astype(jnp.bfloat16), pw_ref[l, c],
                    preferred_element_type=jnp.float32)
        return y + pb_ref[l, c]                                        # fused bias

    for l, k in enumerate(kernel_sizes):
        residual = x
        h = layernorm(x, ln_ref[l, 0], ln_ref[l, 1])
        h = h * keep_col                             # masked_fill(padding_mask, 0)
        h = jnp.maximum(sepconv(h, l, 0, k), 0.0)    # conv1 + relu (dropout: no-op)
        h = jnp.maximum(sepconv(h, l, 1, k), 0.0)    # conv2 + relu (dropout: no-op)
        x = residual + h

    x = layernorm(x, ln_ref[L, 0], ln_ref[L, 1])     # final self.layer_norm
    out_ref[...] = x.reshape(BT, T, CP).astype(out_ref.dtype)


# ----------------------------- wrapper / glue ---------------------------------

def lightspeech_decoder(x, padding_mask, params, kernel_sizes, *, slice_output=True):
    """x: (B, T, C) float32, padding_mask: (B, T) bool (valid prefix + padded tail).
    Returns (B, T, C) float32 (or (B, T, CP) zero-padded lanes if slice_output=False,
    which avoids the host-side slice copy when feeding another lane-dense kernel)."""
    B, T, C = x.shape
    L = len(kernel_sizes)
    assert all(k % 2 == 1 for k in kernel_sizes), "even kernel sizes unsupported"
    assert T >= max(kernel_sizes)
    Kmax = max(kernel_sizes)
    CP = ((C + 127) // 128) * 128                    # lane-dense channel dim

    is_v5e, is_v7, vmem_cap, num_cores = _tpu_generation()

    # ScaledSinusoidalEmbedding, zero-padded to CP lanes.
    pos = _sinusoidal_pos(T, C) * params["pos_scale"]
    pos = jnp.pad(pos, ((0, 0), (0, CP - C)))

    # padding_mask -> per-batch valid lengths (contiguous-prefix assumption).
    # TODO(synk): arbitrary non-contiguous padding masks would need the full
    # mask as a lane-dense kernel input instead of prefetched lengths.
    lengths = jnp.sum(jnp.logical_not(padding_mask), axis=1).astype(jnp.int32)

    x_p = jnp.pad(x, ((0, 0), (0, 0), (0, CP - C)))

    # ---- pack all per-layer parameters into 4 stacked, lane-dense tensors ----
    ln = jnp.zeros((L + 1, 2, 1, CP), jnp.float32)   # [layer|final, gamma/beta, 1, CP]
    dw = jnp.zeros((L, 2, Kmax, CP), jnp.float32)    # depthwise taps (k, C) layout
    pw = jnp.zeros((L, 2, CP, CP), jnp.float32)      # pointwise (Cin, Cout) transposed
    pb = jnp.zeros((L, 2, 1, CP), jnp.float32)       # fused bias = db @ pw_t + pb
    for l, (lp, k) in enumerate(zip(params["layers"], kernel_sizes)):
        ln = ln.at[l, 0, 0, :C].set(lp["ln_g"].reshape(C))
        ln = ln.at[l, 1, 0, :C].set(lp["ln_b"].reshape(C))
        dw = dw.at[l, 0, :k, :C].set(lp["dw1_w"])
        dw = dw.at[l, 1, :k, :C].set(lp["dw2_w"])
        pw = pw.at[l, 0, :C, :C].set(lp["pw1_wT"])
        pw = pw.at[l, 1, :C, :C].set(lp["pw2_wT"])
        fb1 = lp["dw1_b"].reshape(1, C) @ lp["pw1_wT"] + lp["pw1_b"].reshape(1, C)
        fb2 = lp["dw2_b"].reshape(1, C) @ lp["pw2_wT"] + lp["pw2_b"].reshape(1, C)
        pb = pb.at[l, 0, 0, :C].set(fb1.reshape(C))
        pb = pb.at[l, 1, 0, :C].set(fb2.reshape(C))
    ln = ln.at[L, 0, 0, :C].set(params["final_ln_g"].reshape(C))
    ln = ln.at[L, 1, 0, :C].set(params["final_ln_b"].reshape(C))
    pw = pw.astype(jnp.bfloat16)                     # bf16 MXU operands

    # ---- per-generation VMEM budget and batch-fold / grid choice -------------
    param_bytes = (ln.size * 4 + dw.size * 4 + pb.size * 4
                   + pw.size * 2 + pos.size * 4)     # single-buffered params
    budget = int(0.75 * vmem_cap)                    # headroom for compiler scratch

    def footprint(bt):
        blk = bt * T * CP * 4
        # double-buffered x/out blocks + resident params + live f32 slabs in the body
        return 4 * blk + param_bytes + 8 * blk

    target_rows = 128 if is_v5e else 256             # v5e MXU is 4x128^2
    min_steps = num_cores if B >= num_cores else 1   # keep both v7x TCs busy
    BT = _pick_block_b(B, T, target_rows, min_steps, lambda bt: footprint(bt) <= budget)
    nb = B // BT
    # TODO(synk): if even BT=1 exceeds the budget (very long T on v7x), add a
    # "parallel" T-tile grid axis with conv halos (halo = sum_l 2*(k_l//2)).
    vmem_limit = int(min(max(2 * footprint(BT), 32 * 2 ** 20), budget))

    def run(single_buffer_params):
        def const_spec(shape):
            zeros = (0,) * len(shape)
            idx = lambda bb, lens: zeros             # grid-invariant block
            if single_buffer_params:
                return pl.BlockSpec(shape, idx, pipeline_mode=pl.Buffered(1))
            return pl.BlockSpec(shape, idx)

        grid_spec = pltpu.PrefetchScalarGridSpec(
            num_scalar_prefetch=1,                   # lengths -> SMEM
            grid=(nb,),
            in_specs=[
                pl.BlockSpec((BT, T, CP), lambda bb, lens: (bb, 0, 0)),   # x
                const_spec(pos.shape),               # pos emb      (Buffered(1))
                const_spec(ln.shape),                # LN params    (Buffered(1))
                const_spec(dw.shape),                # depthwise w  (Buffered(1))
                const_spec(pw.shape),                # pointwise w  (Buffered(1), bf16)
                const_spec(pb.shape),                # fused biases (Buffered(1))
            ],
            out_specs=pl.BlockSpec((BT, T, CP), lambda bb, lens: (bb, 0, 0)),
        )
        return pl.pallas_call(
            functools.partial(_decoder_kernel, tuple(kernel_sizes), C),
            out_shape=jax.ShapeDtypeStruct((B, T, CP), x.dtype),
            grid_spec=grid_spec,
            compiler_params=pltpu.CompilerParams(
                dimension_semantics=("parallel",),
                vmem_limit_bytes=vmem_limit,
            ),
        )(lengths, x_p, pos, ln, dw, pw, pb)

    try:
        out = jax.block_until_ready(run(True))
    except Exception:
        # pl.Buffered(1) not supported by this jax/Mosaic build -> default buffering.
        out = run(False)

    if slice_output:
        return out[:, :, :C]
    return out


# ----------------------------- pure-JAX reference (f32) -----------------------

def _reference_forward(x, padding_mask, params, kernel_sizes):
    B, T, C = x.shape
    pos = _sinusoidal_pos(T, C) * params["pos_scale"]
    keep = (1.0 - padding_mask.astype(jnp.float32))[..., None]
    h = (x + pos[None, :, :]) * keep

    def ln(v, g, b):
        mu = jnp.mean(v, axis=-1, keepdims=True)
        var = jnp.mean((v - mu) ** 2, axis=-1, keepdims=True)
        return (v - mu) / jnp.sqrt(var + LN_EPS) * g.reshape(1, 1, C) + b.reshape(1, 1, C)

    def sepconv(v, dwt, db, pwt, pbias, k):
        pad = k // 2
        vp = jnp.pad(v, ((0, 0), (pad, pad), (0, 0)))
        acc = jnp.zeros_like(v)
        for j in range(k):
            acc = acc + vp[:, j:j + T, :] * dwt[j].reshape(1, 1, C)
        acc = acc + db.reshape(1, 1, C)
        return jnp.einsum("btc,cd->btd", acc, pwt) + pbias.reshape(1, 1, C)

    for lp, k in zip(params["layers"], kernel_sizes):
        residual = h
        y = ln(h, lp["ln_g"], lp["ln_b"])
        y = y * keep
        y = jnp.maximum(sepconv(y, lp["dw1_w"], lp["dw1_b"], lp["pw1_wT"], lp["pw1_b"], k), 0.0)
        y = jnp.maximum(sepconv(y, lp["dw2_w"], lp["dw2_b"], lp["pw2_wT"], lp["pw2_b"], k), 0.0)
        h = residual + y
    return ln(h, params["final_ln_g"], params["final_ln_b"])


# ----------------------------- deterministic parameter init -------------------

def init_params(key, dim, kernel_sizes):
    params = {
        "pos_scale": jnp.float32(dim ** -0.5),       # ScaledSinusoidal scale init
        "final_ln_g": jnp.ones((1, dim), jnp.float32),
        "final_ln_b": jnp.zeros((1, dim), jnp.float32),
        "layers": [],
    }
    for k in kernel_sizes:
        keys = jax.random.split(key, 9)
        key = keys[0]
        lp = {
            "ln_g": jnp.ones((1, dim), jnp.float32),
            "ln_b": jnp.zeros((1, dim), jnp.float32),
            # depthwise weights stored as (k, C); pointwise stored as (C_in, C_out)
            "dw1_w": jax.random.normal(keys[1], (k, dim), jnp.float32) / math.sqrt(k),
            "dw1_b": jax.random.normal(keys[2], (1, dim), jnp.float32) * 0.01,
            "pw1_wT": jax.random.normal(keys[3], (dim, dim), jnp.float32) / math.sqrt(dim),
            "pw1_b": jax.random.normal(keys[4], (1, dim), jnp.float32) * 0.01,
            "dw2_w": jax.random.normal(keys[5], (k, dim), jnp.float32) / math.sqrt(k),
            "dw2_b": jax.random.normal(keys[6], (1, dim), jnp.float32) * 0.01,
            "pw2_wT": jax.random.normal(keys[7], (dim, dim), jnp.float32) / math.sqrt(dim),
            "pw2_b": jax.random.normal(keys[8], (1, dim), jnp.float32) * 0.01,
        }
        params["layers"].append(lp)
    return params


if __name__ == "__main__":
    key = jax.random.PRNGKey(0)
    B, T, C = 2, 16, 32
    kernel_sizes = [5, 3]

    kx, kp = jax.random.split(key, 2)
    x = jax.random.normal(kx, (B, T, C), jnp.float32)
    lengths = jnp.array([16, 12], dtype=jnp.int32)
    padding_mask = jnp.arange(T, dtype=jnp.int32)[None, :] >= lengths[:, None]  # (B, T) bool

    params = init_params(kp, C, kernel_sizes)

    out = lightspeech_decoder(x, padding_mask, params, kernel_sizes)
    out = jax.block_until_ready(out)

    assert out.shape == (B, T, C), out.shape
    assert bool(jnp.all(jnp.isfinite(out)))

    ref = _reference_forward(x, padding_mask, params, kernel_sizes)
    err = float(jnp.max(jnp.abs(out - ref)))
    assert err < 1e-1, f"max abs err vs f32 reference: {err}"
    print("KERNEL_OK")
</pallas_src>

<mosaic_0001>
module attributes {stable_mosaic.version = 11 : i64} {
  func.func @_decoder_kernel(%arg0: i32, %arg1: memref<2xi32, #tpu.memory_space<smem>>, %arg2: memref<2x16x128xf32, #tpu.memory_space<vmem>>, %arg3: memref<16x128xf32, #tpu.memory_space<vmem>>, %arg4: memref<3x2x1x128xf32, #tpu.memory_space<vmem>>, %arg5: memref<2x2x5x128xf32, #tpu.memory_space<vmem>>, %arg6: memref<2x2x128x128xbf16, #tpu.memory_space<vmem>>, %arg7: memref<2x2x1x128xf32, #tpu.memory_space<vmem>>, %arg8: memref<2x16x128xf32, #tpu.memory_space<vmem>>) attributes {dimension_semantics = [#tpu.dimension_semantics<parallel>], iteration_bounds = array<i64: 1>, scalar_prefetch = 1 : i64, scratch_operands = 0 : i64, tpu.core_type = #tpu.core_type<tc>, window_params = [{transform_indices = @transform_0, window_bounds = array<i64: 2, 16, 128>}, {pipeline_mode = #tpu.pipeline_mode<synchronous>, transform_indices = @transform_1, window_bounds = array<i64: 16, 128>}, {pipeline_mode = #tpu.pipeline_mode<synchronous>, transform_indices = @transform_2, window_bounds = array<i64: 3, 2, 1, 128>}, {pipeline_mode = #tpu.pipeline_mode<synchronous>, transform_indices = @transform_3, window_bounds = array<i64: 2, 2, 5, 128>}, {pipeline_mode = #tpu.pipeline_mode<synchronous>, transform_indices = @transform_4, window_bounds = array<i64: 2, 2, 128, 128>}, {pipeline_mode = #tpu.pipeline_mode<synchronous>, transform_indices = @transform_5, window_bounds = array<i64: 2, 2, 1, 128>}, {transform_indices = @transform_6, window_bounds = array<i64: 2, 16, 128>}]} {
    %0 = tpu.iota {dimensions = array<i32: 1>} : vector<2x16x1xi32>
    %1 = tpu.iota {dimensions = array<i32: 0>} : vector<2x16x1xi32>
    %c0_i32 = arith.constant 0 : i32
    %2 = vector.broadcast %c0_i32 : i32 to vector<2x16x1xi32>
    %c0_i32_0 = arith.constant 0 : i32
    %3 = vector.broadcast %c0_i32_0 : i32 to vector<2x16x1xi32>
    %4 = arith.cmpi eq, %1, %3 : vector<2x16x1xi32>
    %c2_i32 = arith.constant 2 : i32
    %5 = arith.muli %arg0, %c2_i32 : i32
    %c0_i32_1 = arith.constant 0 : i32
    %6 = arith.addi %5, %c0_i32_1 : i32
    %7 = arith.index_cast %6 : i32 to index
    %8 = memref.load %arg1[%7] : memref<2xi32, #tpu.memory_space<smem>>
    %9 = vector.broadcast %8 : i32 to vector<2x16x1xi32>
    %10 = arith.select %4, %9, %2 : vector<2x16x1xi1>, vector<2x16x1xi32>
    %c1_i32 = arith.constant 1 : i32
    %11 = vector.broadcast %c1_i32 : i32 to vector<2x16x1xi32>
    %12 = arith.cmpi eq, %1, %11 : vector<2x16x1xi32>
    %c2_i32_2 = arith.constant 2 : i32
    %13 = arith.muli %arg0, %c2_i32_2 : i32
    %c1_i32_3 = arith.constant 1 : i32
    %14 = arith.addi %13, %c1_i32_3 : i32
    %15 = arith.index_cast %14 : i32 to index
    %16 = memref.load %arg1[%15] : memref<2xi32, #tpu.memory_space<smem>>
    %17 = vector.broadcast %16 : i32 to vector<2x16x1xi32>
    %18 = arith.select %12, %17, %10 : vector<2x16x1xi1>, vector<2x16x1xi32>
    %19 = arith.cmpi slt, %0, %18 : vector<2x16x1xi32>
    %20 = arith.extui %19 : vector<2x16x1xi1> to vector<2x16x1xi32>
    %21 = arith.sitofp %20 : vector<2x16x1xi32> to vector<2x16x1xf32>
    %22 = vector.shape_cast %21 : vector<2x16x1xf32> to vector<32x1xf32>
    %23 = vector.shape_cast %0 : vector<2x16x1xi32> to vector<32x1xi32>
    %24 = tpu.iota {dimensions = array<i32: 1>} : vector<1x128xi32>
    %c32_i32 = arith.constant 32 : i32
    %25 = vector.broadcast %c32_i32 : i32 to vector<1x128xi32>
    %26 = arith.cmpi slt, %24, %25 : vector<1x128xi32>
    %27 = arith.extui %26 : vector<1x128xi1> to vector<1x128xi32>
    %28 = arith.sitofp %27 : vector<1x128xi32> to vector<1x128xf32>
    %c14_i32 = arith.constant 14 : i32
    %29 = vector.broadcast %c14_i32 : i32 to vector<32x1xi32>
    %30 = arith.cmpi slt, %23, %29 : vector<32x1xi32>
    %31 = arith.extui %30 : vector<32x1xi1> to vector<32x1xi32>
    %32 = arith.sitofp %31 : vector<32x1xi32> to vector<32x1xf32>
    %c15_i32 = arith.constant 15 : i32
    %33 = vector.broadcast %c15_i32 : i32 to vector<32x1xi32>
    %34 = arith.cmpi slt, %23, %33 : vector<32x1xi32>
    %35 = arith.extui %34 : vector<32x1xi1> to vector<32x1xi32>
    %36 = arith.sitofp %35 : vector<32x1xi32> to vector<32x1xf32>
    %c1_i32_4 = arith.constant 1 : i32
    %37 = vector.broadcast %c1_i32_4 : i32 to vector<32x1xi32>
    %38 = arith.cmpi sge, %23, %37 : vector<32x1xi32>
    %39 = arith.extui %38 : vector<32x1xi1> to vector<32x1xi32>
    %40 = arith.sitofp %39 : vector<32x1xi32> to vector<32x1xf32>
    %c2_i32_5 = arith.constant 2 : i32
    %41 = vector.broadcast %c2_i32_5 : i32 to vector<32x1xi32>
    %42 = arith.cmpi sge, %23, %41 : vector<32x1xi32>
    %43 = arith.extui %42 : vector<32x1xi1> to vector<32x1xi32>
    %44 = arith.sitofp %43 : vector<32x1xi32> to vector<32x1xf32>
    %c0 = arith.constant 0 : index
    %c0_6 = arith.constant 0 : index
    %c0_7 = arith.constant 0 : index
    %45 = vector.load %arg2[%c0, %c0_6, %c0_7] : memref<2x16x128xf32, #tpu.memory_space<vmem>>, vector<2x16x128xf32>
    %c0_8 = arith.constant 0 : index
    %c0_9 = arith.constant 0 : index
    %46 = vector.load %arg3[%c0_8, %c0_9] : memref<16x128xf32, #tpu.memory_space<vmem>>, vector<16x128xf32>
    %47 = vector.shape_cast %46 : vector<16x128xf32> to vector<1x16x128xf32>
    %48 = vector.broadcast %47 : vector<1x16x128xf32> to vector<2x16x128xf32>
    %49 = arith.addf %45, %48 : vector<2x16x128xf32>
    %50 = vector.shape_cast %49 : vector<2x16x128xf32> to vector<32x128xf32>
    %51 = vector.broadcast %22 : vector<32x1xf32> to vector<32x128xf32>
    %52 = arith.mulf %50, %51 : vector<32x128xf32>
    %c0_10 = arith.constant 0 : index
    %c0_11 = arith.constant 0 : index
    %c0_12 = arith.constant 0 : index
    %c0_13 = arith.constant 0 : index
    %53 = vector.load %arg4[%c0_10, %c0_11, %c0_12, %c0_13] : memref<3x2x1x128xf32, #tpu.memory_space<vmem>>, vector<1x1x1x128xf32>
    %54 = vector.shape_cast %53 : vector<1x1x1x128xf32> to vector<1x128xf32>
    %c0_14 = arith.constant 0 : index
    %c1 = arith.constant 1 : index
    %c0_15 = arith.constant 0 : index
    %c0_16 = arith.constant 0 : index
    %55 = vector.load %arg4[%c0_14, %c1, %c0_15, %c0_16] : memref<3x2x1x128xf32, #tpu.memory_space<vmem>>, vector<1x1x1x128xf32>
    %56 = vector.shape_cast %55 : vector<1x1x1x128xf32> to vector<1x128xf32>
    %cst = arith.constant dense<0.000000e+00> : vector<32xf32>
    %57 = vector.multi_reduction <add>, %52, %cst [1] : vector<32x128xf32> to vector<32xf32>
    %58 = vector.shape_cast %57 : vector<32xf32> to vector<32x1xf32>
    %cst_17 = arith.constant 3.125000e-02 : f32
    %59 = vector.broadcast %cst_17 : f32 to vector<32x1xf32>
    %60 = arith.mulf %58, %59 : vector<32x1xf32>
    %61 = vector.broadcast %60 : vector<32x1xf32> to vector<32x128xf32>
    %62 = arith.subf %52, %61 : vector<32x128xf32>
    %63 = vector.broadcast %28 : vector<1x128xf32> to vector<32x128xf32>
    %64 = arith.mulf %62, %63 : vector<32x128xf32>
    %65 = arith.mulf %64, %64 : vector<32x128xf32>
    %cst_18 = arith.constant dense<0.000000e+00> : vector<32xf32>
    %66 = vector.multi_reduction <add>, %65, %cst_18 [1] : vector<32x128xf32> to vector<32xf32>
    %67 = vector.shape_cast %66 : vector<32xf32> to vector<32x1xf32>
    %cst_19 = arith.constant 3.125000e-02 : f32
    %68 = vector.broadcast %cst_19 : f32 to vector<32x1xf32>
    %69 = arith.mulf %67, %68 : vector<32x1xf32>
    %cst_20 = arith.constant 9.99999974E-6 : f32
    %70 = vector.broadcast %cst_20 : f32 to vector<32x1xf32>
    %71 = arith.addf %69, %70 : vector<32x1xf32>
    %72 = math.rsqrt %71 : vector<32x1xf32>
    %73 = vector.broadcast %72 : vector<32x1xf32> to vector<32x128xf32>
    %74 = arith.mulf %64, %73 : vector<32x128xf32>
    %75 = vector.broadcast %54 : vector<1x128xf32> to vector<32x128xf32>
    %76 = arith.mulf %74, %75 : vector<32x128xf32>
    %77 = vector.broadcast %56 : vector<1x128xf32> to vector<32x128xf32>
    %78 = arith.addf %76, %77 : vector<32x128xf32>
    %79 = vector.broadcast %22 : vector<32x1xf32> to vector<32x128xf32>
    %80 = arith.mulf %78, %79 : vector<32x128xf32>
    %c0_21 = arith.constant 0 : index
    %c0_22 = arith.constant 0 : index
    %c0_23 = arith.constant 0 : index
    %c0_24 = arith.constant 0 : index
    %81 = vector.load %arg5[%c0_21, %c0_22, %c0_23, %c0_24] : memref<2x2x5x128xf32, #tpu.memory_space<vmem>>, vector<1x1x5x128xf32>
    %82 = vector.shape_cast %81 : vector<1x1x5x128xf32> to vector<5x128xf32>
    %83 = vector.extract_strided_slice %82 {offsets = [2, 0], sizes = [1, 128], strides = [1, 1]} : vector<5x128xf32> to vector<1x128xf32>
    %84 = vector.broadcast %83 : vector<1x128xf32> to vector<32x128xf32>
    %85 = arith.mulf %80, %84 : vector<32x128xf32>
    %c2_i32_25 = arith.constant 2 : i32
    %86 = tpu.dynamic_rotate %80 by %c2_i32_25 dim 0 : vector<32x128xf32>, i32 -> vector<32x128xf32>
    %87 = vector.extract_strided_slice %82 {offsets = [0, 0], sizes = [1, 128], strides = [1, 1]} : vector<5x128xf32> to vector<1x128xf32>
    %88 = vector.broadcast %87 : vector<1x128xf32> to vector<32x128xf32>
    %89 = arith.mulf %86, %88 : vector<32x128xf32>
    %90 = vector.broadcast %44 : vector<32x1xf32> to vector<32x128xf32>
    %91 = arith.mulf %89, %90 : vector<32x128xf32>
    %92 = arith.addf %85, %91 : vector<32x128xf32>
    %c1_i32_26 = arith.constant 1 : i32
    %93 = tpu.dynamic_rotate %80 by %c1_i32_26 dim 0 : vector<32x128xf32>, i32 -> vector<32x128xf32>
    %94 = vector.extract_strided_slice %82 {offsets = [1, 0], sizes = [1, 128], strides = [1, 1]} : vector<5x128xf32> to vector<1x128xf32>
    %95 = vector.broadcast %94 : vector<1x128xf32> to vector<32x128xf32>
    %96 = arith.mulf %93, %95 : vector<32x128xf32>
    %97 = vector.broadcast %40 : vector<32x1xf32> to vector<32x128xf32>
    %98 = arith.mulf %96, %97 : vector<32x128xf32>
    %99 = arith.addf %92, %98 : vector<32x128xf32>
    %c31_i32 = arith.constant 31 : i32
    %100 = tpu.dynamic_rotate %80 by %c31_i32 dim 0 : vector<32x128xf32>, i32 -> vector<32x128xf32>
    %101 = vector.extract_strided_slice %82 {offsets = [3, 0], sizes = [1, 128], strides = [1, 1]} : vector<5x128xf32> to vector<1x128xf32>
    %102 = vector.broadcast %101 : vector<1x128xf32> to vector<32x128xf32>
    %103 = arith.mulf %100, %102 : vector<32x128xf32>
    %104 = vector.broadcast %36 : vector<32x1xf32> to vector<32x128xf32>
    %105 = arith.mulf %103, %104 : vector<32x128xf32>
    %106 = arith.addf %99, %105 : vector<32x128xf32>
    %c30_i32 = arith.constant 30 : i32
    %107 = tpu.dynamic_rotate %80 by %c30_i32 dim 0 : vector<32x128xf32>, i32 -> vector<32x128xf32>
    %108 = vector.extract_strided_slice %82 {offsets = [4, 0], sizes = [1, 128], strides = [1, 1]} : vector<5x128xf32> to vector<1x128xf32>
    %109 = vector.broadcast %108 : vector<1x128xf32> to vector<32x128xf32>
    %110 = arith.mulf %107, %109 : vector<32x128xf32>
    %111 = vector.broadcast %32 : vector<32x1xf32> to vector<32x128xf32>
    %112 = arith.mulf %110, %111 : vector<32x128xf32>
    %113 = arith.addf %106, %112 : vector<32x128xf32>
    %114 = arith.truncf %113 : vector<32x128xf32> to vector<32x128xbf16>
    %c0_27 = arith.constant 0 : index
    %c0_28 = arith.constant 0 : index
    %c0_29 = arith.constant 0 : index
    %c0_30 = arith.constant 0 : index
    %115 = vector.load %arg6[%c0_27, %c0_28, %c0_29, %c0_30] : memref<2x2x128x128xbf16, #tpu.memory_space<vmem>>, vector<1x1x128x128xbf16>
    %116 = vector.shape_cast %115 : vector<1x1x128x128xbf16> to vector<128x128xbf16>
    %cst_31 = arith.constant dense<0.000000e+00> : vector<32x128xf32>
    %117 = tpu.matmul %114, %116, %cst_31 {dimension_numbers = #tpu.dot_dimension_numbers<[1], [0], [0], [1], [0, 0, 1, 1], [], []>} : vector<32x128xbf16>, vector<128x128xbf16>, vector<32x128xf32> -> vector<32x128xf32>
    %c0_32 = arith.constant 0 : index
    %c0_33 = arith.constant 0 : index
    %c0_34 = arith.constant 0 : index
    %c0_35 = arith.constant 0 : index
    %118 = vector.load %arg7[%c0_32, %c0_33, %c0_34, %c0_35] : memref<2x2x1x128xf32, #tpu.memory_space<vmem>>, vector<1x1x1x128xf32>
    %119 = vector.shape_cast %118 : vector<1x1x1x128xf32> to vector<1x128xf32>
    %120 = vector.broadcast %119 : vector<1x128xf32> to vector<32x128xf32>
    %121 = arith.addf %117, %120 : vector<32x128xf32>
    %cst_36 = arith.constant 0.000000e+00 : f32
    %122 = vector.broadcast %cst_36 : f32 to vector<32x128xf32>
    %123 = arith.maximumf %121, %122 : vector<32x128xf32>
    %c0_37 = arith.constant 0 : index
    %c1_38 = arith.constant 1 : index
    %c0_39 = arith.constant 0 : index
    %c0_40 = arith.constant 0 : index
    %124 = vector.load %arg5[%c0_37, %c1_38, %c0_39, %c0_40] : memref<2x2x5x128xf32, #tpu.memory_space<vmem>>, vector<1x1x5x128xf32>
    %125 = vector.shape_cast %124 : vector<1x1x5x128xf32> to vector<5x128xf32>
    %126 = vector.extract_strided_slice %125 {offsets = [2, 0], sizes = [1, 128], strides = [1, 1]} : vector<5x128xf32> to vector<1x128xf32>
    %127 = vector.broadcast %126 : vector<1x128xf32> to vector<32x128xf32>
    %128 = arith.mulf %123, %127 : vector<32x128xf32>
    %c2_i32_41 = arith.constant 2 : i32
    %129 = tpu.dynamic_rotate %123 by %c2_i32_41 dim 0 : vector<32x128xf32>, i32 -> vector<32x128xf32>
    %130 = vector.extract_strided_slice %125 {offsets = [0, 0], sizes = [1, 128], strides = [1, 1]} : vector<5x128xf32> to vector<1x128xf32>
    %131 = vector.broadcast %130 : vector<1x128xf32> to vector<32x128xf32>
    %132 = arith.mulf %129, %131 : vector<32x128xf32>
    %133 = vector.broadcast %44 : vector<32x1xf32> to vector<32x128xf32>
    %134 = arith.mulf %132, %133 : vector<32x128xf32>
    %135 = arith.addf %128, %134 : vector<32x128xf32>
    %c1_i32_42 = arith.constant 1 : i32
    %136 = tpu.dynamic_rotate %123 by %c1_i32_42 dim 0 : vector<32x128xf32>, i32 -> vector<32x128xf32>
    %137 = vector.extract_strided_slice %125 {offsets = [1, 0], sizes = [1, 128], strides = [1, 1]} : vector<5x128xf32> to vector<1x128xf32>
    %138 = vector.broadcast %137 : vector<1x128xf32> to vector<32x128xf32>
    %139 = arith.mulf %136, %138 : vector<32x128xf32>
    %140 = vector.broadcast %40 : vector<32x1xf32> to vector<32x128xf32>
    %141 = arith.mulf %139, %140 : vector<32x128xf32>
    %142 = arith.addf %135, %141 : vector<32x128xf32>
    %c31_i32_43 = arith.constant 31 : i32
    %143 = tpu.dynamic_rotate %123 by %c31_i32_43 dim 0 : vector<32x128xf32>, i32 -> vector<32x128xf32>
    %144 = vector.extract_strided_slice %125 {offsets = [3, 0], sizes = [1, 128], strides = [1, 1]} : vector<5x128xf32> to vector<1x128xf32>
    %145 = vector.broadcast %144 : vector<1x128xf32> to vector<32x128xf32>
    %146 = arith.mulf %143, %145 : vector<32x128xf32>
    %147 = vector.broadcast %36 : vector<32x1xf32> to vector<32x128xf32>
    %148 = arith.mulf %146, %147 : vector<32x128xf32>
    %149 = arith.addf %142, %148 : vector<32x128xf32>
    %c30_i32_44 = arith.constant 30 : i32
    %150 = tpu.dynamic_rotate %123 by %c30_i32_44 dim 0 : vector<32x128xf32>, i32 -> vector<32x128xf32>
    %151 = vector.extract_strided_slice %125 {offsets = [4, 0], sizes = [1, 128], strides = [1, 1]} : vector<5x128xf32> to vector<1x128xf32>
    %152 = vector.broadcast %151 : vector<1x128xf32> to vector<32x128xf32>
    %153 = arith.mulf %150, %152 : vector<32x128xf32>
    %154 = vector.broadcast %32 : vector<32x1xf32> to vector<32x128xf32>
    %155 = arith.mulf %153, %154 : vector<32x128xf32>
    %156 = arith.addf %149, %155 : vector<32x128xf32>
    %157 = arith.truncf %156 : vector<32x128xf32> to vector<32x128xbf16>
    %c0_45 = arith.constant 0 : index
    %c1_46 = arith.constant 1 : index
    %c0_47 = arith.constant 0 : index
    %c0_48 = arith.constant 0 : index
    %158 = vector.load %arg6[%c0_45, %c1_46, %c0_47, %c0_48] : memref<2x2x128x128xbf16, #tpu.memory_space<vmem>>, vector<1x1x128x128xbf16>
    %159 = vector.shape_cast %158 : vector<1x1x128x128xbf16> to vector<128x128xbf16>
    %cst_49 = arith.constant dense<0.000000e+00> : vector<32x128xf32>
    %160 = tpu.matmul %157, %159, %cst_49 {dimension_numbers = #tpu.dot_dimension_numbers<[1], [0], [0], [1], [0, 0, 1, 1], [], []>} : vector<32x128xbf16>, vector<128x128xbf16>, vector<32x128xf32> -> vector<32x128xf32>
    %c0_50 = arith.constant 0 : index
    %c1_51 = arith.constant 1 : index
    %c0_52 = arith.constant 0 : index
    %c0_53 = arith.constant 0 : index
    %161 = vector.load %arg7[%c0_50, %c1_51, %c0_52, %c0_53] : memref<2x2x1x128xf32, #tpu.memory_space<vmem>>, vector<1x1x1x128xf32>
    %162 = vector.shape_cast %161 : vector<1x1x1x128xf32> to vector<1x128xf32>
    %163 = vector.broadcast %162 : vector<1x128xf32> to vector<32x128xf32>
    %164 = arith.addf %160, %163 : vector<32x128xf32>
    %cst_54 = arith.constant 0.000000e+00 : f32
    %165 = vector.broadcast %cst_54 : f32 to vector<32x128xf32>
    %166 = arith.maximumf %164, %165 : vector<32x128xf32>
    %167 = arith.addf %52, %166 : vector<32x128xf32>
    %c1_55 = arith.constant 1 : index
    %c0_56 = arith.constant 0 : index
    %c0_57 = arith.constant 0 : index
    %c0_58 = arith.constant 0 : index
    %168 = vector.load %arg4[%c1_55, %c0_56, %c0_57, %c0_58] : memref<3x2x1x128xf32, #tpu.memory_space<vmem>>, vector<1x1x1x128xf32>
    %169 = vector.shape_cast %168 : vector<1x1x1x128xf32> to vector<1x128xf32>
    %c1_59 = arith.constant 1 : index
    %c1_60 = arith.constant 1 : index
    %c0_61 = arith.constant 0 : index
    %c0_62 = arith.constant 0 : index
    %170 = vector.load %arg4[%c1_59, %c1_60, %c0_61, %c0_62] : memref<3x2x1x128xf32, #tpu.memory_space<vmem>>, vector<1x1x1x128xf32>
    %171 = vector.shape_cast %170 : vector<1x1x1x128xf32> to vector<1x128xf32>
    %cst_63 = arith.constant dense<0.000000e+00> : vector<32xf32>
    %172 = vector.multi_reduction <add>, %167, %cst_63 [1] : vector<32x128xf32> to vector<32xf32>
    %173 = vector.shape_cast %172 : vector<32xf32> to vector<32x1xf32>
    %cst_64 = arith.constant 3.125000e-02 : f32
    %174 = vector.broadcast %cst_64 : f32 to vector<32x1xf32>
    %175 = arith.mulf %173, %174 : vector<32x1xf32>
    %176 = vector.broadcast %175 : vector<32x1xf32> to vector<32x128xf32>
    %177 = arith.subf %167, %176 : vector<32x128xf32>
    %178 = vector.broadcast %28 : vector<1x128xf32> to vector<32x128xf32>
    %179 = arith.mulf %177, %178 : vector<32x128xf32>
    %180 = arith.mulf %179, %179 : vector<32x128xf32>
    %cst_65 = arith.constant dense<0.000000e+00> : vector<32xf32>
    %181 = vector.multi_reduction <add>, %180, %cst_65 [1] : vector<32x128xf32> to vector<32xf32>
    %182 = vector.shape_cast %181 : vector<32xf32> to vector<32x1xf32>
    %cst_66 = arith.constant 3.125000e-02 : f32
    %183 = vector.broadcast %cst_66 : f32 to vector<32x1xf32>
    %184 = arith.mulf %182, %183 : vector<32x1xf32>
    %cst_67 = arith.constant 9.99999974E-6 : f32
    %185 = vector.broadcast %cst_67 : f32 to vector<32x1xf32>
    %186 = arith.addf %184, %185 : vector<32x1xf32>
    %187 = math.rsqrt %186 : vector<32x1xf32>
    %188 = vector.broadcast %187 : vector<32x1xf32> to vector<32x128xf32>
    %189 = arith.mulf %179, %188 : vector<32x128xf32>
    %190 = vector.broadcast %169 : vector<1x128xf32> to vector<32x128xf32>
    %191 = arith.mulf %189, %190 : vector<32x128xf32>
    %192 = vector.broadcast %171 : vector<1x128xf32> to vector<32x128xf32>
    %193 = arith.addf %191, %192 : vector<32x128xf32>
    %194 = vector.broadcast %22 : vector<32x1xf32> to vector<32x128xf32>
    %195 = arith.mulf %193, %194 : vector<32x128xf32>
    %c1_68 = arith.constant 1 : index
    %c0_69 = arith.constant 0 : index
    %c0_70 = arith.constant 0 : index
    %c0_71 = arith.constant 0 : index
    %196 = vector.load %arg5[%c1_68, %c0_69, %c0_70, %c0_71] : memref<2x2x5x128xf32, #tpu.memory_space<vmem>>, vector<1x1x5x128xf32>
    %197 = vector.shape_cast %196 : vector<1x1x5x128xf32> to vector<5x128xf32>
    %198 = vector.extract_strided_slice %197 {offsets = [1, 0], sizes = [1, 128], strides = [1, 1]} : vector<5x128xf32> to vector<1x128xf32>
    %199 = vector.broadcast %198 : vector<1x128xf32> to vector<32x128xf32>
    %200 = arith.mulf %195, %199 : vector<32x128xf32>
    %c1_i32_72 = arith.constant 1 : i32
    %201 = tpu.dynamic_rotate %195 by %c1_i32_72 dim 0 : vector<32x128xf32>, i32 -> vector<32x128xf32>
    %202 = vector.extract_strided_slice %197 {offsets = [0, 0], sizes = [1, 128], strides = [1, 1]} : vector<5x128xf32> to vector<1x128xf32>
    %203 = vector.broadcast %202 : vector<1x128xf32> to vector<32x128xf32>
    %204 = arith.mulf %201, %203 : vector<32x128xf32>
    %205 = vector.broadcast %40 : vector<32x1xf32> to vector<32x128xf32>
    %206 = arith.mulf %204, %205 : vector<32x128xf32>
    %207 = arith.addf %200, %206 : vector<32x128xf32>
    %c31_i32_73 = arith.constant 31 : i32
    %208 = tpu.dynamic_rotate %195 by %c31_i32_73 dim 0 : vector<32x128xf32>, i32 -> vector<32x128xf32>
    %209 = vector.extract_strided_slice %197 {offsets = [2, 0], sizes = [1, 128], strides = [1, 1]} : vector<5x128xf32> to vector<1x128xf32>
    %210 = vector.broadcast %209 : vector<1x128xf32> to vector<32x128xf32>
    %211 = arith.mulf %208, %210 : vector<32x128xf32>
    %212 = vector.broadcast %36 : vector<32x1xf32> to vector<32x128xf32>
    %213 = arith.mulf %211, %212 : vector<32x128xf32>
    %214 = arith.addf %207, %213 : vector<32x128xf32>
    %215 = arith.truncf %214 : vector<32x128xf32> to vector<32x128xbf16>
    %c1_74 = arith.constant 1 : index
    %c0_75 = arith.constant 0 : index
    %c0_76 = arith.constant 0 : index
    %c0_77 = arith.constant 0 : index
    %216 = vector.load %arg6[%c1_74, %c0_75, %c0_76, %c0_77] : memref<2x2x128x128xbf16, #tpu.memory_space<vmem>>, vector<1x1x128x128xbf16>
    %217 = vector.shape_cast %216 : vector<1x1x128x128xbf16> to vector<128x128xbf16>
    %cst_78 = arith.constant dense<0.000000e+00> : vector<32x128xf32>
    %218 = tpu.matmul %215, %217, %cst_78 {dimension_numbers = #tpu.dot_dimension_numbers<[1], [0], [0], [1], [0, 0, 1, 1], [], []>} : vector<32x128xbf16>, vector<128x128xbf16>, vector<32x128xf32> -> vector<32x128xf32>
    %c1_79 = arith.constant 1 : index
    %c0_80 = arith.constant 0 : index
    %c0_81 = arith.constant 0 : index
    %c0_82 = arith.constant 0 : index
    %219 = vector.load %arg7[%c1_79, %c0_80, %c0_81, %c0_82] : memref<2x2x1x128xf32, #tpu.memory_space<vmem>>, vector<1x1x1x128xf32>
    %220 = vector.shape_cast %219 : vector<1x1x1x128xf32> to vector<1x128xf32>
    %221 = vector.broadcast %220 : vector<1x128xf32> to vector<32x128xf32>
    %222 = arith.addf %218, %221 : vector<32x128xf32>
    %cst_83 = arith.constant 0.000000e+00 : f32
    %223 = vector.broadcast %cst_83 : f32 to vector<32x128xf32>
    %224 = arith.maximumf %222, %223 : vector<32x128xf32>
    %c1_84 = arith.constant 1 : index
    %c1_85 = arith.constant 1 : index
    %c0_86 = arith.constant 0 : index
    %c0_87 = arith.constant 0 : index
    %225 = vector.load %arg5[%c1_84, %c1_85, %c0_86, %c0_87] : memref<2x2x5x128xf32, #tpu.memory_space<vmem>>, vector<1x1x5x128xf32>
    %226 = vector.shape_cast %225 : vector<1x1x5x128xf32> to vector<5x128xf32>
    %227 = vector.extract_strided_slice %226 {offsets = [1, 0], sizes = [1, 128], strides = [1, 1]} : vector<5x128xf32> to vector<1x128xf32>
    %228 = vector.broadcast %227 : vector<1x128xf32> to vector<32x128xf32>
    %229 = arith.mulf %224, %228 : vector<32x128xf32>
    %c1_i32_88 = arith.constant 1 : i32
    %230 = tpu.dynamic_rotate %224 by %c1_i32_88 dim 0 : vector<32x128xf32>, i32 -> vector<32x128xf32>
    %231 = vector.extract_strided_slice %226 {offsets = [0, 0], sizes = [1, 128], strides = [1, 1]} : vector<5x128xf32> to vector<1x128xf32>
    %232 = vector.broadcast %231 : vector<1x128xf32> to vector<32x128xf32>
    %233 = arith.mulf %230, %232 : vector<32x128xf32>
    %234 = vector.broadcast %40 : vector<32x1xf32> to vector<32x128xf32>
    %235 = arith.mulf %233, %234 : vector<32x128xf32>
    %236 = arith.addf %229, %235 : vector<32x128xf32>
    %c31_i32_89 = arith.constant 31 : i32
    %237 = tpu.dynamic_rotate %224 by %c31_i32_89 dim 0 : vector<32x128xf32>, i32 -> vector<32x128xf32>
    %238 = vector.extract_strided_slice %226 {offsets = [2, 0], sizes = [1, 128], strides = [1, 1]} : vector<5x128xf32> to vector<1x128xf32>
    %239 = vector.broadcast %238 : vector<1x128xf32> to vector<32x128xf32>
    %240 = arith.mulf %237, %239 : vector<32x128xf32>
    %241 = vector.broadcast %36 : vector<32x1xf32> to vector<32x128xf32>
    %242 = arith.mulf %240, %241 : vector<32x128xf32>
    %243 = arith.addf %236, %242 : vector<32x128xf32>
    %244 = arith.truncf %243 : vector<32x128xf32> to vector<32x128xbf16>
    %c1_90 = arith.constant 1 : index
    %c1_91 = arith.constant 1 : index
    %c0_92 = arith.constant 0 : index
    %c0_93 = arith.constant 0 : index
    %245 = vector.load %arg6[%c1_90, %c1_91, %c0_92, %c0_93] : memref<2x2x128x128xbf16, #tpu.memory_space<vmem>>, vector<1x1x128x128xbf16>
    %246 = vector.shape_cast %245 : vector<1x1x128x128xbf16> to vector<128x128xbf16>
    %cst_94 = arith.constant dense<0.000000e+00> : vector<32x128xf32>
    %247 = tpu.matmul %244, %246, %cst_94 {dimension_numbers = #tpu.dot_dimension_numbers<[1], [0], [0], [1], [0, 0, 1, 1], [], []>} : vector<32x128xbf16>, vector<128x128xbf16>, vector<32x128xf32> -> vector<32x128xf32>
    %c1_95 = arith.constant 1 : index
    %c1_96 = arith.constant 1 : index
    %c0_97 = arith.constant 0 : index
    %c0_98 = arith.constant 0 : index
    %248 = vector.load %arg7[%c1_95, %c1_96, %c0_97, %c0_98] : memref<2x2x1x128xf32, #tpu.memory_space<vmem>>, vector<1x1x1x128xf32>
    %249 = vector.shape_cast %248 : vector<1x1x1x128xf32> to vector<1x128xf32>
    %250 = vector.broadcast %249 : vector<1x128xf32> to vector<32x128xf32>
    %251 = arith.addf %247, %250 : vector<32x128xf32>
    %cst_99 = arith.constant 0.000000e+00 : f32
    %252 = vector.broadcast %cst_99 : f32 to vector<32x128xf32>
    %253 = arith.maximumf %251, %252 : vector<32x128xf32>
    %254 = arith.addf %167, %253 : vector<32x128xf32>
    %c2 = arith.constant 2 : index
    %c0_100 = arith.constant 0 : index
    %c0_101 = arith.constant 0 : index
    %c0_102 = arith.constant 0 : index
    %255 = vector.load %arg4[%c2, %c0_100, %c0_101, %c0_102] : memref<3x2x1x128xf32, #tpu.memory_space<vmem>>, vector<1x1x1x128xf32>
    %256 = vector.shape_cast %255 : vector<1x1x1x128xf32> to vector<1x128xf32>
    %c2_103 = arith.constant 2 : index
    %c1_104 = arith.constant 1 : index
    %c0_105 = arith.constant 0 : index
    %c0_106 = arith.constant 0 : index
    %257 = vector.load %arg4[%c2_103, %c1_104, %c0_105, %c0_106] : memref<3x2x1x128xf32, #tpu.memory_space<vmem>>, vector<1x1x1x128xf32>
    %258 = vector.shape_cast %257 : vector<1x1x1x128xf32> to vector<1x128xf32>
    %cst_107 = arith.constant dense<0.000000e+00> : vector<32xf32>
    %259 = vector.multi_reduction <add>, %254, %cst_107 [1] : vector<32x128xf32> to vector<32xf32>
    %260 = vector.shape_cast %259 : vector<32xf32> to vector<32x1xf32>
    %cst_108 = arith.constant 3.125000e-02 : f32
    %261 = vector.broadcast %cst_108 : f32 to vector<32x1xf32>
    %262 = arith.mulf %260, %261 : vector<32x1xf32>
    %263 = vector.broadcast %262 : vector<32x1xf32> to vector<32x128xf32>
    %264 = arith.subf %254, %263 : vector<32x128xf32>
    %265 = vector.broadcast %28 : vector<1x128xf32> to vector<32x128xf32>
    %266 = arith.mulf %264, %265 : vector<32x128xf32>
    %267 = arith.mulf %266, %266 : vector<32x128xf32>
    %cst_109 = arith.constant dense<0.000000e+00> : vector<32xf32>
    %268 = vector.multi_reduction <add>, %267, %cst_109 [1] : vector<32x128xf32> to vector<32xf32>
    %269 = vector.shape_cast %268 : vector<32xf32> to vector<32x1xf32>
    %cst_110 = arith.constant 3.125000e-02 : f32
    %270 = vector.broadcast %cst_110 : f32 to vector<32x1xf32>
    %271 = arith.mulf %269, %270 : vector<32x1xf32>
    %cst_111 = arith.constant 9.99999974E-6 : f32
    %272 = vector.broadcast %cst_111 : f32 to vector<32x1xf32>
    %273 = arith.addf %271, %272 : vector<32x1xf32>
    %274 = math.rsqrt %273 : vector<32x1xf32>
    %275 = vector.broadcast %274 : vector<32x1xf32> to vector<32x128xf32>
    %276 = arith.mulf %266, %275 : vector<32x128xf32>
    %277 = vector.broadcast %256 : vector<1x128xf32> to vector<32x128xf32>
    %278 = arith.mulf %276, %277 : vector<32x128xf32>
    %279 = vector.broadcast %258 : vector<1x128xf32> to vector<32x128xf32>
    %280 = arith.addf %278, %279 : vector<32x128xf32>
    %281 = vector.shape_cast %280 : vector<32x128xf32> to vector<2x16x128xf32>
    %c0_112 = arith.constant 0 : index
    %c0_113 = arith.constant 0 : index
    %c0_114 = arith.constant 0 : index
    %282 = vector.load %arg8[%c0_112, %c0_113, %c0_114] : memref<2x16x128xf32, #tpu.memory_space<vmem>>, vector<2x16x128xf32>
    tpu.vector_store %arg8[%c0_112, %c0_113, %c0_114], %281 {strides = array<i32>} : memref<2x16x128xf32, #tpu.memory_space<vmem>>, vector<2x16x128xf32>,
    return
  }
  func.func @transform_0(%arg0: i32, %arg1: memref<2xi32, #tpu.memory_space<smem>>) -> (i32, i32, i32) {
    %c0_i32 = arith.constant 0 : i32
    %c0_i32_0 = arith.constant 0 : i32
    %c0_i32_1 = arith.constant 0 : i32
    return %arg0, %c0_i32, %c0_i32_0 : i32, i32, i32
  }
  func.func @transform_1(%arg0: i32, %arg1: memref<2xi32, #tpu.memory_space<smem>>) -> (i32, i32) {
    %c0_i32 = arith.constant 0 : i32
    %c0_i32_0 = arith.constant 0 : i32
    %c0_i32_1 = arith.constant 0 : i32
    return %c0_i32, %c0_i32_0 : i32, i32
  }
  func.func @transform_2(%arg0: i32, %arg1: memref<2xi32, #tpu.memory_space<smem>>) -> (i32, i32, i32, i32) {
    %c0_i32 = arith.constant 0 : i32
    %c0_i32_0 = arith.constant 0 : i32
    %c0_i32_1 = arith.constant 0 : i32
    %c0_i32_2 = arith.constant 0 : i32
    %c0_i32_3 = arith.constant 0 : i32
    return %c0_i32, %c0_i32_0, %c0_i32_1, %c0_i32_2 : i32, i32, i32, i32
  }
  func.func @transform_3(%arg0: i32, %arg1: memref<2xi32, #tpu.memory_space<smem>>) -> (i32, i32, i32, i32) {
    %c0_i32 = arith.constant 0 : i32
    %c0_i32_0 = arith.constant 0 : i32
    %c0_i32_1 = arith.constant 0 : i32
    %c0_i32_2 = arith.constant 0 : i32
    %c0_i32_3 = arith.constant 0 : i32
    return %c0_i32, %c0_i32_0, %c0_i32_1, %c0_i32_2 : i32, i32, i32, i32
  }
  func.func @transform_4(%arg0: i32, %arg1: memref<2xi32, #tpu.memory_space<smem>>) -> (i32, i32, i32, i32) {
    %c0_i32 = arith.constant 0 : i32
    %c0_i32_0 = arith.constant 0 : i32
    %c0_i32_1 = arith.constant 0 : i32
    %c0_i32_2 = arith.constant 0 : i32
    %c0_i32_3 = arith.constant 0 : i32
    return %c0_i32, %c0_i32_0, %c0_i32_1, %c0_i32_2 : i32, i32, i32, i32
  }
  func.func @transform_5(%arg0: i32, %arg1: memref<2xi32, #tpu.memory_space<smem>>) -> (i32, i32, i32, i32) {
    %c0_i32 = arith.constant 0 : i32
    %c0_i32_0 = arith.constant 0 : i32
    %c0_i32_1 = arith.constant 0 : i32
    %c0_i32_2 = arith.constant 0 : i32
    %c0_i32_3 = arith.constant 0 : i32
    return %c0_i32, %c0_i32_0, %c0_i32_1, %c0_i32_2 : i32, i32, i32, i32
  }
  func.func @transform_6(%arg0: i32, %arg1: memref<2xi32, #tpu.memory_space<smem>>) -> (i32, i32, i32) {
    %c0_i32 = arith.constant 0 : i32
    %c0_i32_0 = arith.constant 0 : i32
    %c0_i32_1 = arith.constant 0 : i32
    return %arg0, %c0_i32, %c0_i32_0 : i32, i32, i32
  }
}

module attributes {stable_mosaic.version = 11 : i64} {
  func.func @_decoder_kernel(%arg0: i32, %arg1: memref<2xi32, #tpu.memory_space<smem>>, %arg2: memref<2x16x128xf32, #tpu.memory_space<vmem>>, %arg3: memref<16x128xf32, #tpu.memory_space<vmem>>, %arg4: memref<3x2x1x128xf32, #tpu.memory_space<vmem>>, %arg5: memref<2x2x5x128xf32, #tpu.memory_space<vmem>>, %arg6: memref<2x2x128x128xbf16, #tpu.memory_space<vmem>>, %arg7: memref<2x2x1x128xf32, #tpu.memory_space<vmem>>, %arg8: memref<2x16x128xf32, #tpu.memory_space<vmem>>) attributes {dimension_semantics = [#tpu.dimension_semantics<parallel>], iteration_bounds = array<i64: 1>, scalar_prefetch = 1 : i64, scratch_operands = 0 : i64, tpu.core_type = #tpu.core_type<tc>, window_params = [{transform_indices = @transform_0, window_bounds = array<i64: 2, 16, 128>}, {pipeline_mode = #tpu.pipeline_mode<synchronous>, transform_indices = @transform_1, window_bounds = array<i64: 16, 128>}, {pipeline_mode = #tpu.pipeline_mode<synchronous>, transform_indices = @transform_2, window_bounds = array<i64: 3, 2, 1, 128>}, {pipeline_mode = #tpu.pipeline_mode<synchronous>, transform_indices = @transform_3, window_bounds = array<i64: 2, 2, 5, 128>}, {pipeline_mode = #tpu.pipeline_mode<synchronous>, transform_indices = @transform_4, window_bounds = array<i64: 2, 2, 128, 128>}, {pipeline_mode = #tpu.pipeline_mode<synchronous>, transform_indices = @transform_5, window_bounds = array<i64: 2, 2, 1, 128>}, {transform_indices = @transform_6, window_bounds = array<i64: 2, 16, 128>}]} {
    %0 = tpu.iota {dimensions = array<i32: 1>} : vector<2x16x1xi32>
    %1 = tpu.iota {dimensions = array<i32: 0>} : vector<2x16x1xi32>
    %c0_i32 = arith.constant 0 : i32
    %2 = vector.broadcast %c0_i32 : i32 to vector<2x16x1xi32>
    %c0_i32_0 = arith.constant 0 : i32
    %3 = vector.broadcast %c0_i32_0 : i32 to vector<2x16x1xi32>
    %4 = arith.cmpi eq, %1, %3 : vector<2x16x1xi32>
    %c2_i32 = arith.constant 2 : i32
    %5 = arith.muli %arg0, %c2_i32 : i32
    %c0_i32_1 = arith.constant 0 : i32
    %6 = arith.addi %5, %c0_i32_1 : i32
    %7 = arith.index_cast %6 : i32 to index
    %8 = memref.load %arg1[%7] : memref<2xi32, #tpu.memory_space<smem>>
    %9 = vector.broadcast %8 : i32 to vector<2x16x1xi32>
    %10 = arith.select %4, %9, %2 : vector<2x16x1xi1>, vector<2x16x1xi32>
    %c1_i32 = arith.constant 1 : i32
    %11 = vector.broadcast %c1_i32 : i32 to vector<2x16x1xi32>
    %12 = arith.cmpi eq, %1, %11 : vector<2x16x1xi32>
    %c2_i32_2 = arith.constant 2 : i32
    %13 = arith.muli %arg0, %c2_i32_2 : i32
    %c1_i32_3 = arith.constant 1 : i32
    %14 = arith.addi %13, %c1_i32_3 : i32
    %15 = arith.index_cast %14 : i32 to index
    %16 = memref.load %arg1[%15] : memref<2xi32, #tpu.memory_space<smem>>
    %17 = vector.broadcast %16 : i32 to vector<2x16x1xi32>
    %18 = arith.select %12, %17, %10 : vector<2x16x1xi1>, vector<2x16x1xi32>
    %19 = arith.cmpi slt, %0, %18 : vector<2x16x1xi32>
    %20 = arith.extui %19 : vector<2x16x1xi1> to vector<2x16x1xi32>
    %21 = arith.sitofp %20 : vector<2x16x1xi32> to vector<2x16x1xf32>
    %22 = vector.shape_cast %21 : vector<2x16x1xf32> to vector<32x1xf32>
    %23 = vector.shape_cast %0 : vector<2x16x1xi32> to vector<32x1xi32>
    %24 = tpu.iota {dimensions = array<i32: 1>} : vector<1x128xi32>
    %c32_i32 = arith.constant 32 : i32
    %25 = vector.broadcast %c32_i32 : i32 to vector<1x128xi32>
    %26 = arith.cmpi slt, %24, %25 : vector<1x128xi32>
    %27 = arith.extui %26 : vector<1x128xi1> to vector<1x128xi32>
    %28 = arith.sitofp %27 : vector<1x128xi32> to vector<1x128xf32>
    %c14_i32 = arith.constant 14 : i32
    %29 = vector.broadcast %c14_i32 : i32 to vector<32x1xi32>
    %30 = arith.cmpi slt, %23, %29 : vector<32x1xi32>
    %31 = arith.extui %30 : vector<32x1xi1> to vector<32x1xi32>
    %32 = arith.sitofp %31 : vector<32x1xi32> to vector<32x1xf32>
    %c15_i32 = arith.constant 15 : i32
    %33 = vector.broadcast %c15_i32 : i32 to vector<32x1xi32>
    %34 = arith.cmpi slt, %23, %33 : vector<32x1xi32>
    %35 = arith.extui %34 : vector<32x1xi1> to vector<32x1xi32>
    %36 = arith.sitofp %35 : vector<32x1xi32> to vector<32x1xf32>
    %c1_i32_4 = arith.constant 1 : i32
    %37 = vector.broadcast %c1_i32_4 : i32 to vector<32x1xi32>
    %38 = arith.cmpi sge, %23, %37 : vector<32x1xi32>
    %39 = arith.extui %38 : vector<32x1xi1> to vector<32x1xi32>
    %40 = arith.sitofp %39 : vector<32x1xi32> to vector<32x1xf32>
    %c2_i32_5 = arith.constant 2 : i32
    %41 = vector.broadcast %c2_i32_5 : i32 to vector<32x1xi32>
    %42 = arith.cmpi sge, %23, %41 : vector<32x1xi32>
    %43 = arith.extui %42 : vector<32x1xi1> to vector<32x1xi32>
    %44 = arith.sitofp %43 : vector<32x1xi32> to vector<32x1xf32>
    %c0 = arith.constant 0 : index
    %c0_6 = arith.constant 0 : index
    %c0_7 = arith.constant 0 : index
    %45 = vector.load %arg2[%c0, %c0_6, %c0_7] : memref<2x16x128xf32, #tpu.memory_space<vmem>>, vector<2x16x128xf32>
    %c0_8 = arith.constant 0 : index
    %c0_9 = arith.constant 0 : index
    %46 = vector.load %arg3[%c0_8, %c0_9] : memref<16x128xf32, #tpu.memory_space<vmem>>, vector<16x128xf32>
    %47 = vector.shape_cast %46 : vector<16x128xf32> to vector<1x16x128xf32>
    %48 = vector.broadcast %47 : vector<1x16x128xf32> to vector<2x16x128xf32>
    %49 = arith.addf %45, %48 : vector<2x16x128xf32>
    %50 = vector.shape_cast %49 : vector<2x16x128xf32> to vector<32x128xf32>
    %51 = vector.broadcast %22 : vector<32x1xf32> to vector<32x128xf32>
    %52 = arith.mulf %50, %51 : vector<32x128xf32>
    %c0_10 = arith.constant 0 : index
    %c0_11 = arith.constant 0 : index
    %c0_12 = arith.constant 0 : index
    %c0_13 = arith.constant 0 : index
    %53 = vector.load %arg4[%c0_10, %c0_11, %c0_12, %c0_13] : memref<3x2x1x128xf32, #tpu.memory_space<vmem>>, vector<1x1x1x128xf32>
    %54 = vector.shape_cast %53 : vector<1x1x1x128xf32> to vector<1x128xf32>
    %c0_14 = arith.constant 0 : index
    %c1 = arith.constant 1 : index
    %c0_15 = arith.constant 0 : index
    %c0_16 = arith.constant 0 : index
    %55 = vector.load %arg4[%c0_14, %c1, %c0_15, %c0_16] : memref<3x2x1x128xf32, #tpu.memory_space<vmem>>, vector<1x1x1x128xf32>
    %56 = vector.shape_cast %55 : vector<1x1x1x128xf32> to vector<1x128xf32>
    %cst = arith.constant dense<0.000000e+00> : vector<32xf32>
    %57 = vector.multi_reduction <add>, %52, %cst [1] : vector<32x128xf32> to vector<32xf32>
    %58 = vector.shape_cast %57 : vector<32xf32> to vector<32x1xf32>
    %cst_17 = arith.constant 3.125000e-02 : f32
    %59 = vector.broadcast %cst_17 : f32 to vector<32x1xf32>
    %60 = arith.mulf %58, %59 : vector<32x1xf32>
    %61 = vector.broadcast %60 : vector<32x1xf32> to vector<32x128xf32>
    %62 = arith.subf %52, %61 : vector<32x128xf32>
    %63 = vector.broadcast %28 : vector<1x128xf32> to vector<32x128xf32>
    %64 = arith.mulf %62, %63 : vector<32x128xf32>
    %65 = arith.mulf %64, %64 : vector<32x128xf32>
    %cst_18 = arith.constant dense<0.000000e+00> : vector<32xf32>
    %66 = vector.multi_reduction <add>, %65, %cst_18 [1] : vector<32x128xf32> to vector<32xf32>
    %67 = vector.shape_cast %66 : vector<32xf32> to vector<32x1xf32>
    %cst_19 = arith.constant 3.125000e-02 : f32
    %68 = vector.broadcast %cst_19 : f32 to vector<32x1xf32>
    %69 = arith.mulf %67, %68 : vector<32x1xf32>
    %cst_20 = arith.constant 9.99999974E-6 : f32
    %70 = vector.broadcast %cst_20 : f32 to vector<32x1xf32>
    %71 = arith.addf %69, %70 : vector<32x1xf32>
    %72 = math.rsqrt %71 : vector<32x1xf32>
    %73 = vector.broadcast %72 : vector<32x1xf32> to vector<32x128xf32>
    %74 = arith.mulf %64, %73 : vector<32x128xf32>
    %75 = vector.broadcast %54 : vector<1x128xf32> to vector<32x128xf32>
    %76 = arith.mulf %74, %75 : vector<32x128xf32>
    %77 = vector.broadcast %56 : vector<1x128xf32> to vector<32x128xf32>
    %78 = arith.addf %76, %77 : vector<32x128xf32>
    %79 = vector.broadcast %22 : vector<32x1xf32> to vector<32x128xf32>
    %80 = arith.mulf %78, %79 : vector<32x128xf32>
    %c0_21 = arith.constant 0 : index
    %c0_22 = arith.constant 0 : index
    %c0_23 = arith.constant 0 : index
    %c0_24 = arith.constant 0 : index
    %81 = vector.load %arg5[%c0_21, %c0_22, %c0_23, %c0_24] : memref<2x2x5x128xf32, #tpu.memory_space<vmem>>, vector<1x1x5x128xf32>
    %82 = vector.shape_cast %81 : vector<1x1x5x128xf32> to vector<5x128xf32>
    %83 = vector.extract_strided_slice %82 {offsets = [2, 0], sizes = [1, 128], strides = [1, 1]} : vector<5x128xf32> to vector<1x128xf32>
    %84 = vector.broadcast %83 : vector<1x128xf32> to vector<32x128xf32>
    %85 = arith.mulf %80, %84 : vector<32x128xf32>
    %c2_i32_25 = arith.constant 2 : i32
    %86 = tpu.dynamic_rotate %80 by %c2_i32_25 dim 0 : vector<32x128xf32>, i32 -> vector<32x128xf32>
    %87 = vector.extract_strided_slice %82 {offsets = [0, 0], sizes = [1, 128], strides = [1, 1]} : vector<5x128xf32> to vector<1x128xf32>
    %88 = vector.broadcast %87 : vector<1x128xf32> to vector<32x128xf32>
    %89 = arith.mulf %86, %88 : vector<32x128xf32>
    %90 = vector.broadcast %44 : vector<32x1xf32> to vector<32x128xf32>
    %91 = arith.mulf %89, %90 : vector<32x128xf32>
    %92 = arith.addf %85, %91 : vector<32x128xf32>
    %c1_i32_26 = arith.constant 1 : i32
    %93 = tpu.dynamic_rotate %80 by %c1_i32_26 dim 0 : vector<32x128xf32>, i32 -> vector<32x128xf32>
    %94 = vector.extract_strided_slice %82 {offsets = [1, 0], sizes = [1, 128], strides = [1, 1]} : vector<5x128xf32> to vector<1x128xf32>
    %95 = vector.broadcast %94 : vector<1x128xf32> to vector<32x128xf32>
    %96 = arith.mulf %93, %95 : vector<32x128xf32>
    %97 = vector.broadcast %40 : vector<32x1xf32> to vector<32x128xf32>
    %98 = arith.mulf %96, %97 : vector<32x128xf32>
    %99 = arith.addf %92, %98 : vector<32x128xf32>
    %c31_i32 = arith.constant 31 : i32
    %100 = tpu.dynamic_rotate %80 by %c31_i32 dim 0 : vector<32x128xf32>, i32 -> vector<32x128xf32>
    %101 = vector.extract_strided_slice %82 {offsets = [3, 0], sizes = [1, 128], strides = [1, 1]} : vector<5x128xf32> to vector<1x128xf32>
    %102 = vector.broadcast %101 : vector<1x128xf32> to vector<32x128xf32>
    %103 = arith.mulf %100, %102 : vector<32x128xf32>
    %104 = vector.broadcast %36 : vector<32x1xf32> to vector<32x128xf32>
    %105 = arith.mulf %103, %104 : vector<32x128xf32>
    %106 = arith.addf %99, %105 : vector<32x128xf32>
    %c30_i32 = arith.constant 30 : i32
    %107 = tpu.dynamic_rotate %80 by %c30_i32 dim 0 : vector<32x128xf32>, i32 -> vector<32x128xf32>
    %108 = vector.extract_strided_slice %82 {offsets = [4, 0], sizes = [1, 128], strides = [1, 1]} : vector<5x128xf32> to vector<1x128xf32>
    %109 = vector.broadcast %108 : vector<1x128xf32> to vector<32x128xf32>
    %110 = arith.mulf %107, %109 : vector<32x128xf32>
    %111 = vector.broadcast %32 : vector<32x1xf32> to vector<32x128xf32>
    %112 = arith.mulf %110, %111 : vector<32x128xf32>
    %113 = arith.addf %106, %112 : vector<32x128xf32>
    %114 = arith.truncf %113 : vector<32x128xf32> to vector<32x128xbf16>
    %c0_27 = arith.constant 0 : index
    %c0_28 = arith.constant 0 : index
    %c0_29 = arith.constant 0 : index
    %c0_30 = arith.constant 0 : index
    %115 = vector.load %arg6[%c0_27, %c0_28, %c0_29, %c0_30] : memref<2x2x128x128xbf16, #tpu.memory_space<vmem>>, vector<1x1x128x128xbf16>
    %116 = vector.shape_cast %115 : vector<1x1x128x128xbf16> to vector<128x128xbf16>
    %cst_31 = arith.constant dense<0.000000e+00> : vector<32x128xf32>
    %117 = tpu.matmul %114, %116, %cst_31 {dimension_numbers = #tpu.dot_dimension_numbers<[1], [0], [0], [1], [0, 0, 1, 1], [], []>} : vector<32x128xbf16>, vector<128x128xbf16>, vector<32x128xf32> -> vector<32x128xf32>
    %c0_32 = arith.constant 0 : index
    %c0_33 = arith.constant 0 : index
    %c0_34 = arith.constant 0 : index
    %c0_35 = arith.constant 0 : index
    %118 = vector.load %arg7[%c0_32, %c0_33, %c0_34, %c0_35] : memref<2x2x1x128xf32, #tpu.memory_space<vmem>>, vector<1x1x1x128xf32>
    %119 = vector.shape_cast %118 : vector<1x1x1x128xf32> to vector<1x128xf32>
    %120 = vector.broadcast %119 : vector<1x128xf32> to vector<32x128xf32>
    %121 = arith.addf %117, %120 : vector<32x128xf32>
    %cst_36 = arith.constant 0.000000e+00 : f32
    %122 = vector.broadcast %cst_36 : f32 to vector<32x128xf32>
    %123 = arith.maximumf %121, %122 : vector<32x128xf32>
    %c0_37 = arith.constant 0 : index
    %c1_38 = arith.constant 1 : index
    %c0_39 = arith.constant 0 : index
    %c0_40 = arith.constant 0 : index
    %124 = vector.load %arg5[%c0_37, %c1_38, %c0_39, %c0_40] : memref<2x2x5x128xf32, #tpu.memory_space<vmem>>, vector<1x1x5x128xf32>
    %125 = vector.shape_cast %124 : vector<1x1x5x128xf32> to vector<5x128xf32>
    %126 = vector.extract_strided_slice %125 {offsets = [2, 0], sizes = [1, 128], strides = [1, 1]} : vector<5x128xf32> to vector<1x128xf32>
    %127 = vector.broadcast %126 : vector<1x128xf32> to vector<32x128xf32>
    %128 = arith.mulf %123, %127 : vector<32x128xf32>
    %c2_i32_41 = arith.constant 2 : i32
    %129 = tpu.dynamic_rotate %123 by %c2_i32_41 dim 0 : vector<32x128xf32>, i32 -> vector<32x128xf32>
    %130 = vector.extract_strided_slice %125 {offsets = [0, 0], sizes = [1, 128], strides = [1, 1]} : vector<5x128xf32> to vector<1x128xf32>
    %131 = vector.broadcast %130 : vector<1x128xf32> to vector<32x128xf32>
    %132 = arith.mulf %129, %131 : vector<32x128xf32>
    %133 = vector.broadcast %44 : vector<32x1xf32> to vector<32x128xf32>
    %134 = arith.mulf %132, %133 : vector<32x128xf32>
    %135 = arith.addf %128, %134 : vector<32x128xf32>
    %c1_i32_42 = arith.constant 1 : i32
    %136 = tpu.dynamic_rotate %123 by %c1_i32_42 dim 0 : vector<32x128xf32>, i32 -> vector<32x128xf32>
    %137 = vector.extract_strided_slice %125 {offsets = [1, 0], sizes = [1, 128], strides = [1, 1]} : vector<5x128xf32> to vector<1x128xf32>
    %138 = vector.broadcast %137 : vector<1x128xf32> to vector<32x128xf32>
    %139 = arith.mulf %136, %138 : vector<32x128xf32>
    %140 = vector.broadcast %40 : vector<32x1xf32> to vector<32x128xf32>
    %141 = arith.mulf %139, %140 : vector<32x128xf32>
    %142 = arith.addf %135, %141 : vector<32x128xf32>
    %c31_i32_43 = arith.constant 31 : i32
    %143 = tpu.dynamic_rotate %123 by %c31_i32_43 dim 0 : vector<32x128xf32>, i32 -> vector<32x128xf32>
    %144 = vector.extract_strided_slice %125 {offsets = [3, 0], sizes = [1, 128], strides = [1, 1]} : vector<5x128xf32> to vector<1x128xf32>
    %145 = vector.broadcast %144 : vector<1x128xf32> to vector<32x128xf32>
    %146 = arith.mulf %143, %145 : vector<32x128xf32>
    %147 = vector.broadcast %36 : vector<32x1xf32> to vector<32x128xf32>
    %148 = arith.mulf %146, %147 : vector<32x128xf32>
    %149 = arith.addf %142, %148 : vector<32x128xf32>
    %c30_i32_44 = arith.constant 30 : i32
    %150 = tpu.dynamic_rotate %123 by %c30_i32_44 dim 0 : vector<32x128xf32>, i32 -> vector<32x128xf32>
    %151 = vector.extract_strided_slice %125 {offsets = [4, 0], sizes = [1, 128], strides = [1, 1]} : vector<5x128xf32> to vector<1x128xf32>
    %152 = vector.broadcast %151 : vector<1x128xf32> to vector<32x128xf32>
    %153 = arith.mulf %150, %152 : vector<32x128xf32>
    %154 = vector.broadcast %32 : vector<32x1xf32> to vector<32x128xf32>
    %155 = arith.mulf %153, %154 : vector<32x128xf32>
    %156 = arith.addf %149, %155 : vector<32x128xf32>
    %157 = arith.truncf %156 : vector<32x128xf32> to vector<32x128xbf16>
    %c0_45 = arith.constant 0 : index
    %c1_46 = arith.constant 1 : index
    %c0_47 = arith.constant 0 : index
    %c0_48 = arith.constant 0 : index
    %158 = vector.load %arg6[%c0_45, %c1_46, %c0_47, %c0_48] : memref<2x2x128x128xbf16, #tpu.memory_space<vmem>>, vector<1x1x128x128xbf16>
    %159 = vector.shape_cast %158 : vector<1x1x128x128xbf16> to vector<128x128xbf16>
    %cst_49 = arith.constant dense<0.000000e+00> : vector<32x128xf32>
    %160 = tpu.matmul %157, %159, %cst_49 {dimension_numbers = #tpu.dot_dimension_numbers<[1], [0], [0], [1], [0, 0, 1, 1], [], []>} : vector<32x128xbf16>, vector<128x128xbf16>, vector<32x128xf32> -> vector<32x128xf32>
    %c0_50 = arith.constant 0 : index
    %c1_51 = arith.constant 1 : index
    %c0_52 = arith.constant 0 : index
    %c0_53 = arith.constant 0 : index
    %161 = vector.load %arg7[%c0_50, %c1_51, %c0_52, %c0_53] : memref<2x2x1x128xf32, #tpu.memory_space<vmem>>, vector<1x1x1x128xf32>
    %162 = vector.shape_cast %161 : vector<1x1x1x128xf32> to vector<1x128xf32>
    %163 = vector.broadcast %162 : vector<1x128xf32> to vector<32x128xf32>
    %164 = arith.addf %160, %163 : vector<32x128xf32>
    %cst_54 = arith.constant 0.000000e+00 : f32
    %165 = vector.broadcast %cst_54 : f32 to vector<32x128xf32>
    %166 = arith.maximumf %164, %165 : vector<32x128xf32>
    %167 = arith.addf %52, %166 : vector<32x128xf32>
    %c1_55 = arith.constant 1 : index
    %c0_56 = arith.constant 0 : index
    %c0_57 = arith.constant 0 : index
    %c0_58 = arith.constant 0 : index
    %168 = vector.load %arg4[%c1_55, %c0_56, %c0_57, %c0_58] : memref<3x2x1x128xf32, #tpu.memory_space<vmem>>, vector<1x1x1x128xf32>
    %169 = vector.shape_cast %168 : vector<1x1x1x128xf32> to vector<1x128xf32>
    %c1_59 = arith.constant 1 : index
    %c1_60 = arith.constant 1 : index
    %c0_61 = arith.constant 0 : index
    %c0_62 = arith.constant 0 : index
    %170 = vector.load %arg4[%c1_59, %c1_60, %c0_61, %c0_62] : memref<3x2x1x128xf32, #tpu.memory_space<vmem>>, vector<1x1x1x128xf32>
    %171 = vector.shape_cast %170 : vector<1x1x1x128xf32> to vector<1x128xf32>
    %cst_63 = arith.constant dense<0.000000e+00> : vector<32xf32>
    %172 = vector.multi_reduction <add>, %167, %cst_63 [1] : vector<32x128xf32> to vector<32xf32>
    %173 = vector.shape_cast %172 : vector<32xf32> to vector<32x1xf32>
    %cst_64 = arith.constant 3.125000e-02 : f32
    %174 = vector.broadcast %cst_64 : f32 to vector<32x1xf32>
    %175 = arith.mulf %173, %174 : vector<32x1xf32>
    %176 = vector.broadcast %175 : vector<32x1xf32> to vector<32x128xf32>
    %177 = arith.subf %167, %176 : vector<32x128xf32>
    %178 = vector.broadcast %28 : vector<1x128xf32> to vector<32x128xf32>
    %179 = arith.mulf %177, %178 : vector<32x128xf32>
    %180 = arith.mulf %179, %179 : vector<32x128xf32>
    %cst_65 = arith.constant dense<0.000000e+00> : vector<32xf32>
    %181 = vector.multi_reduction <add>, %180, %cst_65 [1] : vector<32x128xf32> to vector<32xf32>
    %182 = vector.shape_cast %181 : vector<32xf32> to vector<32x1xf32>
    %cst_66 = arith.constant 3.125000e-02 : f32
    %183 = vector.broadcast %cst_66 : f32 to vector<32x1xf32>
    %184 = arith.mulf %182, %183 : vector<32x1xf32>
    %cst_67 = arith.constant 9.99999974E-6 : f32
    %185 = vector.broadcast %cst_67 : f32 to vector<32x1xf32>
    %186 = arith.addf %184, %185 : vector<32x1xf32>
    %187 = math.rsqrt %186 : vector<32x1xf32>
    %188 = vector.broadcast %187 : vector<32x1xf32> to vector<32x128xf32>
    %189 = arith.mulf %179, %188 : vector<32x128xf32>
    %190 = vector.broadcast %169 : vector<1x128xf32> to vector<32x128xf32>
    %191 = arith.mulf %189, %190 : vector<32x128xf32>
    %192 = vector.broadcast %171 : vector<1x128xf32> to vector<32x128xf32>
    %193 = arith.addf %191, %192 : vector<32x128xf32>
    %194 = vector.broadcast %22 : vector<32x1xf32> to vector<32x128xf32>
    %195 = arith.mulf %193, %194 : vector<32x128xf32>
    %c1_68 = arith.constant 1 : index
    %c0_69 = arith.constant 0 : index
    %c0_70 = arith.constant 0 : index
    %c0_71 = arith.constant 0 : index
    %196 = vector.load %arg5[%c1_68, %c0_69, %c0_70, %c0_71] : memref<2x2x5x128xf32, #tpu.memory_space<vmem>>, vector<1x1x5x128xf32>
    %197 = vector.shape_cast %196 : vector<1x1x5x128xf32> to vector<5x128xf32>
    %198 = vector.extract_strided_slice %197 {offsets = [1, 0], sizes = [1, 128], strides = [1, 1]} : vector<5x128xf32> to vector<1x128xf32>
    %199 = vector.broadcast %198 : vector<1x128xf32> to vector<32x128xf32>
    %200 = arith.mulf %195, %199 : vector<32x128xf32>
    %c1_i32_72 = arith.constant 1 : i32
    %201 = tpu.dynamic_rotate %195 by %c1_i32_72 dim 0 : vector<32x128xf32>, i32 -> vector<32x128xf32>
    %202 = vector.extract_strided_slice %197 {offsets = [0, 0], sizes = [1, 128], strides = [1, 1]} : vector<5x128xf32> to vector<1x128xf32>
    %203 = vector.broadcast %202 : vector<1x128xf32> to vector<32x128xf32>
    %204 = arith.mulf %201, %203 : vector<32x128xf32>
    %205 = vector.broadcast %40 : vector<32x1xf32> to vector<32x128xf32>
    %206 = arith.mulf %204, %205 : vector<32x128xf32>
    %207 = arith.addf %200, %206 : vector<32x128xf32>
    %c31_i32_73 = arith.constant 31 : i32
    %208 = tpu.dynamic_rotate %195 by %c31_i32_73 dim 0 : vector<32x128xf32>, i32 -> vector<32x128xf32>
    %209 = vector.extract_strided_slice %197 {offsets = [2, 0], sizes = [1, 128], strides = [1, 1]} : vector<5x128xf32> to vector<1x128xf32>
    %210 = vector.broadcast %209 : vector<1x128xf32> to vector<32x128xf32>
    %211 = arith.mulf %208, %210 : vector<32x128xf32>
    %212 = vector.broadcast %36 : vector<32x1xf32> to vector<32x128xf32>
    %213 = arith.mulf %211, %212 : vector<32x128xf32>
    %214 = arith.addf %207, %213 : vector<32x128xf32>
    %215 = arith.truncf %214 : vector<32x128xf32> to vector<32x128xbf16>
    %c1_74 = arith.constant 1 : index
    %c0_75 = arith.constant 0 : index
    %c0_76 = arith.constant 0 : index
    %c0_77 = arith.constant 0 : index
    %216 = vector.load %arg6[%c1_74, %c0_75, %c0_76, %c0_77] : memref<2x2x128x128xbf16, #tpu.memory_space<vmem>>, vector<1x1x128x128xbf16>
    %217 = vector.shape_cast %216 : vector<1x1x128x128xbf16> to vector<128x128xbf16>
    %cst_78 = arith.constant dense<0.000000e+00> : vector<32x128xf32>
    %218 = tpu.matmul %215, %217, %cst_78 {dimension_numbers = #tpu.dot_dimension_numbers<[1], [0], [0], [1], [0, 0, 1, 1], [], []>} : vector<32x128xbf16>, vector<128x128xbf16>, vector<32x128xf32> -> vector<32x128xf32>
    %c1_79 = arith.constant 1 : index
    %c0_80 = arith.constant 0 : index
    %c0_81 = arith.constant 0 : index
    %c0_82 = arith.constant 0 : index
    %219 = vector.load %arg7[%c1_79, %c0_80, %c0_81, %c0_82] : memref<2x2x1x128xf32, #tpu.memory_space<vmem>>, vector<1x1x1x128xf32>
    %220 = vector.shape_cast %219 : vector<1x1x1x128xf32> to vector<1x128xf32>
    %221 = vector.broadcast %220 : vector<1x128xf32> to vector<32x128xf32>
    %222 = arith.addf %218, %221 : vector<32x128xf32>
    %cst_83 = arith.constant 0.000000e+00 : f32
    %223 = vector.broadcast %cst_83 : f32 to vector<32x128xf32>
    %224 = arith.maximumf %222, %223 : vector<32x128xf32>
    %c1_84 = arith.constant 1 : index
    %c1_85 = arith.constant 1 : index
    %c0_86 = arith.constant 0 : index
    %c0_87 = arith.constant 0 : index
    %225 = vector.load %arg5[%c1_84, %c1_85, %c0_86, %c0_87] : memref<2x2x5x128xf32, #tpu.memory_space<vmem>>, vector<1x1x5x128xf32>
    %226 = vector.shape_cast %225 : vector<1x1x5x128xf32> to vector<5x128xf32>
    %227 = vector.extract_strided_slice %226 {offsets = [1, 0], sizes = [1, 128], strides = [1, 1]} : vector<5x128xf32> to vector<1x128xf32>
    %228 = vector.broadcast %227 : vector<1x128xf32> to vector<32x128xf32>
    %229 = arith.mulf %224, %228 : vector<32x128xf32>
    %c1_i32_88 = arith.constant 1 : i32
    %230 = tpu.dynamic_rotate %224 by %c1_i32_88 dim 0 : vector<32x128xf32>, i32 -> vector<32x128xf32>
    %231 = vector.extract_strided_slice %226 {offsets = [0, 0], sizes = [1, 128], strides = [1, 1]} : vector<5x128xf32> to vector<1x128xf32>
    %232 = vector.broadcast %231 : vector<1x128xf32> to vector<32x128xf32>
    %233 = arith.mulf %230, %232 : vector<32x128xf32>
    %234 = vector.broadcast %40 : vector<32x1xf32> to vector<32x128xf32>
    %235 = arith.mulf %233, %234 : vector<32x128xf32>
    %236 = arith.addf %229, %235 : vector<32x128xf32>
    %c31_i32_89 = arith.constant 31 : i32
    %237 = tpu.dynamic_rotate %224 by %c31_i32_89 dim 0 : vector<32x128xf32>, i32 -> vector<32x128xf32>
    %238 = vector.extract_strided_slice %226 {offsets = [2, 0], sizes = [1, 128], strides = [1, 1]} : vector<5x128xf32> to vector<1x128xf32>
    %239 = vector.broadcast %238 : vector<1x128xf32> to vector<32x128xf32>
    %240 = arith.mulf %237, %239 : vector<32x128xf32>
    %241 = vector.broadcast %36 : vector<32x1xf32> to vector<32x128xf32>
    %242 = arith.mulf %240, %241 : vector<32x128xf32>
    %243 = arith.addf %236, %242 : vector<32x128xf32>
    %244 = arith.truncf %243 : vector<32x128xf32> to vector<32x128xbf16>
    %c1_90 = arith.constant 1 : index
    %c1_91 = arith.constant 1 : index
    %c0_92 = arith.constant 0 : index
    %c0_93 = arith.constant 0 : index
    %245 = vector.load %arg6[%c1_90, %c1_91, %c0_92, %c0_93] : memref<2x2x128x128xbf16, #tpu.memory_space<vmem>>, vector<1x1x128x128xbf16>
    %246 = vector.shape_cast %245 : vector<1x1x128x128xbf16> to vector<128x128xbf16>
    %cst_94 = arith.constant dense<0.000000e+00> : vector<32x128xf32>
    %247 = tpu.matmul %244, %246, %cst_94 {dimension_numbers = #tpu.dot_dimension_numbers<[1], [0], [0], [1], [0, 0, 1, 1], [], []>} : vector<32x128xbf16>, vector<128x128xbf16>, vector<32x128xf32> -> vector<32x128xf32>
    %c1_95 = arith.constant 1 : index
    %c1_96 = arith.constant 1 : index
    %c0_97 = arith.constant 0 : index
    %c0_98 = arith.constant 0 : index
    %248 = vector.load %arg7[%c1_95, %c1_96, %c0_97, %c0_98] : memref<2x2x1x128xf32, #tpu.memory_space<vmem>>, vector<1x1x1x128xf32>
    %249 = vector.shape_cast %248 : vector<1x1x1x128xf32> to vector<1x128xf32>
    %250 = vector.broadcast %249 : vector<1x128xf32> to vector<32x128xf32>
    %251 = arith.addf %247, %250 : vector<32x128xf32>
    %cst_99 = arith.constant 0.000000e+00 : f32
    %252 = vector.broadcast %cst_99 : f32 to vector<32x128xf32>
    %253 = arith.maximumf %251, %252 : vector<32x128xf32>
    %254 = arith.addf %167, %253 : vector<32x128xf32>
    %c2 = arith.constant 2 : index
    %c0_100 = arith.constant 0 : index
    %c0_101 = arith.constant 0 : index
    %c0_102 = arith.constant 0 : index
    %255 = vector.load %arg4[%c2, %c0_100, %c0_101, %c0_102] : memref<3x2x1x128xf32, #tpu.memory_space<vmem>>, vector<1x1x1x128xf32>
    %256 = vector.shape_cast %255 : vector<1x1x1x128xf32> to vector<1x128xf32>
    %c2_103 = arith.constant 2 : index
    %c1_104 = arith.constant 1 : index
    %c0_105 = arith.constant 0 : index
    %c0_106 = arith.constant 0 : index
    %257 = vector.load %arg4[%c2_103, %c1_104, %c0_105, %c0_106] : memref<3x2x1x128xf32, #tpu.memory_space<vmem>>, vector<1x1x1x128xf32>
    %258 = vector.shape_cast %257 : vector<1x1x1x128xf32> to vector<1x128xf32>
    %cst_107 = arith.constant dense<0.000000e+00> : vector<32xf32>
    %259 = vector.multi_reduction <add>, %254, %cst_107 [1] : vector<32x128xf32> to vector<32xf32>
    %260 = vector.shape_cast %259 : vector<32xf32> to vector<32x1xf32>
    %cst_108 = arith.constant 3.125000e-02 : f32
    %261 = vector.broadcast %cst_108 : f32 to vector<32x1xf32>
    %262 = arith.mulf %260, %261 : vector<32x1xf32>
    %263 = vector.broadcast %262 : vector<32x1xf32> to vector<32x128xf32>
    %264 = arith.subf %254, %263 : vector<32x128xf32>
    %265 = vector.broadcast %28 : vector<1x128xf32> to vector<32x128xf32>
    %266 = arith.mulf %264, %265 : vector<32x128xf32>
    %267 = arith.mulf %266, %266 : vector<32x128xf32>
    %cst_109 = arith.constant dense<0.000000e+00> : vector<32xf32>
    %268 = vector.multi_reduction <add>, %267, %cst_109 [1] : vector<32x128xf32> to vector<32xf32>
    %269 = vector.shape_cast %268 : vector<32xf32> to vector<32x1xf32>
    %cst_110 = arith.constant 3.125000e-02 : f32
    %270 = vector.broadcast %cst_110 : f32 to vector<32x1xf32>
    %271 = arith.mulf %269, %270 : vector<32x1xf32>
    %cst_111 = arith.constant 9.99999974E-6 : f32
    %272 = vector.broadcast %cst_111 : f32 to vector<32x1xf32>
    %273 = arith.addf %271, %272 : vector<32x1xf32>
    %274 = math.rsqrt %273 : vector<32x1xf32>
    %275 = vector.broadcast %274 : vector<32x1xf32> to vector<32x128xf32>
    %276 = arith.mulf %266, %275 : vector<32x128xf32>
    %277 = vector.broadcast %256 : vector<1x128xf32> to vector<32x128xf32>
    %278 = arith.mulf %276, %277 : vector<32x128xf32>
    %279 = vector.broadcast %258 : vector<1x128xf32> to vector<32x128xf32>
    %280 = arith.addf %278, %279 : vector<32x128xf32>
    %281 = vector.shape_cast %280 : vector<32x128xf32> to vector<2x16x128xf32>
    %c0_112 = arith.constant 0 : index
    %c0_113 = arith.constant 0 : index
    %c0_114 = arith.constant 0 : index
    %282 = vector.load %arg8[%c0_112, %c0_113, %c0_114] : memref<2x16x128xf32, #tpu.memory_space<vmem>>, vector<2x16x128xf32>
    tpu.vector_store %arg8[%c0_112, %c0_113, %c0_114], %281 {strides = array<i32>} : memref<2x16x128xf32, #tpu.memory_space<vmem>>, vector<2x16x128xf32>,
    return
  }
  func.func @transform_0(%arg0: i32, %arg1: memref<2xi32, #tpu.memory_space<smem>>) -> (i32, i32, i32) {
    %c0_i32 = arith.constant 0 : i32
    %c0_i32_0 = arith.constant 0 : i32
    %c0_i32_1 = arith.constant 0 : i32
    return %arg0, %c0_i32, %c0_i32_0 : i32, i32, i32
  }
  func.func @transform_1(%arg0: i32, %arg1: memref<2xi32, #tpu.memory_space<smem>>) -> (i32, i32) {
    %c0_i32 = arith.constant 0 : i32
    %c0_i32_0 = arith.constant 0 : i32
    %c0_i32_1 = arith.constant 0 : i32
    return %c0_i32, %c0_i32_0 : i32, i32
  }
  func.func @transform_2(%arg0: i32, %arg1: memref<2xi32, #tpu.memory_space<smem>>) -> (i32, i32, i32, i32) {
    %c0_i32 = arith.constant 0 : i32
    %c0_i32_0 = arith.constant 0 : i32
    %c0_i32_1 = arith.constant 0 : i32
    %c0_i32_2 = arith.constant 0 : i32
    %c0_i32_3 = arith.constant 0 : i32
    return %c0_i32, %c0_i32_0, %c0_i32_1, %c0_i32_2 : i32, i32, i32, i32
  }
  func.func @transform_3(%arg0: i32, %arg1: memref<2xi32, #tpu.memory_space<smem>>) -> (i32, i32, i32, i32) {
    %c0_i32 = arith.constant 0 : i32
    %c0_i32_0 = arith.constant 0 : i32
    %c0_i32_1 = arith.constant 0 : i32
    %c0_i32_2 = arith.constant 0 : i32
    %c0_i32_3 = arith.constant 0 : i32
    return %c0_i32, %c0_i32_0, %c0_i32_1, %c0_i32_2 : i32, i32, i32, i32
  }
  func.func @transform_4(%arg0: i32, %arg1: memref<2xi32, #tpu.memory_space<smem>>) -> (i32, i32, i32, i32) {
    %c0_i32 = arith.constant 0 : i32
    %c0_i32_0 = arith.constant 0 : i32
    %c0_i32_1 = arith.constant 0 : i32
    %c0_i32_2 = arith.constant 0 : i32
    %c0_i32_3 = arith.constant 0 : i32
    return %c0_i32, %c0_i32_0, %c0_i32_1, %c0_i32_2 : i32, i32, i32, i32
  }
  func.func @transform_5(%arg0: i32, %arg1: memref<2xi32, #tpu.memory_space<smem>>) -> (i32, i32, i32, i32) {
    %c0_i32 = arith.constant 0 : i32
    %c0_i32_0 = arith.constant 0 : i32
    %c0_i32_1 = arith.constant 0 : i32
    %c0_i32_2 = arith.constant 0 : i32
    %c0_i32_3 = arith.constant 0 : i32
    return %c0_i32, %c0_i32_0, %c0_i32_1, %c0_i32_2 : i32, i32, i32, i32
  }
  func.func @transform_6(%arg0: i32, %arg1: memref<2xi32, #tpu.memory_space<smem>>) -> (i32, i32, i32) {
    %c0_i32 = arith.constant 0 : i32
    %c0_i32_0 = arith.constant 0 : i32
    %c0_i32_1 = arith.constant 0 : i32
    return %arg0, %c0_i32, %c0_i32_0 : i32, i32, i32
  }
}

</mosaic_0001>

<llo_original>
// kernel: tpu_custom_call.1
$region0: #{tpu_custom_call.1}
  #allocation0 [shape = 'u32[]', space=smem, size = 0x4, offset = 0x4, fixed_abs, tag = 'smem constant byte address 0x4 - core index']
  #allocation1 [shape = 'u32[144,128]{1,0:T(1,128)}', space=vmem, size = 0x12000, scoped, tag = 'internal scratch']
  #allocation2 [shape = 's32[1]{0}', space=sflag, size = 0x4, scoped, tag = 'scoped memory for tpu_custom_call.1']
  #allocation3 [shape = 'u8[512]{0}', space=smem, size = 0x200, scoped, tag = 'prefetched SMEM operand 0']
  %s0 = inlined_call_operand.vmem [shape: s32[2], index: 0, kind: input, shape index: {}]
  %s1 = inlined_call_operand.vmem [shape: f32[2,16,128], index: 1, kind: input, shape index: {}]
  %s2 = inlined_call_operand.vmem [shape: f32[16,128], index: 2, kind: input, shape index: {}]
  %s3 = inlined_call_operand.vmem [shape: f32[3,2,1,128], index: 3, kind: input, shape index: {}]
  %s4 = inlined_call_operand.vmem [shape: f32[2,2,5,128], index: 4, kind: input, shape index: {}]
  %s5 = inlined_call_operand.hbm [shape: bf16[2,2,128,128], index: 5, kind: input, shape index: {}]
  %s6 = inlined_call_operand.vmem [shape: f32[2,2,1,128], index: 6, kind: input, shape index: {}]
  %s7 = inlined_call_operand.hbm [shape: f32[2,16,128], index: 7, kind: output, shape index: {}]
  %s8 = sld [smem:[#allocation0]]
  $region38: #{tpu_custom_call.1} parent=0
    _
  %s10 = ssub.s32 1, %s8
  %s11 = scalar_select 0, %s10, %s8
  %s12 = sshll.u32 %s0, 4
  %s13 = int_to_ptr.vmem [resolvable:$true] %s12
  %15 = dma.vmem_to_smem %s13, 16, [#allocation3], [#allocation2]
  %16 = dma.done [#allocation2], 16
  %17 = sfence
  $region1: #{tpu_custom_call.1} parent=0
    #allocation4 [shape = 'u8[131072]{0}', space=vmem, size = 0x20000, scoped, tag = 'input window, operand 5, single buffered']
    #allocation5 [shape = 's32[1]{0}', space=sflag, size = 0x4, scoped, tag = 'scoped memory for tpu_custom_call.1']
    #allocation6 [shape = 's32[1]{0}', space=sflag, size = 0x4, scoped, tag = 'scoped memory for tpu_custom_call.1']
    #allocation7 [shape = 'u8[16384]{0}', space=vmem, size = 0x4000, scoped, tag = 'output window, operand 0, single buffered']
    %18 = vsyncpa [#allocation5], 0
    %19 = vsyncpa [#allocation6], 0
    // Predicated region
    $region2: #{tpu_custom_call.1} parent=1 // pred_check
      _
    $region3: #{tpu_custom_call.1} parent=1 // pred_check_branch
      %21 = sbr.rel (0) target = $region5
    $region4: #{tpu_custom_call.1} parent=1 // pred_region
      _
    $region5: #{tpu_custom_call.1} parent=1 // pred_fallthru
      _
    // Predicated region
    $region6: #{tpu_custom_call.1} parent=1 // pred_check
      _
    $region7: #{tpu_custom_call.1} parent=1 // pred_check_branch
      %23 = sbr.rel (0) target = $region9
    $region8: #{tpu_custom_call.1} parent=1 // pred_region
      _
    $region9: #{tpu_custom_call.1} parent=1 // pred_fallthru
      _
    // Predicated region
    $region10: #{tpu_custom_call.1} parent=1 // pred_check
      _
    $region11: #{tpu_custom_call.1} parent=1 // pred_check_branch
      %25 = sbr.rel (0) target = $region13
    $region12: #{tpu_custom_call.1} parent=1 // pred_region
      _
    $region13: #{tpu_custom_call.1} parent=1 // pred_fallthru
      _
    // Predicated region
    $region14: #{tpu_custom_call.1} parent=1 // pred_check
      _
    $region15: #{tpu_custom_call.1} parent=1 // pred_check_branch
      %27 = sbr.rel (0) target = $region17
    $region16: #{tpu_custom_call.1} parent=1 // pred_region
      _
    $region17: #{tpu_custom_call.1} parent=1 // pred_fallthru
      _
    // Predicated region
    $region18: #{tpu_custom_call.1} parent=1 // pred_check
      _
    $region19: #{tpu_custom_call.1} parent=1 // pred_check_branch
      %29 = sbr.rel (0) target = $region21
    $region20: #{tpu_custom_call.1} parent=1 // pred_region
      %s31 = ssub.s32 4096, 4096
      %32 = vsyncadd [#allocation5], %s31
      %s33 = sshll.u32 [#allocation4], 4
      %s34 = int_to_ptr.vmem [resolvable:$true] %s33
      %39 = dma.hbm_to_vmem [thread:$0]  %s5, 4096, %s34, [#allocation5], 64, 64, 4
    $region21: #{tpu_custom_call.1} parent=1 // pred_fallthru
      _
    // Predicated region
    $region22: #{tpu_custom_call.1} parent=1 // pred_check
      _
    $region23: #{tpu_custom_call.1} parent=1 // pred_check_branch
      %41 = sbr.rel (0) target = $region25
    $region24: #{tpu_custom_call.1} parent=1 // pred_region
      _
    $region25: #{tpu_custom_call.1} parent=1 // pred_fallthru
      _
    // Predicated region
    $region26: #{tpu_custom_call.1} parent=1 // pred_check
      _
    $region27: #{tpu_custom_call.1} parent=1 // pred_check_branch
      %43 = sbr.rel (0) target = $region29
    $region28: #{tpu_custom_call.1} parent=1 // pred_region
      %44 = dma.done [#allocation5], 4096
    $region29: #{tpu_custom_call.1} parent=1 // pred_fallthru
      _
    %v46 = vlaneseq
    %v47 = vshrl.u32 %v46, 7
    %v48 = vadd.s32 %v47, 8
    %s49 = smul.u32 0, 2
    %s50 = sld [smem:[#allocation3 + %s49]]
    %v51 = vstv %s50
    %s52 = sadd.s32 %s49, 1
    %s53 = sld [smem:[#allocation3 + %s52]]
    %v54 = vstv %s53
    %vm55 = vcmp.lt.s32.totalorder %v47, %v51
    %vm56 = vcmp.lt.s32.totalorder %v48, %v51
    %vm57 = vcmp.lt.s32.totalorder %v47, %v54
    %vm58 = vcmp.lt.s32.totalorder %v48, %v54
    %v59 = vsel %vm55, 1, 0
    %v60 = vsel %vm56, 1, 0
    %v61 = vsel %vm57, 1, 0
    %v62 = vsel %vm58, 1, 0
    %v63 = vcvt.s32.f32 %v59
    %v64 = vcvt.s32.f32 %v60
    %v65 = vcvt.s32.f32 %v61
    %v66 = vcvt.s32.f32 %v62
    %v67 = vlaneseq
    %v68 = vand.u32 %v67, 127
    %vm69 = vcmp.lt.s32.totalorder %v68, 32
    %v70 = vsel %vm69, 1, 0
    %v71 = vcvt.s32.f32 %v70
    %vm72 = vcmp.lt.s32.totalorder %v47, 14
    %vm73 = vcmp.lt.s32.totalorder %v48, 14
    %v74 = vsel %vm72, 1, 0
    %v75 = vsel %vm73, 1, 0
    %v76 = vcvt.s32.f32 %v74
    %v77 = vcvt.s32.f32 %v75
    %vm78 = vcmp.lt.s32.totalorder %v47, 15
    %vm79 = vcmp.lt.s32.totalorder %v48, 15
    %v80 = vsel %vm78, 1, 0
    %v81 = vsel %vm79, 1, 0
    %v82 = vcvt.s32.f32 %v80
    %v83 = vcvt.s32.f32 %v81
    %vm84 = vcmp.ge.s32.totalorder %v47, 1
    %vm85 = vcmp.ge.s32.totalorder %v48, 1
    %v86 = vsel %vm84, 1, 0
    %v87 = vsel %vm85, 1, 0
    %v88 = vcvt.s32.f32 %v86
    %v89 = vcvt.s32.f32 %v87
    %vm90 = vcmp.ge.s32.totalorder %v47, 2
    %vm91 = vcmp.ge.s32.totalorder %v48, 2
    %v92 = vsel %vm90, 1, 0
    %v93 = vsel %vm91, 1, 0
    %v94 = vcvt.s32.f32 %v92
    %v95 = vcvt.s32.f32 %v93
    %v96 = vld [vmem:[%s1] sm:$0xff]
    %v97 = vld [vmem:[%s1 + $0x8] sm:$0xff]
    %v98 = vld [vmem:[%s1 + $0x10] sm:$0xff]
    %v99 = vld [vmem:[%s1 + $0x18] sm:$0xff]
    %v100 = vld [vmem:[%s2] sm:$0xff]
    %v101 = vld [vmem:[%s2 + $0x8] sm:$0xff]
    %v102 = vadd.f32 %v96, %v100
    %v103 = vadd.f32 %v97, %v101
    %v104 = vadd.f32 %v98, %v100
    %v105 = vadd.f32 %v99, %v101
    %v106 = vmul.f32 %v102, %v63
    %v107 = vmul.f32 %v103, %v64
    %v108 = vmul.f32 %v104, %v65
    %v109 = vmul.f32 %v105, %v66
    %v110 = vld [vmem:[%s3] sm:$0x1]
    %s111 = scalar_lea.vmem %s3, 1
    %v112 = vld [vmem:[%s111] sm:$0x1]
    %113 = vadd.xlane.f32.xlu0 %v106
    %v114 = vpop.xlane.xlu0 %113
    %115 = vadd.xlane.f32.xlu0 %v107
    %v116 = vpop.xlane.xlu0 %115
    %117 = vadd.xlane.f32.xlu0 %v108
    %v118 = vpop.xlane.xlu0 %117
    %119 = vadd.xlane.f32.xlu0 %v109
    %v120 = vpop.xlane.xlu0 %119
    %v121 = vmul.f32 %v114, 0.03125
    %v122 = vmul.f32 %v116, 0.03125
    %v123 = vmul.f32 %v118, 0.03125
    %v124 = vmul.f32 %v120, 0.03125
    %v125 = vsub.f32 %v106, %v121
    %v126 = vsub.f32 %v107, %v122
    %v127 = vsub.f32 %v108, %v123
    %v128 = vsub.f32 %v109, %v124
    %v129 = vmul.f32 %v125, %v71
    %v130 = vmul.f32 %v126, %v71
    %v131 = vmul.f32 %v127, %v71
    %v132 = vmul.f32 %v128, %v71
    %v133 = vmul.f32 %v129, %v129
    %v134 = vmul.f32 %v130, %v130
    %v135 = vmul.f32 %v131, %v131
    %v136 = vmul.f32 %v132, %v132
    %137 = vadd.xlane.f32.xlu0 %v133
    %v138 = vpop.xlane.xlu0 %137
    %139 = vadd.xlane.f32.xlu0 %v134
    %v140 = vpop.xlane.xlu0 %139
    %141 = vadd.xlane.f32.xlu0 %v135
    %v142 = vpop.xlane.xlu0 %141
    %143 = vadd.xlane.f32.xlu0 %v136
    %v144 = vpop.xlane.xlu0 %143
    %v145 = vmul.f32 %v138, 0.03125
    %v146 = vmul.f32 %v140, 0.03125
    %v147 = vmul.f32 %v142, 0.03125
    %v148 = vmul.f32 %v144, 0.03125
    %v149 = vadd.f32 %v145, 1e-05
    %v150 = vadd.f32 %v146, 1e-05
    %v151 = vadd.f32 %v147, 1e-05
    %v152 = vadd.f32 %v148, 1e-05
    %v153 = vrsqrt.pop %v149
    %v154 = vrsqrt.pop %v150
    %v155 = vrsqrt.pop %v151
    %v156 = vrsqrt.pop %v152
    %v157 = vmul.f32 %v129, %v153
    %v158 = vmul.f32 %v130, %v154
    %v159 = vmul.f32 %v131, %v155
    %v160 = vmul.f32 %v132, %v156
    %v162 = vlaneseq
    %v163 = vshrl.u32 %v162, 7
    %v164 = vsub.s32 0, %v163
    %v165 = vrot.slane %v110, %v164
    %v167 = vmul.f32 %v157, %v165
    %v168 = vmul.f32 %v158, %v165
    %v169 = vmul.f32 %v159, %v165
    %v170 = vmul.f32 %v160, %v165
    %v172 = vlaneseq
    %v173 = vshrl.u32 %v172, 7
    %v174 = vsub.s32 0, %v173
    %v175 = vrot.slane %v112, %v174
    %v177 = vadd.f32 %v167, %v175
    %v178 = vadd.f32 %v168, %v175
    %v179 = vadd.f32 %v169, %v175
    %v180 = vadd.f32 %v170, %v175
    %v181 = vmul.f32 %v177, %v63
    %v182 = vmul.f32 %v178, %v64
    %v183 = vmul.f32 %v179, %v65
    %v184 = vmul.f32 %v180, %v66
    %v185 = vld [vmem:[%s4] sm:$0x1f]
    %v186 = vlaneseq
    %v187 = vshrl.u32 %v186, 7
    %v188 = vsub.s32 2, %v187
    %v189 = vrot.slane %v185, %v188
    %v190 = vmul.f32 %v181, %v189
    %v191 = vmul.f32 %v182, %v189
    %v192 = vmul.f32 %v183, %v189
    %v193 = vmul.f32 %v184, %v189
    %v194 = vrot.slane %v181, 6
    %v195 = vrot.slane %v182, 6
    %v196 = vrot.slane %v183, 6
    %v197 = vrot.slane %v184, 6
    %vm198 = vcmp.lt.s32.totalorder %v47, 2
    %v199 = vsel %vm198, %v196, %v197
    %v200 = vsel %vm198, %v195, %v196
    %v201 = vsel %vm198, %v194, %v195
    %v202 = vsel %vm198, %v197, %v194
    %v203 = vlaneseq
    %v204 = vshrl.u32 %v203, 7
    %v205 = vsub.s32 0, %v204
    %v206 = vrot.slane %v185, %v205
    %v207 = vmul.f32 %v202, %v206
    %v208 = vmul.f32 %v201, %v206
    %v209 = vmul.f32 %v200, %v206
    %v210 = vmul.f32 %v199, %v206
    %v211 = vmul.f32 %v207, %v94
    %v212 = vmul.f32 %v208, %v95
    %v213 = vmul.f32 %v209, %v94
    %v214 = vmul.f32 %v210, %v95
    %v215 = vadd.f32 %v190, %v211
    %v216 = vadd.f32 %v191, %v212
    %v217 = vadd.f32 %v192, %v213
    %v218 = vadd.f32 %v193, %v214
    %v219 = vrot.slane %v181, 7
    %v220 = vrot.slane %v182, 7
    %v221 = vrot.slane %v183, 7
    %v222 = vrot.slane %v184, 7
    %vm223 = vcmp.lt.s32.totalorder %v47, 1
    %v224 = vsel %vm223, %v221, %v222
    %v225 = vsel %vm223, %v220, %v221
    %v226 = vsel %vm223, %v219, %v220
    %v227 = vsel %vm223, %v222, %v219
    %v228 = vlaneseq
    %v229 = vshrl.u32 %v228, 7
    %v230 = vsub.s32 1, %v229
    %v231 = vrot.slane %v185, %v230
    %v232 = vmul.f32 %v227, %v231
    %v233 = vmul.f32 %v226, %v231
    %v234 = vmul.f32 %v225, %v231
    %v235 = vmul.f32 %v224, %v231
    %v236 = vmul.f32 %v232, %v88
    %v237 = vmul.f32 %v233, %v89
    %v238 = vmul.f32 %v234, %v88
    %v239 = vmul.f32 %v235, %v89
    %v240 = vadd.f32 %v215, %v236
    %v241 = vadd.f32 %v216, %v237
    %v242 = vadd.f32 %v217, %v238
    %v243 = vadd.f32 %v218, %v239
    %v244 = vrot.slane %v181, 1
    %v245 = vrot.slane %v182, 1
    %v246 = vrot.slane %v183, 1
    %v247 = vrot.slane %v184, 1
    %vm248 = vcmp.lt.s32.totalorder %v47, 7
    %v249 = vsel %vm248, %v246, %v247
    %v250 = vsel %vm248, %v245, %v246
    %v251 = vsel %vm248, %v244, %v245
    %v252 = vsel %vm248, %v247, %v244
    %v253 = vlaneseq
    %v254 = vshrl.u32 %v253, 7
    %v255 = vsub.s32 3, %v254
    %v256 = vrot.slane %v185, %v255
    %v257 = vmul.f32 %v251, %v256
    %v258 = vmul.f32 %v250, %v256
    %v259 = vmul.f32 %v249, %v256
    %v260 = vmul.f32 %v252, %v256
    %v261 = vmul.f32 %v257, %v82
    %v262 = vmul.f32 %v258, %v83
    %v263 = vmul.f32 %v259, %v82
    %v264 = vmul.f32 %v260, %v83
    %v265 = vadd.f32 %v240, %v261
    %v266 = vadd.f32 %v241, %v262
    %v267 = vadd.f32 %v242, %v263
    %v268 = vadd.f32 %v243, %v264
    %v269 = vrot.slane %v181, 2
    %v270 = vrot.slane %v182, 2
    %v271 = vrot.slane %v183, 2
    %v272 = vrot.slane %v184, 2
    %vm273 = vcmp.lt.s32.totalorder %v47, 6
    %v274 = vsel %vm273, %v271, %v272
    %v275 = vsel %vm273, %v270, %v271
    %v276 = vsel %vm273, %v269, %v270
    %v277 = vsel %vm273, %v272, %v269
    %v278 = vlaneseq
    %v279 = vshrl.u32 %v278, 7
    %v280 = vsub.s32 4, %v279
    %v281 = vrot.slane %v185, %v280
    %v282 = vmul.f32 %v276, %v281
    %v283 = vmul.f32 %v275, %v281
    %v284 = vmul.f32 %v274, %v281
    %v285 = vmul.f32 %v277, %v281
    %v286 = vmul.f32 %v282, %v76
    %v287 = vmul.f32 %v283, %v77
    %v288 = vmul.f32 %v284, %v76
    %v289 = vmul.f32 %v285, %v77
    %v290 = vadd.f32 %v265, %v286
    %v291 = vadd.f32 %v266, %v287
    %v292 = vadd.f32 %v267, %v288
    %v293 = vadd.f32 %v268, %v289
    %v294 = vpack.c.bf16 %v291, %v290
    %v295 = vpack.c.bf16 %v293, %v292
    %v296 = vld [vmem:[#allocation4] sm:$0xf]
    %v297 = vld [vmem:[#allocation4 + $0x4] sm:$0xf]
    %v298 = vld [vmem:[#allocation4 + $0x8] sm:$0xf]
    %v299 = vld [vmem:[#allocation4 + $0xc] sm:$0xf]
    %v300 = vld [vmem:[#allocation4 + $0x10] sm:$0xf]
    %v301 = vld [vmem:[#allocation4 + $0x14] sm:$0xf]
    %v302 = vld [vmem:[#allocation4 + $0x18] sm:$0xf]
    %v303 = vld [vmem:[#allocation4 + $0x1c] sm:$0xf]
    %v304 = vld [vmem:[#allocation4 + $0x20] sm:$0xf]
    %v305 = vld [vmem:[#allocation4 + $0x24] sm:$0xf]
    %v306 = vld [vmem:[#allocation4 + $0x28] sm:$0xf]
    %v307 = vld [vmem:[#allocation4 + $0x2c] sm:$0xf]
    %v308 = vld [vmem:[#allocation4 + $0x30] sm:$0xf]
    %v309 = vld [vmem:[#allocation4 + $0x34] sm:$0xf]
    %v310 = vld [vmem:[#allocation4 + $0x38] sm:$0xf]
    %v311 = vld [vmem:[#allocation4 + $0x3c] sm:$0xf]
    %v312 = vld [vmem:[%s6] sm:$0x1]
    %v314 = vlaneseq
    %v315 = vshrl.u32 %v314, 7
    %v316 = vsub.s32 0, %v315
    %v317 = vrot.slane %v312, %v316
    %v335 = vunpack.c.l.b16 %v296
    %v336 = vunpack.c.l.b16 %v297
    %v337 = vunpack.c.l.b16 %v298
    %v338 = vunpack.c.l.b16 %v299
    %v339 = vunpack.c.l.b16 %v300
    %v340 = vunpack.c.l.b16 %v301
    %v341 = vunpack.c.l.b16 %v302
    %v342 = vunpack.c.l.b16 %v303
    %v343 = vunpack.c.l.b16 %v304
    %v344 = vunpack.c.l.b16 %v305
    %v345 = vunpack.c.l.b16 %v306
    %v346 = vunpack.c.l.b16 %v307
    %v347 = vunpack.c.l.b16 %v308
    %v348 = vunpack.c.l.b16 %v309
    %v349 = vunpack.c.l.b16 %v310
    %v350 = vunpack.c.l.b16 %v311
    %v351 = vpack.c.b16 %v336, %v335
    %v352 = vpack.c.b16 %v338, %v337
    %v353 = vpack.c.b16 %v340, %v339
    %v354 = vpack.c.b16 %v342, %v341
    %v355 = vpack.c.b16 %v344, %v343
    %v356 = vpack.c.b16 %v346, %v345
    %v357 = vpack.c.b16 %v348, %v347
    %v358 = vpack.c.b16 %v350, %v349
    %367 = vmatprep.subr.bf16.mxu0 0
    %368 = vmatpush1.bf16.msra.mxu0 %v351
    %369 = vmatprep.subr.bf16.mxu0 0
    %370 = vmatpush1.bf16.msra.mxu0 %v352
    %371 = vmatprep.subr.bf16.mxu0 0
    %372 = vmatpush1.bf16.msra.mxu0 %v353
    %373 = vmatprep.subr.bf16.mxu0 0
    %374 = vmatpush1.bf16.msra.mxu0 %v354
    %375 = vmatprep.subr.bf16.mxu0 0
    %376 = vmatpush1.bf16.msra.mxu0 %v355
    %377 = vmatprep.subr.bf16.mxu0 0
    %378 = vmatpush1.bf16.msra.mxu0 %v356
    %379 = vmatprep.subr.bf16.mxu0 0
    %380 = vmatpush1.bf16.msra.mxu0 %v357
    %381 = vmatprep.subr.bf16.mxu0 0
    %382 = vmatpush1.bf16.msra.mxu0 %v358
    %383 = vmatprep.subr.bf16.mxu0 0
    %384 = vmatpush1.bf16.msra.mxu0 0
    %385 = vmatprep.subr.bf16.mxu0 0
    %386 = vmatpush1.bf16.msra.mxu0 0
    %387 = vmatprep.subr.bf16.mxu0 0
    %388 = vmatpush1.bf16.msra.mxu0 0
    %389 = vmatprep.subr.bf16.mxu0 0
    %390 = vmatpush1.bf16.msra.mxu0 0
    %391 = vmatprep.subr.bf16.mxu0 0
    %392 = vmatpush1.bf16.msra.mxu0 0
    %393 = vmatprep.subr.bf16.mxu0 0
    %394 = vmatpush1.bf16.msra.mxu0 0
    %395 = vmatprep.subr.bf16.mxu0 0
    %396 = vmatpush1.bf16.msra.mxu0 0
    %397 = vmatprep.subr.bf16.mxu0 0
    %398 = vmatpush1.bf16.msra.mxu0 0
    %399 = vmatprep.mubr.bf16.mxu0 0
    %400 = vmatmul.mubr.bf16.gmra.mrb[0].mxu0 %v294
    %v401 = vpop.f32.mrb[0].mxu0
    %v402 = vadd.f32 %v317, %v401
    %v403 = vpop.f32.mrb[0].mxu0
    %v404 = vpop.f32.mrb[0].mxu0
    %v405 = vadd.f32 %v317, %v404
    %v406 = vpop.f32.mrb[0].mxu0
    %407 = vmatprep.mubr.bf16.mxu0 0
    %408 = vmatmul.mubr.bf16.gmra.mrb[0].mxu0 %v295
    %v409 = vpop.f32.mrb[0].mxu0
    %v410 = vadd.f32 %v317, %v409
    %v411 = vpop.f32.mrb[0].mxu0
    %v412 = vpop.f32.mrb[0].mxu0
    %v413 = vadd.f32 %v317, %v412
    %v414 = vpop.f32.mrb[0].mxu0
    %415 = vdwg.mxu0
    %v416 = vmax.f32 %v402, 0.0
    %v417 = vmax.f32 %v405, 0.0
    %v418 = vmax.f32 %v410, 0.0
    %v419 = vmax.f32 %v413, 0.0
    %s420 = scalar_lea.vmem %s4, 8
    %v421 = vld [vmem:[%s420] sm:$0x1f]
    %v422 = vlaneseq
    %v423 = vshrl.u32 %v422, 7
    %v424 = vsub.s32 2, %v423
    %v425 = vrot.slane %v421, %v424
    %v426 = vmul.f32 %v416, %v425
    %v427 = vmul.f32 %v417, %v425
    %v428 = vmul.f32 %v418, %v425
    %v429 = vmul.f32 %v419, %v425
    %v430 = vrot.slane %v416, 6
    %v431 = vrot.slane %v417, 6
    %v432 = vrot.slane %v418, 6
    %v433 = vrot.slane %v419, 6
    %v434 = vsel %vm198, %v432, %v433
    %v435 = vsel %vm198, %v431, %v432
    %v436 = vsel %vm198, %v430, %v431
    %v437 = vsel %vm198, %v433, %v430
    %v438 = vlaneseq
    %v439 = vshrl.u32 %v438, 7
    %v440 = vsub.s32 0, %v439
    %v441 = vrot.slane %v421, %v440
    %v442 = vmul.f32 %v437, %v441
    %v443 = vmul.f32 %v436, %v441
    %v444 = vmul.f32 %v435, %v441
    %v445 = vmul.f32 %v434, %v441
    %v446 = vmul.f32 %v442, %v94
    %v447 = vmul.f32 %v443, %v95
    %v448 = vmul.f32 %v444, %v94
    %v449 = vmul.f32 %v445, %v95
    %v450 = vadd.f32 %v426, %v446
    %v451 = vadd.f32 %v427, %v447
    %v452 = vadd.f32 %v428, %v448
    %v453 = vadd.f32 %v429, %v449
    %v454 = vrot.slane %v416, 7
    %v455 = vrot.slane %v417, 7
    %v456 = vrot.slane %v418, 7
    %v457 = vrot.slane %v419, 7
    %v458 = vsel %vm223, %v456, %v457
    %v459 = vsel %vm223, %v455, %v456
    %v460 = vsel %vm223, %v454, %v455
    %v461 = vsel %vm223, %v457, %v454
    %v462 = vlaneseq
    %v463 = vshrl.u32 %v462, 7
    %v464 = vsub.s32 1, %v463
    %v465 = vrot.slane %v421, %v464
    %v466 = vmul.f32 %v461, %v465
    %v467 = vmul.f32 %v460, %v465
    %v468 = vmul.f32 %v459, %v465
    %v469 = vmul.f32 %v458, %v465
    %v470 = vmul.f32 %v466, %v88
    %v471 = vmul.f32 %v467, %v89
    %v472 = vmul.f32 %v468, %v88
    %v473 = vmul.f32 %v469, %v89
    %v474 = vadd.f32 %v450, %v470
    %v475 = vadd.f32 %v451, %v471
    %v476 = vadd.f32 %v452, %v472
    %v477 = vadd.f32 %v453, %v473
    %v478 = vrot.slane %v416, 1
    %v479 = vrot.slane %v417, 1
    %v480 = vrot.slane %v418, 1
    %v481 = vrot.slane %v419, 1
    %v482 = vsel %vm248, %v480, %v481
    %v483 = vsel %vm248, %v479, %v480
    %v484 = vsel %vm248, %v478, %v479
    %v485 = vsel %vm248, %v481, %v478
    %v486 = vlaneseq
    %v487 = vshrl.u32 %v486, 7
    %v488 = vsub.s32 3, %v487
    %v489 = vrot.slane %v421, %v488
    %v490 = vmul.f32 %v484, %v489
    %v491 = vmul.f32 %v483, %v489
    %v492 = vmul.f32 %v482, %v489
    %v493 = vmul.f32 %v485, %v489
    %v494 = vmul.f32 %v490, %v82
    %v495 = vmul.f32 %v491, %v83
    %v496 = vmul.f32 %v492, %v82
    %v497 = vmul.f32 %v493, %v83
    %v498 = vadd.f32 %v474, %v494
    %v499 = vadd.f32 %v475, %v495
    %v500 = vadd.f32 %v476, %v496
    %v501 = vadd.f32 %v477, %v497
    %v502 = vrot.slane %v416, 2
    %v503 = vrot.slane %v417, 2
    %v504 = vrot.slane %v418, 2
    %v505 = vrot.slane %v419, 2
    %v506 = vsel %vm273, %v504, %v505
    %v507 = vsel %vm273, %v503, %v504
    %v508 = vsel %vm273, %v502, %v503
    %v509 = vsel %vm273, %v505, %v502
    %v510 = vlaneseq
    %v511 = vshrl.u32 %v510, 7
    %v512 = vsub.s32 4, %v511
    %v513 = vrot.slane %v421, %v512
    %v514 = vmul.f32 %v508, %v513
    %v515 = vmul.f32 %v507, %v513
    %v516 = vmul.f32 %v506, %v513
    %v517 = vmul.f32 %v509, %v513
    %v518 = vmul.f32 %v514, %v76
    %v519 = vmul.f32 %v515, %v77
    %v520 = vmul.f32 %v516, %v76
    %v521 = vmul.f32 %v517, %v77
    %v522 = vadd.f32 %v498, %v518
    %v523 = vadd.f32 %v499, %v519
    %v524 = vadd.f32 %v500, %v520
    %v525 = vadd.f32 %v501, %v521
    %v526 = vpack.c.bf16 %v523, %v522
    %v527 = vpack.c.bf16 %v525, %v524
    %s528 = scalar_lea.vmem [#allocation4], 64
    %v529 = vld [vmem:[%s528] sm:$0xf]
    %v530 = vld [vmem:[%s528 + $0x4] sm:$0xf]
    %v531 = vld [vmem:[%s528 + $0x8] sm:$0xf]
    %v532 = vld [vmem:[%s528 + $0xc] sm:$0xf]
    %v533 = vld [vmem:[%s528 + $0x10] sm:$0xf]
    %v534 = vld [vmem:[%s528 + $0x14] sm:$0xf]
    %v535 = vld [vmem:[%s528 + $0x18] sm:$0xf]
    %v536 = vld [vmem:[%s528 + $0x1c] sm:$0xf]
    %v537 = vld [vmem:[%s528 + $0x20] sm:$0xf]
    %v538 = vld [vmem:[%s528 + $0x24] sm:$0xf]
    %v539 = vld [vmem:[%s528 + $0x28] sm:$0xf]
    %v540 = vld [vmem:[%s528 + $0x2c] sm:$0xf]
    %v541 = vld [vmem:[%s528 + $0x30] sm:$0xf]
    %v542 = vld [vmem:[%s528 + $0x34] sm:$0xf]
    %v543 = vld [vmem:[%s528 + $0x38] sm:$0xf]
    %v544 = vld [vmem:[%s528 + $0x3c] sm:$0xf]
    %s545 = scalar_lea.vmem %s6, 1
    %v546 = vld [vmem:[%s545] sm:$0x1]
    %v548 = vlaneseq
    %v549 = vshrl.u32 %v548, 7
    %v550 = vsub.s32 0, %v549
    %v551 = vrot.slane %v546, %v550
    %v569 = vunpack.c.l.b16 %v529
    %v570 = vunpack.c.l.b16 %v530
    %v571 = vunpack.c.l.b16 %v531
    %v572 = vunpack.c.l.b16 %v532
    %v573 = vunpack.c.l.b16 %v533
    %v574 = vunpack.c.l.b16 %v534
    %v575 = vunpack.c.l.b16 %v535
    %v576 = vunpack.c.l.b16 %v536
    %v577 = vunpack.c.l.b16 %v537
    %v578 = vunpack.c.l.b16 %v538
    %v579 = vunpack.c.l.b16 %v539
    %v580 = vunpack.c.l.b16 %v540
    %v581 = vunpack.c.l.b16 %v541
    %v582 = vunpack.c.l.b16 %v542
    %v583 = vunpack.c.l.b16 %v543
    %v584 = vunpack.c.l.b16 %v544
    %v585 = vpack.c.b16 %v570, %v569
    %v586 = vpack.c.b16 %v572, %v571
    %v587 = vpack.c.b16 %v574, %v573
    %v588 = vpack.c.b16 %v576, %v575
    %v589 = vpack.c.b16 %v578, %v577
    %v590 = vpack.c.b16 %v580, %v579
    %v591 = vpack.c.b16 %v582, %v581
    %v592 = vpack.c.b16 %v584, %v583
    %601 = vmatprep.subr.bf16.mxu0 0
    %602 = vmatpush1.bf16.msra.mxu0 %v585
    %603 = vmatprep.subr.bf16.mxu0 0
    %604 = vmatpush1.bf16.msra.mxu0 %v586
    %605 = vmatprep.subr.bf16.mxu0 0
    %606 = vmatpush1.bf16.msra.mxu0 %v587
    %607 = vmatprep.subr.bf16.mxu0 0
    %608 = vmatpush1.bf16.msra.mxu0 %v588
    %609 = vmatprep.subr.bf16.mxu0 0
    %610 = vmatpush1.bf16.msra.mxu0 %v589
    %611 = vmatprep.subr.bf16.mxu0 0
    %612 = vmatpush1.bf16.msra.mxu0 %v590
    %613 = vmatprep.subr.bf16.mxu0 0
    %614 = vmatpush1.bf16.msra.mxu0 %v591
    %615 = vmatprep.subr.bf16.mxu0 0
    %616 = vmatpush1.bf16.msra.mxu0 %v592
    %617 = vmatprep.subr.bf16.mxu0 0
    %618 = vmatpush1.bf16.msra.mxu0 0
    %619 = vmatprep.subr.bf16.mxu0 0
    %620 = vmatpush1.bf16.msra.mxu0 0
    %621 = vmatprep.subr.bf16.mxu0 0
    %622 = vmatpush1.bf16.msra.mxu0 0
    %623 = vmatprep.subr.bf16.mxu0 0
    %624 = vmatpush1.bf16.msra.mxu0 0
    %625 = vmatprep.subr.bf16.mxu0 0
    %626 = vmatpush1.bf16.msra.mxu0 0
    %627 = vmatprep.subr.bf16.mxu0 0
    %628 = vmatpush1.bf16.msra.mxu0 0
    %629 = vmatprep.subr.bf16.mxu0 0
    %630 = vmatpush1.bf16.msra.mxu0 0
    %631 = vmatprep.subr.bf16.mxu0 0
    %632 = vmatpush1.bf16.msra.mxu0 0
    %633 = vmatprep.mubr.bf16.mxu0 0
    %634 = vmatmul.mubr.bf16.gmra.mrb[0].mxu0 %v526
    %v635 = vpop.f32.mrb[0].mxu0
    %v636 = vadd.f32 %v551, %v635
    %v637 = vpop.f32.mrb[0].mxu0
    %v638 = vpop.f32.mrb[0].mxu0
    %v639 = vadd.f32 %v551, %v638
    %v640 = vpop.f32.mrb[0].mxu0
    %641 = vmatprep.mubr.bf16.mxu0 0
    %642 = vmatmul.mubr.bf16.gmra.mrb[0].mxu0 %v527
    %v643 = vpop.f32.mrb[0].mxu0
    %v644 = vadd.f32 %v551, %v643
    %v645 = vpop.f32.mrb[0].mxu0
    %v646 = vpop.f32.mrb[0].mxu0
    %v647 = vadd.f32 %v551, %v646
    %v648 = vpop.f32.mrb[0].mxu0
    %649 = vdwg.mxu0
    %v650 = vmax.f32 %v636, 0.0
    %v651 = vmax.f32 %v639, 0.0
    %v652 = vmax.f32 %v644, 0.0
    %v653 = vmax.f32 %v647, 0.0
    %v654 = vadd.f32 %v106, %v650
    %v655 = vadd.f32 %v107, %v651
    %v656 = vadd.f32 %v108, %v652
    %v657 = vadd.f32 %v109, %v653
    %s658 = scalar_lea.vmem %s3, 2
    %v659 = vld [vmem:[%s658] sm:$0x1]
    %s660 = scalar_lea.vmem %s3, 3
    %v661 = vld [vmem:[%s660] sm:$0x1]
    %662 = vadd.xlane.f32.xlu0 %v654
    %v663 = vpop.xlane.xlu0 %662
    %664 = vadd.xlane.f32.xlu0 %v655
    %v665 = vpop.xlane.xlu0 %664
    %666 = vadd.xlane.f32.xlu0 %v656
    %v667 = vpop.xlane.xlu0 %666
    %668 = vadd.xlane.f32.xlu0 %v657
    %v669 = vpop.xlane.xlu0 %668
    %v670 = vmul.f32 %v663, 0.03125
    %v671 = vmul.f32 %v665, 0.03125
    %v672 = vmul.f32 %v667, 0.03125
    %v673 = vmul.f32 %v669, 0.03125
    %v674 = vsub.f32 %v654, %v670
    %v675 = vsub.f32 %v655, %v671
    %v676 = vsub.f32 %v656, %v672
    %v677 = vsub.f32 %v657, %v673
    %v678 = vmul.f32 %v674, %v71
    %v679 = vmul.f32 %v675, %v71
    %v680 = vmul.f32 %v676, %v71
    %v681 = vmul.f32 %v677, %v71
    %v682 = vmul.f32 %v678, %v678
    %v683 = vmul.f32 %v679, %v679
    %v684 = vmul.f32 %v680, %v680
    %v685 = vmul.f32 %v681, %v681
    %686 = vadd.xlane.f32.xlu0 %v682
    %v687 = vpop.xlane.xlu0 %686
    %688 = vadd.xlane.f32.xlu0 %v683
    %v689 = vpop.xlane.xlu0 %688
    %690 = vadd.xlane.f32.xlu0 %v684
    %v691 = vpop.xlane.xlu0 %690
    %692 = vadd.xlane.f32.xlu0 %v685
    %v693 = vpop.xlane.xlu0 %692
    %v694 = vmul.f32 %v687, 0.03125
    %v695 = vmul.f32 %v689, 0.03125
    %v696 = vmul.f32 %v691, 0.03125
    %v697 = vmul.f32 %v693, 0.03125
    %v698 = vadd.f32 %v694, 1e-05
    %v699 = vadd.f32 %v695, 1e-05
    %v700 = vadd.f32 %v696, 1e-05
    %v701 = vadd.f32 %v697, 1e-05
    %v702 = vrsqrt.pop %v698
    %v703 = vrsqrt.pop %v699
    %v704 = vrsqrt.pop %v700
    %v705 = vrsqrt.pop %v701
    %v706 = vmul.f32 %v678, %v702
    %v707 = vmul.f32 %v679, %v703
    %v708 = vmul.f32 %v680, %v704
    %v709 = vmul.f32 %v681, %v705
    %v711 = vlaneseq
    %v712 = vshrl.u32 %v711, 7
    %v713 = vsub.s32 0, %v712
    %v714 = vrot.slane %v659, %v713
    %v716 = vmul.f32 %v706, %v714
    %v717 = vmul.f32 %v707, %v714
    %v718 = vmul.f32 %v708, %v714
    %v719 = vmul.f32 %v709, %v714
    %v721 = vlaneseq
    %v722 = vshrl.u32 %v721, 7
    %v723 = vsub.s32 0, %v722
    %v724 = vrot.slane %v661, %v723
    %v726 = vadd.f32 %v716, %v724
    %v727 = vadd.f32 %v717, %v724
    %v728 = vadd.f32 %v718, %v724
    %v729 = vadd.f32 %v719, %v724
    %v730 = vmul.f32 %v726, %v63
    %v731 = vmul.f32 %v727, %v64
    %v732 = vmul.f32 %v728, %v65
    %v733 = vmul.f32 %v729, %v66
    %s734 = scalar_lea.vmem %s4, 16
    %v735 = vld [vmem:[%s734] sm:$0x1f]
    %v736 = vlaneseq
    %v737 = vshrl.u32 %v736, 7
    %v738 = vsub.s32 1, %v737
    %v739 = vrot.slane %v735, %v738
    %v740 = vmul.f32 %v730, %v739
    %v741 = vmul.f32 %v731, %v739
    %v742 = vmul.f32 %v732, %v739
    %v743 = vmul.f32 %v733, %v739
    %v744 = vrot.slane %v730, 7
    %v745 = vrot.slane %v731, 7
    %v746 = vrot.slane %v732, 7
    %v747 = vrot.slane %v733, 7
    %v748 = vsel %vm223, %v746, %v747
    %v749 = vsel %vm223, %v745, %v746
    %v750 = vsel %vm223, %v744, %v745
    %v751 = vsel %vm223, %v747, %v744
    %v752 = vlaneseq
    %v753 = vshrl.u32 %v752, 7
    %v754 = vsub.s32 0, %v753
    %v755 = vrot.slane %v735, %v754
    %v756 = vmul.f32 %v751, %v755
    %v757 = vmul.f32 %v750, %v755
    %v758 = vmul.f32 %v749, %v755
    %v759 = vmul.f32 %v748, %v755
    %v760 = vmul.f32 %v756, %v88
    %v761 = vmul.f32 %v757, %v89
    %v762 = vmul.f32 %v758, %v88
    %v763 = vmul.f32 %v759, %v89
    %v764 = vadd.f32 %v740, %v760
    %v765 = vadd.f32 %v741, %v761
    %v766 = vadd.f32 %v742, %v762
    %v767 = vadd.f32 %v743, %v763
    %v768 = vrot.slane %v730, 1
    %v769 = vrot.slane %v731, 1
    %v770 = vrot.slane %v732, 1
    %v771 = vrot.slane %v733, 1
    %v772 = vsel %vm248, %v770, %v771
    %v773 = vsel %vm248, %v769, %v770
    %v774 = vsel %vm248, %v768, %v769
    %v775 = vsel %vm248, %v771, %v768
    %v776 = vlaneseq
    %v777 = vshrl.u32 %v776, 7
    %v778 = vsub.s32 2, %v777
    %v779 = vrot.slane %v735, %v778
    %v780 = vmul.f32 %v774, %v779
    %v781 = vmul.f32 %v773, %v779
    %v782 = vmul.f32 %v772, %v779
    %v783 = vmul.f32 %v775, %v779
    %v784 = vmul.f32 %v780, %v82
    %v785 = vmul.f32 %v781, %v83
    %v786 = vmul.f32 %v782, %v82
    %v787 = vmul.f32 %v783, %v83
    %v788 = vadd.f32 %v764, %v784
    %v789 = vadd.f32 %v765, %v785
    %v790 = vadd.f32 %v766, %v786
    %v791 = vadd.f32 %v767, %v787
    %v792 = vpack.c.bf16 %v789, %v788
    %v793 = vpack.c.bf16 %v791, %v790
    %s794 = scalar_lea.vmem [#allocation4], 128
    %v795 = vld [vmem:[%s794] sm:$0xf]
    %v796 = vld [vmem:[%s794 + $0x4] sm:$0xf]
    %v797 = vld [vmem:[%s794 + $0x8] sm:$0xf]
    %v798 = vld [vmem:[%s794 + $0xc] sm:$0xf]
    %v799 = vld [vmem:[%s794 + $0x10] sm:$0xf]
    %v800 = vld [vmem:[%s794 + $0x14] sm:$0xf]
    %v801 = vld [vmem:[%s794 + $0x18] sm:$0xf]
    %v802 = vld [vmem:[%s794 + $0x1c] sm:$0xf]
    %v803 = vld [vmem:[%s794 + $0x20] sm:$0xf]
    %v804 = vld [vmem:[%s794 + $0x24] sm:$0xf]
    %v805 = vld [vmem:[%s794 + $0x28] sm:$0xf]
    %v806 = vld [vmem:[%s794 + $0x2c] sm:$0xf]
    %v807 = vld [vmem:[%s794 + $0x30] sm:$0xf]
    %v808 = vld [vmem:[%s794 + $0x34] sm:$0xf]
    %v809 = vld [vmem:[%s794 + $0x38] sm:$0xf]
    %v810 = vld [vmem:[%s794 + $0x3c] sm:$0xf]
    %s811 = scalar_lea.vmem %s6, 2
    %v812 = vld [vmem:[%s811] sm:$0x1]
    %v814 = vlaneseq
    %v815 = vshrl.u32 %v814, 7
    %v816 = vsub.s32 0, %v815
    %v817 = vrot.slane %v812, %v816
    %v835 = vunpack.c.l.b16 %v795
    %v836 = vunpack.c.l.b16 %v796
    %v837 = vunpack.c.l.b16 %v797
    %v838 = vunpack.c.l.b16 %v798
    %v839 = vunpack.c.l.b16 %v799
    %v840 = vunpack.c.l.b16 %v800
    %v841 = vunpack.c.l.b16 %v801
    %v842 = vunpack.c.l.b16 %v802
    %v843 = vunpack.c.l.b16 %v803
    %v844 = vunpack.c.l.b16 %v804
    %v845 = vunpack.c.l.b16 %v805
    %v846 = vunpack.c.l.b16 %v806
    %v847 = vunpack.c.l.b16 %v807
    %v848 = vunpack.c.l.b16 %v808
    %v849 = vunpack.c.l.b16 %v809
    %v850 = vunpack.c.l.b16 %v810
    %v851 = vpack.c.b16 %v836, %v835
    %v852 = vpack.c.b16 %v838, %v837
    %v853 = vpack.c.b16 %v840, %v839
    %v854 = vpack.c.b16 %v842, %v841
    %v855 = vpack.c.b16 %v844, %v843
    %v856 = vpack.c.b16 %v846, %v845
    %v857 = vpack.c.b16 %v848, %v847
    %v858 = vpack.c.b16 %v850, %v849
    %867 = vmatprep.subr.bf16.mxu0 0
    %868 = vmatpush1.bf16.msra.mxu0 %v851
    %869 = vmatprep.subr.bf16.mxu0 0
    %870 = vmatpush1.bf16.msra.mxu0 %v852
    %871 = vmatprep.subr.bf16.mxu0 0
    %872 = vmatpush1.bf16.msra.mxu0 %v853
    %873 = vmatprep.subr.bf16.mxu0 0
    %874 = vmatpush1.bf16.msra.mxu0 %v854
    %875 = vmatprep.subr.bf16.mxu0 0
    %876 = vmatpush1.bf16.msra.mxu0 %v855
    %877 = vmatprep.subr.bf16.mxu0 0
    %878 = vmatpush1.bf16.msra.mxu0 %v856
    %879 = vmatprep.subr.bf16.mxu0 0
    %880 = vmatpush1.bf16.msra.mxu0 %v857
    %881 = vmatprep.subr.bf16.mxu0 0
    %882 = vmatpush1.bf16.msra.mxu0 %v858
    %883 = vmatprep.subr.bf16.mxu0 0
    %884 = vmatpush1.bf16.msra.mxu0 0
    %885 = vmatprep.subr.bf16.mxu0 0
    %886 = vmatpush1.bf16.msra.mxu0 0
    %887 = vmatprep.subr.bf16.mxu0 0
    %888 = vmatpush1.bf16.msra.mxu0 0
    %889 = vmatprep.subr.bf16.mxu0 0
    %890 = vmatpush1.bf16.msra.mxu0 0
    %891 = vmatprep.subr.bf16.mxu0 0
    %892 = vmatpush1.bf16.msra.mxu0 0
    %893 = vmatprep.subr.bf16.mxu0 0
    %894 = vmatpush1.bf16.msra.mxu0 0
    %895 = vmatprep.subr.bf16.mxu0 0
    %896 = vmatpush1.bf16.msra.mxu0 0
    %897 = vmatprep.subr.bf16.mxu0 0
    %898 = vmatpush1.bf16.msra.mxu0 0
    %899 = vmatprep.mubr.bf16.mxu0 0
    %900 = vmatmul.mubr.bf16.gmra.mrb[0].mxu0 %v792
    %v901 = vpop.f32.mrb[0].mxu0
    %v902 = vadd.f32 %v817, %v901
    %v903 = vpop.f32.mrb[0].mxu0
    %v904 = vpop.f32.mrb[0].mxu0
    %v905 = vadd.f32 %v817, %v904
    %v906 = vpop.f32.mrb[0].mxu0
    %907 = vmatprep.mubr.bf16.mxu0 0
    %908 = vmatmul.mubr.bf16.gmra.mrb[0].mxu0 %v793
    %v909 = vpop.f32.mrb[0].mxu0
    %v910 = vadd.f32 %v817, %v909
    %v911 = vpop.f32.mrb[0].mxu0
    %v912 = vpop.f32.mrb[0].mxu0
    %v913 = vadd.f32 %v817, %v912
    %v914 = vpop.f32.mrb[0].mxu0
    %915 = vdwg.mxu0
    %v916 = vmax.f32 %v902, 0.0
    %v917 = vmax.f32 %v905, 0.0
    %v918 = vmax.f32 %v910, 0.0
    %v919 = vmax.f32 %v913, 0.0
    %s920 = scalar_lea.vmem %s4, 24
    %v921 = vld [vmem:[%s920] sm:$0x1f]
    %v922 = vlaneseq
    %v923 = vshrl.u32 %v922, 7
    %v924 = vsub.s32 1, %v923
    %v925 = vrot.slane %v921, %v924
    %v926 = vmul.f32 %v916, %v925
    %v927 = vmul.f32 %v917, %v925
    %v928 = vmul.f32 %v918, %v925
    %v929 = vmul.f32 %v919, %v925
    %v930 = vrot.slane %v916, 7
    %v931 = vrot.slane %v917, 7
    %v932 = vrot.slane %v918, 7
    %v933 = vrot.slane %v919, 7
    %v934 = vsel %vm223, %v932, %v933
    %v935 = vsel %vm223, %v931, %v932
    %v936 = vsel %vm223, %v930, %v931
    %v937 = vsel %vm223, %v933, %v930
    %v938 = vlaneseq
    %v939 = vshrl.u32 %v938, 7
    %v940 = vsub.s32 0, %v939
    %v941 = vrot.slane %v921, %v940
    %v942 = vmul.f32 %v937, %v941
    %v943 = vmul.f32 %v936, %v941
    %v944 = vmul.f32 %v935, %v941
    %v945 = vmul.f32 %v934, %v941
    %v946 = vmul.f32 %v942, %v88
    %v947 = vmul.f32 %v943, %v89
    %v948 = vmul.f32 %v944, %v88
    %v949 = vmul.f32 %v945, %v89
    %v950 = vadd.f32 %v926, %v946
    %v951 = vadd.f32 %v927, %v947
    %v952 = vadd.f32 %v928, %v948
    %v953 = vadd.f32 %v929, %v949
    %v954 = vrot.slane %v916, 1
    %v955 = vrot.slane %v917, 1
    %v956 = vrot.slane %v918, 1
    %v957 = vrot.slane %v919, 1
    %v958 = vsel %vm248, %v956, %v957
    %v959 = vsel %vm248, %v955, %v956
    %v960 = vsel %vm248, %v954, %v955
    %v961 = vsel %vm248, %v957, %v954
    %v962 = vlaneseq
    %v963 = vshrl.u32 %v962, 7
    %v964 = vsub.s32 2, %v963
    %v965 = vrot.slane %v921, %v964
    %v966 = vmul.f32 %v960, %v965
    %v967 = vmul.f32 %v959, %v965
    %v968 = vmul.f32 %v958, %v965
    %v969 = vmul.f32 %v961, %v965
    %v970 = vmul.f32 %v966, %v82
    %v971 = vmul.f32 %v967, %v83
    %v972 = vmul.f32 %v968, %v82
    %v973 = vmul.f32 %v969, %v83
    %v974 = vadd.f32 %v950, %v970
    %v975 = vadd.f32 %v951, %v971
    %v976 = vadd.f32 %v952, %v972
    %v977 = vadd.f32 %v953, %v973
    %v978 = vpack.c.bf16 %v975, %v974
    %v979 = vpack.c.bf16 %v977, %v976
    %s980 = scalar_lea.vmem [#allocation4], 192
    %v981 = vld [vmem:[%s980] sm:$0xf]
    %v982 = vld [vmem:[%s980 + $0x4] sm:$0xf]
    %v983 = vld [vmem:[%s980 + $0x8] sm:$0xf]
    %v984 = vld [vmem:[%s980 + $0xc] sm:$0xf]
    %v985 = vld [vmem:[%s980 + $0x10] sm:$0xf]
    %v986 = vld [vmem:[%s980 + $0x14] sm:$0xf]
    %v987 = vld [vmem:[%s980 + $0x18] sm:$0xf]
    %v988 = vld [vmem:[%s980 + $0x1c] sm:$0xf]
    %v989 = vld [vmem:[%s980 + $0x20] sm:$0xf]
    %v990 = vld [vmem:[%s980 + $0x24] sm:$0xf]
    %v991 = vld [vmem:[%s980 + $0x28] sm:$0xf]
    %v992 = vld [vmem:[%s980 + $0x2c] sm:$0xf]
    %v993 = vld [vmem:[%s980 + $0x30] sm:$0xf]
    %v994 = vld [vmem:[%s980 + $0x34] sm:$0xf]
    %v995 = vld [vmem:[%s980 + $0x38] sm:$0xf]
    %v996 = vld [vmem:[%s980 + $0x3c] sm:$0xf]
    %s997 = scalar_lea.vmem %s6, 3
    %v998 = vld [vmem:[%s997] sm:$0x1]
    %v1000 = vlaneseq
    %v1001 = vshrl.u32 %v1000, 7
    %v1002 = vsub.s32 0, %v1001
    %v1003 = vrot.slane %v998, %v1002
    %v1021 = vunpack.c.l.b16 %v981
    %v1022 = vunpack.c.l.b16 %v982
    %v1023 = vunpack.c.l.b16 %v983
    %v1024 = vunpack.c.l.b16 %v984
    %v1025 = vunpack.c.l.b16 %v985
    %v1026 = vunpack.c.l.b16 %v986
    %v1027 = vunpack.c.l.b16 %v987
    %v1028 = vunpack.c.l.b16 %v988
    %v1029 = vunpack.c.l.b16 %v989
    %v1030 = vunpack.c.l.b16 %v990
    %v1031 = vunpack.c.l.b16 %v991
    %v1032 = vunpack.c.l.b16 %v992
    %v1033 = vunpack.c.l.b16 %v993
    %v1034 = vunpack.c.l.b16 %v994
    %v1035 = vunpack.c.l.b16 %v995
    %v1036 = vunpack.c.l.b16 %v996
    %v1037 = vpack.c.b16 %v1022, %v1021
    %v1038 = vpack.c.b16 %v1024, %v1023
    %v1039 = vpack.c.b16 %v1026, %v1025
    %v1040 = vpack.c.b16 %v1028, %v1027
    %v1041 = vpack.c.b16 %v1030, %v1029
    %v1042 = vpack.c.b16 %v1032, %v1031
    %v1043 = vpack.c.b16 %v1034, %v1033
    %v1044 = vpack.c.b16 %v1036, %v1035
    %1053 = vmatprep.subr.bf16.mxu0 0
    %1054 = vmatpush1.bf16.msra.mxu0 %v1037
    %1055 = vmatprep.subr.bf16.mxu0 0
    %1056 = vmatpush1.bf16.msra.mxu0 %v1038
    %1057 = vmatprep.subr.bf16.mxu0 0
    %1058 = vmatpush1.bf16.msra.mxu0 %v1039
    %1059 = vmatprep.subr.bf16.mxu0 0
    %1060 = vmatpush1.bf16.msra.mxu0 %v1040
    %1061 = vmatprep.subr.bf16.mxu0 0
    %1062 = vmatpush1.bf16.msra.mxu0 %v1041
    %1063 = vmatprep.subr.bf16.mxu0 0
    %1064 = vmatpush1.bf16.msra.mxu0 %v1042
    %1065 = vmatprep.subr.bf16.mxu0 0
    %1066 = vmatpush1.bf16.msra.mxu0 %v1043
    %1067 = vmatprep.subr.bf16.mxu0 0
    %1068 = vmatpush1.bf16.msra.mxu0 %v1044
    %1069 = vmatprep.subr.bf16.mxu0 0
    %1070 = vmatpush1.bf16.msra.mxu0 0
    %1071 = vmatprep.subr.bf16.mxu0 0
    %1072 = vmatpush1.bf16.msra.mxu0 0
    %1073 = vmatprep.subr.bf16.mxu0 0
    %1074 = vmatpush1.bf16.msra.mxu0 0
    %1075 = vmatprep.subr.bf16.mxu0 0
    %1076 = vmatpush1.bf16.msra.mxu0 0
    %1077 = vmatprep.subr.bf16.mxu0 0
    %1078 = vmatpush1.bf16.msra.mxu0 0
    %1079 = vmatprep.subr.bf16.mxu0 0
    %1080 = vmatpush1.bf16.msra.mxu0 0
    %1081 = vmatprep.subr.bf16.mxu0 0
    %1082 = vmatpush1.bf16.msra.mxu0 0
    %1083 = vmatprep.subr.bf16.mxu0 0
    %1084 = vmatpush1.bf16.msra.mxu0 0
    %1085 = vmatprep.mubr.bf16.mxu0 0
    %1086 = vmatmul.mubr.bf16.gmra.mrb[0].mxu0 %v978
    %v1087 = vpop.f32.mrb[0].mxu0
    %v1088 = vadd.f32 %v1003, %v1087
    %v1089 = vpop.f32.mrb[0].mxu0
    %v1090 = vpop.f32.mrb[0].mxu0
    %v1091 = vadd.f32 %v1003, %v1090
    %v1092 = vpop.f32.mrb[0].mxu0
    %1093 = vmatprep.mubr.bf16.mxu0 0
    %1094 = vmatmul.mubr.bf16.gmra.mrb[0].mxu0 %v979
    %v1095 = vpop.f32.mrb[0].mxu0
    %v1096 = vadd.f32 %v1003, %v1095
    %v1097 = vpop.f32.mrb[0].mxu0
    %v1098 = vpop.f32.mrb[0].mxu0
    %v1099 = vadd.f32 %v1003, %v1098
    %v1100 = vpop.f32.mrb[0].mxu0
    %1101 = vdwg.mxu0
    %v1102 = vmax.f32 %v1088, 0.0
    %v1103 = vmax.f32 %v1091, 0.0
    %v1104 = vmax.f32 %v1096, 0.0
    %v1105 = vmax.f32 %v1099, 0.0
    %v1106 = vadd.f32 %v654, %v1102
    %v1107 = vadd.f32 %v655, %v1103
    %v1108 = vadd.f32 %v656, %v1104
    %v1109 = vadd.f32 %v657, %v1105
    %s1110 = scalar_lea.vmem %s3, 4
    %v1111 = vld [vmem:[%s1110] sm:$0x1]
    %s1112 = scalar_lea.vmem %s3, 5
    %v1113 = vld [vmem:[%s1112] sm:$0x1]
    %1114 = vadd.xlane.f32.xlu0 %v1106
    %v1115 = vpop.xlane.xlu0 %1114
    %1116 = vadd.xlane.f32.xlu0 %v1107
    %v1117 = vpop.xlane.xlu0 %1116
    %1118 = vadd.xlane.f32.xlu0 %v1108
    %v1119 = vpop.xlane.xlu0 %1118
    %1120 = vadd.xlane.f32.xlu0 %v1109
    %v1121 = vpop.xlane.xlu0 %1120
    %v1122 = vmul.f32 %v1115, 0.03125
    %v1123 = vmul.f32 %v1117, 0.03125
    %v1124 = vmul.f32 %v1119, 0.03125
    %v1125 = vmul.f32 %v1121, 0.03125
    %v1126 = vsub.f32 %v1106, %v1122
    %v1127 = vsub.f32 %v1107, %v1123
    %v1128 = vsub.f32 %v1108, %v1124
    %v1129 = vsub.f32 %v1109, %v1125
    %v1130 = vmul.f32 %v1126, %v71
    %v1131 = vmul.f32 %v1127, %v71
    %v1132 = vmul.f32 %v1128, %v71
    %v1133 = vmul.f32 %v1129, %v71
    %v1134 = vmul.f32 %v1130, %v1130
    %v1135 = vmul.f32 %v1131, %v1131
    %v1136 = vmul.f32 %v1132, %v1132
    %v1137 = vmul.f32 %v1133, %v1133
    %1138 = vadd.xlane.f32.xlu0 %v1134
    %v1139 = vpop.xlane.xlu0 %1138
    %1140 = vadd.xlane.f32.xlu0 %v1135
    %v1141 = vpop.xlane.xlu0 %1140
    %1142 = vadd.xlane.f32.xlu0 %v1136
    %v1143 = vpop.xlane.xlu0 %1142
    %1144 = vadd.xlane.f32.xlu0 %v1137
    %v1145 = vpop.xlane.xlu0 %1144
    %v1146 = vmul.f32 %v1139, 0.03125
    %v1147 = vmul.f32 %v1141, 0.03125
    %v1148 = vmul.f32 %v1143, 0.03125
    %v1149 = vmul.f32 %v1145, 0.03125
    %v1150 = vadd.f32 %v1146, 1e-05
    %v1151 = vadd.f32 %v1147, 1e-05
    %v1152 = vadd.f32 %v1148, 1e-05
    %v1153 = vadd.f32 %v1149, 1e-05
    %v1154 = vrsqrt.pop %v1150
    %v1155 = vrsqrt.pop %v1151
    %v1156 = vrsqrt.pop %v1152
    %v1157 = vrsqrt.pop %v1153
    %v1158 = vmul.f32 %v1130, %v1154
    %v1159 = vmul.f32 %v1131, %v1155
    %v1160 = vmul.f32 %v1132, %v1156
    %v1161 = vmul.f32 %v1133, %v1157
    %v1163 = vlaneseq
    %v1164 = vshrl.u32 %v1163, 7
    %v1165 = vsub.s32 0, %v1164
    %v1166 = vrot.slane %v1111, %v1165
    %v1168 = vmul.f32 %v1158, %v1166
    %v1169 = vmul.f32 %v1159, %v1166
    %v1170 = vmul.f32 %v1160, %v1166
    %v1171 = vmul.f32 %v1161, %v1166
    %v1173 = vlaneseq
    %v1174 = vshrl.u32 %v1173, 7
    %v1175 = vsub.s32 0, %v1174
    %v1176 = vrot.slane %v1113, %v1175
    %v1178 = vadd.f32 %v1168, %v1176
    %v1179 = vadd.f32 %v1169, %v1176
    %v1180 = vadd.f32 %v1170, %v1176
    %v1181 = vadd.f32 %v1171, %v1176
    %1182 = vst [vmem:[#allocation7] sm:$0xff] %v1178
    %1183 = vst [vmem:[#allocation7 + $0x8] sm:$0xff] %v1179
    %1184 = vst [vmem:[#allocation7 + $0x10] sm:$0xff] %v1180
    %1185 = vst [vmem:[#allocation7 + $0x18] sm:$0xff] %v1181
    // Predicated region
    $region30: #{tpu_custom_call.1} parent=1 // pred_check
      _
    $region31: #{tpu_custom_call.1} parent=1 // pred_check_branch
      %1187 = sbr.rel (0) target = $region33
    $region32: #{tpu_custom_call.1} parent=1 // pred_region
      %s1189 = ssub.s32 512, 512
      %1190 = vsyncadd [#allocation6], %s1189
      %s1191 = sshll.u32 [#allocation7], 4
      %s1192 = int_to_ptr.vmem [resolvable:$true] %s1191
      %1197 = dma.vmem_to_hbm [thread:$0]  %s1192, 512, %s7, [#allocation6], 128, 128, 8
    $region33: #{tpu_custom_call.1} parent=1 // pred_fallthru
      _
    // Predicated region
    $region34: #{tpu_custom_call.1} parent=1 // pred_check
      _
    $region35: #{tpu_custom_call.1} parent=1 // pred_check_branch
      %1199 = sbr.rel (0) target = $region37
    $region36: #{tpu_custom_call.1} parent=1 // pred_region
      %1200 = dma.done [#allocation6], 512
    $region37: #{tpu_custom_call.1} parent=1 // pred_fallthru
      _
    %1201 = vsyncpa [#allocation5], 1
    %1202 = vsyncpa [#allocation6], 1

// kernel: tpu_custom_call.1
$region0: #{tpu_custom_call.1}
  #allocation0 [shape = 'u32[]', space=smem, size = 0x4, offset = 0x4, fixed_abs, tag = 'smem constant byte address 0x4 - core index']
  #allocation1 [shape = 'u32[144,128]{1,0:T(1,128)}', space=vmem, size = 0x12000, scoped, tag = 'internal scratch']
  #allocation2 [shape = 's32[1]{0}', space=sflag, size = 0x4, scoped, tag = 'scoped memory for tpu_custom_call.1']
  #allocation3 [shape = 'u8[512]{0}', space=smem, size = 0x200, scoped, tag = 'prefetched SMEM operand 0']
  %s0 = inlined_call_operand.vmem [shape: s32[2], index: 0, kind: input, shape index: {}]
  %s1 = inlined_call_operand.vmem [shape: f32[2,16,128], index: 1, kind: input, shape index: {}]
  %s2 = inlined_call_operand.vmem [shape: f32[16,128], index: 2, kind: input, shape index: {}]
  %s3 = inlined_call_operand.vmem [shape: f32[3,2,1,128], index: 3, kind: input, shape index: {}]
  %s4 = inlined_call_operand.vmem [shape: f32[2,2,5,128], index: 4, kind: input, shape index: {}]
  %s5 = inlined_call_operand.hbm [shape: bf16[2,2,128,128], index: 5, kind: input, shape index: {}]
  %s6 = inlined_call_operand.vmem [shape: f32[2,2,1,128], index: 6, kind: input, shape index: {}]
  %s7 = inlined_call_operand.hbm [shape: f32[2,16,128], index: 7, kind: output, shape index: {}]
  %s8 = sld [smem:[#allocation0]]
  $region38: #{tpu_custom_call.1} parent=0
    _
  %s10 = ssub.s32 1, %s8
  %s11 = scalar_select 0, %s10, %s8
  %s12 = sshll.u32 %s0, 4
  %s13 = int_to_ptr.vmem [resolvable:$true] %s12
  %15 = dma.vmem_to_smem %s13, 16, [#allocation3], [#allocation2]
  %16 = dma.done [#allocation2], 16
  %17 = sfence
  $region1: #{tpu_custom_call.1} parent=0
    #allocation4 [shape = 'u8[131072]{0}', space=vmem, size = 0x20000, scoped, tag = 'input window, operand 5, single buffered']
    #allocation5 [shape = 's32[1]{0}', space=sflag, size = 0x4, scoped, tag = 'scoped memory for tpu_custom_call.1']
    #allocation6 [shape = 's32[1]{0}', space=sflag, size = 0x4, scoped, tag = 'scoped memory for tpu_custom_call.1']
    #allocation7 [shape = 'u8[16384]{0}', space=vmem, size = 0x4000, scoped, tag = 'output window, operand 0, single buffered']
    %18 = vsyncpa [#allocation5], 0
    %19 = vsyncpa [#allocation6], 0
    // Predicated region
    $region2: #{tpu_custom_call.1} parent=1 // pred_check
      _
    $region3: #{tpu_custom_call.1} parent=1 // pred_check_branch
      %21 = sbr.rel (0) target = $region5
    $region4: #{tpu_custom_call.1} parent=1 // pred_region
      _
    $region5: #{tpu_custom_call.1} parent=1 // pred_fallthru
      _
    // Predicated region
    $region6: #{tpu_custom_call.1} parent=1 // pred_check
      _
    $region7: #{tpu_custom_call.1} parent=1 // pred_check_branch
      %23 = sbr.rel (0) target = $region9
    $region8: #{tpu_custom_call.1} parent=1 // pred_region
      _
    $region9: #{tpu_custom_call.1} parent=1 // pred_fallthru
      _
    // Predicated region
    $region10: #{tpu_custom_call.1} parent=1 // pred_check
      _
    $region11: #{tpu_custom_call.1} parent=1 // pred_check_branch
      %25 = sbr.rel (0) target = $region13
    $region12: #{tpu_custom_call.1} parent=1 // pred_region
      _
    $region13: #{tpu_custom_call.1} parent=1 // pred_fallthru
      _
    // Predicated region
    $region14: #{tpu_custom_call.1} parent=1 // pred_check
      _
    $region15: #{tpu_custom_call.1} parent=1 // pred_check_branch
      %27 = sbr.rel (0) target = $region17
    $region16: #{tpu_custom_call.1} parent=1 // pred_region
      _
    $region17: #{tpu_custom_call.1} parent=1 // pred_fallthru
      _
    // Predicated region
    $region18: #{tpu_custom_call.1} parent=1 // pred_check
      _
    $region19: #{tpu_custom_call.1} parent=1 // pred_check_branch
      %29 = sbr.rel (0) target = $region21
    $region20: #{tpu_custom_call.1} parent=1 // pred_region
      %s31 = ssub.s32 4096, 4096
      %32 = vsyncadd [#allocation5], %s31
      %s33 = sshll.u32 [#allocation4], 4
      %s34 = int_to_ptr.vmem [resolvable:$true] %s33
      %39 = dma.hbm_to_vmem [thread:$0]  %s5, 4096, %s34, [#allocation5], 64, 64, 4
    $region21: #{tpu_custom_call.1} parent=1 // pred_fallthru
      _
    // Predicated region
    $region22: #{tpu_custom_call.1} parent=1 // pred_check
      _
    $region23: #{tpu_custom_call.1} parent=1 // pred_check_branch
      %41 = sbr.rel (0) target = $region25
    $region24: #{tpu_custom_call.1} parent=1 // pred_region
      _
    $region25: #{tpu_custom_call.1} parent=1 // pred_fallthru
      _
    // Predicated region
    $region26: #{tpu_custom_call.1} parent=1 // pred_check
      _
    $region27: #{tpu_custom_call.1} parent=1 // pred_check_branch
      %43 = sbr.rel (0) target = $region29
    $region28: #{tpu_custom_call.1} parent=1 // pred_region
      %44 = dma.done [#allocation5], 4096
    $region29: #{tpu_custom_call.1} parent=1 // pred_fallthru
      _
    %v46 = vlaneseq
    %v47 = vshrl.u32 %v46, 7
    %v48 = vadd.s32 %v47, 8
    %s49 = smul.u32 0, 2
    %s50 = sld [smem:[#allocation3 + %s49]]
    %v51 = vstv %s50
    %s52 = sadd.s32 %s49, 1
    %s53 = sld [smem:[#allocation3 + %s52]]
    %v54 = vstv %s53
    %vm55 = vcmp.lt.s32.totalorder %v47, %v51
    %vm56 = vcmp.lt.s32.totalorder %v48, %v51
    %vm57 = vcmp.lt.s32.totalorder %v47, %v54
    %vm58 = vcmp.lt.s32.totalorder %v48, %v54
    %v59 = vsel %vm55, 1, 0
    %v60 = vsel %vm56, 1, 0
    %v61 = vsel %vm57, 1, 0
    %v62 = vsel %vm58, 1, 0
    %v63 = vcvt.s32.f32 %v59
    %v64 = vcvt.s32.f32 %v60
    %v65 = vcvt.s32.f32 %v61
    %v66 = vcvt.s32.f32 %v62
    %v67 = vlaneseq
    %v68 = vand.u32 %v67, 127
    %vm69 = vcmp.lt.s32.totalorder %v68, 32
    %v70 = vsel %vm69, 1, 0
    %v71 = vcvt.s32.f32 %v70
    %vm72 = vcmp.lt.s32.totalorder %v47, 14
    %vm73 = vcmp.lt.s32.totalorder %v48, 14
    %v74 = vsel %vm72, 1, 0
    %v75 = vsel %vm73, 1, 0
    %v76 = vcvt.s32.f32 %v74
    %v77 = vcvt.s32.f32 %v75
    %vm78 = vcmp.lt.s32.totalorder %v47, 15
    %vm79 = vcmp.lt.s32.totalorder %v48, 15
    %v80 = vsel %vm78, 1, 0
    %v81 = vsel %vm79, 1, 0
    %v82 = vcvt.s32.f32 %v80
    %v83 = vcvt.s32.f32 %v81
    %vm84 = vcmp.ge.s32.totalorder %v47, 1
    %vm85 = vcmp.ge.s32.totalorder %v48, 1
    %v86 = vsel %vm84, 1, 0
    %v87 = vsel %vm85, 1, 0
    %v88 = vcvt.s32.f32 %v86
    %v89 = vcvt.s32.f32 %v87
    %vm90 = vcmp.ge.s32.totalorder %v47, 2
    %vm91 = vcmp.ge.s32.totalorder %v48, 2
    %v92 = vsel %vm90, 1, 0
    %v93 = vsel %vm91, 1, 0
    %v94 = vcvt.s32.f32 %v92
    %v95 = vcvt.s32.f32 %v93
    %v96 = vld [vmem:[%s1] sm:$0xff]
    %v97 = vld [vmem:[%s1 + $0x8] sm:$0xff]
    %v98 = vld [vmem:[%s1 + $0x10] sm:$0xff]
    %v99 = vld [vmem:[%s1 + $0x18] sm:$0xff]
    %v100 = vld [vmem:[%s2] sm:$0xff]
    %v101 = vld [vmem:[%s2 + $0x8] sm:$0xff]
    %v102 = vadd.f32 %v96, %v100
    %v103 = vadd.f32 %v97, %v101
    %v104 = vadd.f32 %v98, %v100
    %v105 = vadd.f32 %v99, %v101
    %v106 = vmul.f32 %v102, %v63
    %v107 = vmul.f32 %v103, %v64
    %v108 = vmul.f32 %v104, %v65
    %v109 = vmul.f32 %v105, %v66
    %v110 = vld [vmem:[%s3] sm:$0x1]
    %s111 = scalar_lea.vmem %s3, 1
    %v112 = vld [vmem:[%s111] sm:$0x1]
    %113 = vadd.xlane.f32.xlu0 %v106
    %v114 = vpop.xlane.xlu0 %113
    %115 = vadd.xlane.f32.xlu0 %v107
    %v116 = vpop.xlane.xlu0 %115
    %117 = vadd.xlane.f32.xlu0 %v108
    %v118 = vpop.xlane.xlu0 %117
    %119 = vadd.xlane.f32.xlu0 %v109
    %v120 = vpop.xlane.xlu0 %119
    %v121 = vmul.f32 %v114, 0.03125
    %v122 = vmul.f32 %v116, 0.03125
    %v123 = vmul.f32 %v118, 0.03125
    %v124 = vmul.f32 %v120, 0.03125
    %v125 = vsub.f32 %v106, %v121
    %v126 = vsub.f32 %v107, %v122
    %v127 = vsub.f32 %v108, %v123
    %v128 = vsub.f32 %v109, %v124
    %v129 = vmul.f32 %v125, %v71
    %v130 = vmul.f32 %v126, %v71
    %v131 = vmul.f32 %v127, %v71
    %v132 = vmul.f32 %v128, %v71
    %v133 = vmul.f32 %v129, %v129
    %v134 = vmul.f32 %v130, %v130
    %v135 = vmul.f32 %v131, %v131
    %v136 = vmul.f32 %v132, %v132
    %137 = vadd.xlane.f32.xlu0 %v133
    %v138 = vpop.xlane.xlu0 %137
    %139 = vadd.xlane.f32.xlu0 %v134
    %v140 = vpop.xlane.xlu0 %139
    %141 = vadd.xlane.f32.xlu0 %v135
    %v142 = vpop.xlane.xlu0 %141
    %143 = vadd.xlane.f32.xlu0 %v136
    %v144 = vpop.xlane.xlu0 %143
    %v145 = vmul.f32 %v138, 0.03125
    %v146 = vmul.f32 %v140, 0.03125
    %v147 = vmul.f32 %v142, 0.03125
    %v148 = vmul.f32 %v144, 0.03125
    %v149 = vadd.f32 %v145, 1e-05
    %v150 = vadd.f32 %v146, 1e-05
    %v151 = vadd.f32 %v147, 1e-05
    %v152 = vadd.f32 %v148, 1e-05
    %v153 = vrsqrt.pop %v149
    %v154 = vrsqrt.pop %v150
    %v155 = vrsqrt.pop %v151
    %v156 = vrsqrt.pop %v152
    %v157 = vmul.f32 %v129, %v153
    %v158 = vmul.f32 %v130, %v154
    %v159 = vmul.f32 %v131, %v155
    %v160 = vmul.f32 %v132, %v156
    %v162 = vlaneseq
    %v163 = vshrl.u32 %v162, 7
    %v164 = vsub.s32 0, %v163
    %v165 = vrot.slane %v110, %v164
    %v167 = vmul.f32 %v157, %v165
    %v168 = vmul.f32 %v158, %v165
    %v169 = vmul.f32 %v159, %v165
    %v170 = vmul.f32 %v160, %v165
    %v172 = vlaneseq
    %v173 = vshrl.u32 %v172, 7
    %v174 = vsub.s32 0, %v173
    %v175 = vrot.slane %v112, %v174
    %v177 = vadd.f32 %v167, %v175
    %v178 = vadd.f32 %v168, %v175
    %v179 = vadd.f32 %v169, %v175
    %v180 = vadd.f32 %v170, %v175
    %v181 = vmul.f32 %v177, %v63
    %v182 = vmul.f32 %v178, %v64
    %v183 = vmul.f32 %v179, %v65
    %v184 = vmul.f32 %v180, %v66
    %v185 = vld [vmem:[%s4] sm:$0x1f]
    %v186 = vlaneseq
    %v187 = vshrl.u32 %v186, 7
    %v188 = vsub.s32 2, %v187
    %v189 = vrot.slane %v185, %v188
    %v190 = vmul.f32 %v181, %v189
    %v191 = vmul.f32 %v182, %v189
    %v192 = vmul.f32 %v183, %v189
    %v193 = vmul.f32 %v184, %v189
    %v194 = vrot.slane %v181, 6
    %v195 = vrot.slane %v182, 6
    %v196 = vrot.slane %v183, 6
    %v197 = vrot.slane %v184, 6
    %vm198 = vcmp.lt.s32.totalorder %v47, 2
    %v199 = vsel %vm198, %v196, %v197
    %v200 = vsel %vm198, %v195, %v196
    %v201 = vsel %vm198, %v194, %v195
    %v202 = vsel %vm198, %v197, %v194
    %v203 = vlaneseq
    %v204 = vshrl.u32 %v203, 7
    %v205 = vsub.s32 0, %v204
    %v206 = vrot.slane %v185, %v205
    %v207 = vmul.f32 %v202, %v206
    %v208 = vmul.f32 %v201, %v206
    %v209 = vmul.f32 %v200, %v206
    %v210 = vmul.f32 %v199, %v206
    %v211 = vmul.f32 %v207, %v94
    %v212 = vmul.f32 %v208, %v95
    %v213 = vmul.f32 %v209, %v94
    %v214 = vmul.f32 %v210, %v95
    %v215 = vadd.f32 %v190, %v211
    %v216 = vadd.f32 %v191, %v212
    %v217 = vadd.f32 %v192, %v213
    %v218 = vadd.f32 %v193, %v214
    %v219 = vrot.slane %v181, 7
    %v220 = vrot.slane %v182, 7
    %v221 = vrot.slane %v183, 7
    %v222 = vrot.slane %v184, 7
    %vm223 = vcmp.lt.s32.totalorder %v47, 1
    %v224 = vsel %vm223, %v221, %v222
    %v225 = vsel %vm223, %v220, %v221
    %v226 = vsel %vm223, %v219, %v220
    %v227 = vsel %vm223, %v222, %v219
    %v228 = vlaneseq
    %v229 = vshrl.u32 %v228, 7
    %v230 = vsub.s32 1, %v229
    %v231 = vrot.slane %v185, %v230
    %v232 = vmul.f32 %v227, %v231
    %v233 = vmul.f32 %v226, %v231
    %v234 = vmul.f32 %v225, %v231
    %v235 = vmul.f32 %v224, %v231
    %v236 = vmul.f32 %v232, %v88
    %v237 = vmul.f32 %v233, %v89
    %v238 = vmul.f32 %v234, %v88
    %v239 = vmul.f32 %v235, %v89
    %v240 = vadd.f32 %v215, %v236
    %v241 = vadd.f32 %v216, %v237
    %v242 = vadd.f32 %v217, %v238
    %v243 = vadd.f32 %v218, %v239
    %v244 = vrot.slane %v181, 1
    %v245 = vrot.slane %v182, 1
    %v246 = vrot.slane %v183, 1
    %v247 = vrot.slane %v184, 1
    %vm248 = vcmp.lt.s32.totalorder %v47, 7
    %v249 = vsel %vm248, %v246, %v247
    %v250 = vsel %vm248, %v245, %v246
    %v251 = vsel %vm248, %v244, %v245
    %v252 = vsel %vm248, %v247, %v244
    %v253 = vlaneseq
    %v254 = vshrl.u32 %v253, 7
    %v255 = vsub.s32 3, %v254
    %v256 = vrot.slane %v185, %v255
    %v257 = vmul.f32 %v251, %v256
    %v258 = vmul.f32 %v250, %v256
    %v259 = vmul.f32 %v249, %v256
    %v260 = vmul.f32 %v252, %v256
    %v261 = vmul.f32 %v257, %v82
    %v262 = vmul.f32 %v258, %v83
    %v263 = vmul.f32 %v259, %v82
    %v264 = vmul.f32 %v260, %v83
    %v265 = vadd.f32 %v240, %v261
    %v266 = vadd.f32 %v241, %v262
    %v267 = vadd.f32 %v242, %v263
    %v268 = vadd.f32 %v243, %v264
    %v269 = vrot.slane %v181, 2
    %v270 = vrot.slane %v182, 2
    %v271 = vrot.slane %v183, 2
    %v272 = vrot.slane %v184, 2
    %vm273 = vcmp.lt.s32.totalorder %v47, 6
    %v274 = vsel %vm273, %v271, %v272
    %v275 = vsel %vm273, %v270, %v271
    %v276 = vsel %vm273, %v269, %v270
    %v277 = vsel %vm273, %v272, %v269
    %v278 = vlaneseq
    %v279 = vshrl.u32 %v278, 7
    %v280 = vsub.s32 4, %v279
    %v281 = vrot.slane %v185, %v280
    %v282 = vmul.f32 %v276, %v281
    %v283 = vmul.f32 %v275, %v281
    %v284 = vmul.f32 %v274, %v281
    %v285 = vmul.f32 %v277, %v281
    %v286 = vmul.f32 %v282, %v76
    %v287 = vmul.f32 %v283, %v77
    %v288 = vmul.f32 %v284, %v76
    %v289 = vmul.f32 %v285, %v77
    %v290 = vadd.f32 %v265, %v286
    %v291 = vadd.f32 %v266, %v287
    %v292 = vadd.f32 %v267, %v288
    %v293 = vadd.f32 %v268, %v289
    %v294 = vpack.c.bf16 %v291, %v290
    %v295 = vpack.c.bf16 %v293, %v292
    %v296 = vld [vmem:[#allocation4] sm:$0xf]
    %v297 = vld [vmem:[#allocation4 + $0x4] sm:$0xf]
    %v298 = vld [vmem:[#allocation4 + $0x8] sm:$0xf]
    %v299 = vld [vmem:[#allocation4 + $0xc] sm:$0xf]
    %v300 = vld [vmem:[#allocation4 + $0x10] sm:$0xf]
    %v301 = vld [vmem:[#allocation4 + $0x14] sm:$0xf]
    %v302 = vld [vmem:[#allocation4 + $0x18] sm:$0xf]
    %v303 = vld [vmem:[#allocation4 + $0x1c] sm:$0xf]
    %v304 = vld [vmem:[#allocation4 + $0x20] sm:$0xf]
    %v305 = vld [vmem:[#allocation4 + $0x24] sm:$0xf]
    %v306 = vld [vmem:[#allocation4 + $0x28] sm:$0xf]
    %v307 = vld [vmem:[#allocation4 + $0x2c] sm:$0xf]
    %v308 = vld [vmem:[#allocation4 + $0x30] sm:$0xf]
    %v309 = vld [vmem:[#allocation4 + $0x34] sm:$0xf]
    %v310 = vld [vmem:[#allocation4 + $0x38] sm:$0xf]
    %v311 = vld [vmem:[#allocation4 + $0x3c] sm:$0xf]
    %v312 = vld [vmem:[%s6] sm:$0x1]
    %v314 = vlaneseq
    %v315 = vshrl.u32 %v314, 7
    %v316 = vsub.s32 0, %v315
    %v317 = vrot.slane %v312, %v316
    %v335 = vunpack.c.l.b16 %v296
    %v336 = vunpack.c.l.b16 %v297
    %v337 = vunpack.c.l.b16 %v298
    %v338 = vunpack.c.l.b16 %v299
    %v339 = vunpack.c.l.b16 %v300
    %v340 = vunpack.c.l.b16 %v301
    %v341 = vunpack.c.l.b16 %v302
    %v342 = vunpack.c.l.b16 %v303
    %v343 = vunpack.c.l.b16 %v304
    %v344 = vunpack.c.l.b16 %v305
    %v345 = vunpack.c.l.b16 %v306
    %v346 = vunpack.c.l.b16 %v307
    %v347 = vunpack.c.l.b16 %v308
    %v348 = vunpack.c.l.b16 %v309
    %v349 = vunpack.c.l.b16 %v310
    %v350 = vunpack.c.l.b16 %v311
    %v351 = vpack.c.b16 %v336, %v335
    %v352 = vpack.c.b16 %v338, %v337
    %v353 = vpack.c.b16 %v340, %v339
    %v354 = vpack.c.b16 %v342, %v341
    %v355 = vpack.c.b16 %v344, %v343
    %v356 = vpack.c.b16 %v346, %v345
    %v357 = vpack.c.b16 %v348, %v347
    %v358 = vpack.c.b16 %v350, %v349
    %367 = vmatprep.subr.bf16.mxu0 0
    %368 = vmatpush1.bf16.msra.mxu0 %v351
    %369 = vmatprep.subr.bf16.mxu0 0
    %370 = vmatpush1.bf16.msra.mxu0 %v352
    %371 = vmatprep.subr.bf16.mxu0 0
    %372 = vmatpush1.bf16.msra.mxu0 %v353
    %373 = vmatprep.subr.bf16.mxu0 0
    %374 = vmatpush1.bf16.msra.mxu0 %v354
    %375 = vmatprep.subr.bf16.mxu0 0
    %376 = vmatpush1.bf16.msra.mxu0 %v355
    %377 = vmatprep.subr.bf16.mxu0 0
    %378 = vmatpush1.bf16.msra.mxu0 %v356
    %379 = vmatprep.subr.bf16.mxu0 0
    %380 = vmatpush1.bf16.msra.mxu0 %v357
    %381 = vmatprep.subr.bf16.mxu0 0
    %382 = vmatpush1.bf16.msra.mxu0 %v358
    %383 = vmatprep.subr.bf16.mxu0 0
    %384 = vmatpush1.bf16.msra.mxu0 0
    %385 = vmatprep.subr.bf16.mxu0 0
    %386 = vmatpush1.bf16.msra.mxu0 0
    %387 = vmatprep.subr.bf16.mxu0 0
    %388 = vmatpush1.bf16.msra.mxu0 0
    %389 = vmatprep.subr.bf16.mxu0 0
    %390 = vmatpush1.bf16.msra.mxu0 0
    %391 = vmatprep.subr.bf16.mxu0 0
    %392 = vmatpush1.bf16.msra.mxu0 0
    %393 = vmatprep.subr.bf16.mxu0 0
    %394 = vmatpush1.bf16.msra.mxu0 0
    %395 = vmatprep.subr.bf16.mxu0 0
    %396 = vmatpush1.bf16.msra.mxu0 0
    %397 = vmatprep.subr.bf16.mxu0 0
    %398 = vmatpush1.bf16.msra.mxu0 0
    %399 = vmatprep.mubr.bf16.mxu0 0
    %400 = vmatmul.mubr.bf16.gmra.mrb[0].mxu0 %v294
    %v401 = vpop.f32.mrb[0].mxu0
    %v402 = vadd.f32 %v317, %v401
    %v403 = vpop.f32.mrb[0].mxu0
    %v404 = vpop.f32.mrb[0].mxu0
    %v405 = vadd.f32 %v317, %v404
    %v406 = vpop.f32.mrb[0].mxu0
    %407 = vmatprep.mubr.bf16.mxu0 0
    %408 = vmatmul.mubr.bf16.gmra.mrb[0].mxu0 %v295
    %v409 = vpop.f32.mrb[0].mxu0
    %v410 = vadd.f32 %v317, %v409
    %v411 = vpop.f32.mrb[0].mxu0
    %v412 = vpop.f32.mrb[0].mxu0
    %v413 = vadd.f32 %v317, %v412
    %v414 = vpop.f32.mrb[0].mxu0
    %415 = vdwg.mxu0
    %v416 = vmax.f32 %v402, 0.0
    %v417 = vmax.f32 %v405, 0.0
    %v418 = vmax.f32 %v410, 0.0
    %v419 = vmax.f32 %v413, 0.0
    %s420 = scalar_lea.vmem %s4, 8
    %v421 = vld [vmem:[%s420] sm:$0x1f]
    %v422 = vlaneseq
    %v423 = vshrl.u32 %v422, 7
    %v424 = vsub.s32 2, %v423
    %v425 = vrot.slane %v421, %v424
    %v426 = vmul.f32 %v416, %v425
    %v427 = vmul.f32 %v417, %v425
    %v428 = vmul.f32 %v418, %v425
    %v429 = vmul.f32 %v419, %v425
    %v430 = vrot.slane %v416, 6
    %v431 = vrot.slane %v417, 6
    %v432 = vrot.slane %v418, 6
    %v433 = vrot.slane %v419, 6
    %v434 = vsel %vm198, %v432, %v433
    %v435 = vsel %vm198, %v431, %v432
    %v436 = vsel %vm198, %v430, %v431
    %v437 = vsel %vm198, %v433, %v430
    %v438 = vlaneseq
    %v439 = vshrl.u32 %v438, 7
    %v440 = vsub.s32 0, %v439
    %v441 = vrot.slane %v421, %v440
    %v442 = vmul.f32 %v437, %v441
    %v443 = vmul.f32 %v436, %v441
    %v444 = vmul.f32 %v435, %v441
    %v445 = vmul.f32 %v434, %v441
    %v446 = vmul.f32 %v442, %v94
    %v447 = vmul.f32 %v443, %v95
    %v448 = vmul.f32 %v444, %v94
    %v449 = vmul.f32 %v445, %v95
    %v450 = vadd.f32 %v426, %v446
    %v451 = vadd.f32 %v427, %v447
    %v452 = vadd.f32 %v428, %v448
    %v453 = vadd.f32 %v429, %v449
    %v454 = vrot.slane %v416, 7
    %v455 = vrot.slane %v417, 7
    %v456 = vrot.slane %v418, 7
    %v457 = vrot.slane %v419, 7
    %v458 = vsel %vm223, %v456, %v457
    %v459 = vsel %vm223, %v455, %v456
    %v460 = vsel %vm223, %v454, %v455
    %v461 = vsel %vm223, %v457, %v454
    %v462 = vlaneseq
    %v463 = vshrl.u32 %v462, 7
    %v464 = vsub.s32 1, %v463
    %v465 = vrot.slane %v421, %v464
    %v466 = vmul.f32 %v461, %v465
    %v467 = vmul.f32 %v460, %v465
    %v468 = vmul.f32 %v459, %v465
    %v469 = vmul.f32 %v458, %v465
    %v470 = vmul.f32 %v466, %v88
    %v471 = vmul.f32 %v467, %v89
    %v472 = vmul.f32 %v468, %v88
    %v473 = vmul.f32 %v469, %v89
    %v474 = vadd.f32 %v450, %v470
    %v475 = vadd.f32 %v451, %v471
    %v476 = vadd.f32 %v452, %v472
    %v477 = vadd.f32 %v453, %v473
    %v478 = vrot.slane %v416, 1
    %v479 = vrot.slane %v417, 1
    %v480 = vrot.slane %v418, 1
    %v481 = vrot.slane %v419, 1
    %v482 = vsel %vm248, %v480, %v481
    %v483 = vsel %vm248, %v479, %v480
    %v484 = vsel %vm248, %v478, %v479
    %v485 = vsel %vm248, %v481, %v478
    %v486 = vlaneseq
    %v487 = vshrl.u32 %v486, 7
    %v488 = vsub.s32 3, %v487
    %v489 = vrot.slane %v421, %v488
    %v490 = vmul.f32 %v484, %v489
    %v491 = vmul.f32 %v483, %v489
    %v492 = vmul.f32 %v482, %v489
    %v493 = vmul.f32 %v485, %v489
    %v494 = vmul.f32 %v490, %v82
    %v495 = vmul.f32 %v491, %v83
    %v496 = vmul.f32 %v492, %v82
    %v497 = vmul.f32 %v493, %v83
    %v498 = vadd.f32 %v474, %v494
    %v499 = vadd.f32 %v475, %v495
    %v500 = vadd.f32 %v476, %v496
    %v501 = vadd.f32 %v477, %v497
    %v502 = vrot.slane %v416, 2
    %v503 = vrot.slane %v417, 2
    %v504 = vrot.slane %v418, 2
    %v505 = vrot.slane %v419, 2
    %v506 = vsel %vm273, %v504, %v505
    %v507 = vsel %vm273, %v503, %v504
    %v508 = vsel %vm273, %v502, %v503
    %v509 = vsel %vm273, %v505, %v502
    %v510 = vlaneseq
    %v511 = vshrl.u32 %v510, 7
    %v512 = vsub.s32 4, %v511
    %v513 = vrot.slane %v421, %v512
    %v514 = vmul.f32 %v508, %v513
    %v515 = vmul.f32 %v507, %v513
    %v516 = vmul.f32 %v506, %v513
    %v517 = vmul.f32 %v509, %v513
    %v518 = vmul.f32 %v514, %v76
    %v519 = vmul.f32 %v515, %v77
    %v520 = vmul.f32 %v516, %v76
    %v521 = vmul.f32 %v517, %v77
    %v522 = vadd.f32 %v498, %v518
    %v523 = vadd.f32 %v499, %v519
    %v524 = vadd.f32 %v500, %v520
    %v525 = vadd.f32 %v501, %v521
    %v526 = vpack.c.bf16 %v523, %v522
    %v527 = vpack.c.bf16 %v525, %v524
    %s528 = scalar_lea.vmem [#allocation4], 64
    %v529 = vld [vmem:[%s528] sm:$0xf]
    %v530 = vld [vmem:[%s528 + $0x4] sm:$0xf]
    %v531 = vld [vmem:[%s528 + $0x8] sm:$0xf]
    %v532 = vld [vmem:[%s528 + $0xc] sm:$0xf]
    %v533 = vld [vmem:[%s528 + $0x10] sm:$0xf]
    %v534 = vld [vmem:[%s528 + $0x14] sm:$0xf]
    %v535 = vld [vmem:[%s528 + $0x18] sm:$0xf]
    %v536 = vld [vmem:[%s528 + $0x1c] sm:$0xf]
    %v537 = vld [vmem:[%s528 + $0x20] sm:$0xf]
    %v538 = vld [vmem:[%s528 + $0x24] sm:$0xf]
    %v539 = vld [vmem:[%s528 + $0x28] sm:$0xf]
    %v540 = vld [vmem:[%s528 + $0x2c] sm:$0xf]
    %v541 = vld [vmem:[%s528 + $0x30] sm:$0xf]
    %v542 = vld [vmem:[%s528 + $0x34] sm:$0xf]
    %v543 = vld [vmem:[%s528 + $0x38] sm:$0xf]
    %v544 = vld [vmem:[%s528 + $0x3c] sm:$0xf]
    %s545 = scalar_lea.vmem %s6, 1
    %v546 = vld [vmem:[%s545] sm:$0x1]
    %v548 = vlaneseq
    %v549 = vshrl.u32 %v548, 7
    %v550 = vsub.s32 0, %v549
    %v551 = vrot.slane %v546, %v550
    %v569 = vunpack.c.l.b16 %v529
    %v570 = vunpack.c.l.b16 %v530
    %v571 = vunpack.c.l.b16 %v531
    %v572 = vunpack.c.l.b16 %v532
    %v573 = vunpack.c.l.b16 %v533
    %v574 = vunpack.c.l.b16 %v534
    %v575 = vunpack.c.l.b16 %v535
    %v576 = vunpack.c.l.b16 %v536
    %v577 = vunpack.c.l.b16 %v537
    %v578 = vunpack.c.l.b16 %v538
    %v579 = vunpack.c.l.b16 %v539
    %v580 = vunpack.c.l.b16 %v540
    %v581 = vunpack.c.l.b16 %v541
    %v582 = vunpack.c.l.b16 %v542
    %v583 = vunpack.c.l.b16 %v543
    %v584 = vunpack.c.l.b16 %v544
    %v585 = vpack.c.b16 %v570, %v569
    %v586 = vpack.c.b16 %v572, %v571
    %v587 = vpack.c.b16 %v574, %v573
    %v588 = vpack.c.b16 %v576, %v575
    %v589 = vpack.c.b16 %v578, %v577
    %v590 = vpack.c.b16 %v580, %v579
    %v591 = vpack.c.b16 %v582, %v581
    %v592 = vpack.c.b16 %v584, %v583
    %601 = vmatprep.subr.bf16.mxu0 0
    %602 = vmatpush1.bf16.msra.mxu0 %v585
    %603 = vmatprep.subr.bf16.mxu0 0
    %604 = vmatpush1.bf16.msra.mxu0 %v586
    %605 = vmatprep.subr.bf16.mxu0 0
    %606 = vmatpush1.bf16.msra.mxu0 %v587
    %607 = vmatprep.subr.bf16.mxu0 0
    %608 = vmatpush1.bf16.msra.mxu0 %v588
    %609 = vmatprep.subr.bf16.mxu0 0
    %610 = vmatpush1.bf16.msra.mxu0 %v589
    %611 = vmatprep.subr.bf16.mxu0 0
    %612 = vmatpush1.bf16.msra.mxu0 %v590
    %613 = vmatprep.subr.bf16.mxu0 0
    %614 = vmatpush1.bf16.msra.mxu0 %v591
    %615 = vmatprep.subr.bf16.mxu0 0
    %616 = vmatpush1.bf16.msra.mxu0 %v592
    %617 = vmatprep.subr.bf16.mxu0 0
    %618 = vmatpush1.bf16.msra.mxu0 0
    %619 = vmatprep.subr.bf16.mxu0 0
    %620 = vmatpush1.bf16.msra.mxu0 0
    %621 = vmatprep.subr.bf16.mxu0 0
    %622 = vmatpush1.bf16.msra.mxu0 0
    %623 = vmatprep.subr.bf16.mxu0 0
    %624 = vmatpush1.bf16.msra.mxu0 0
    %625 = vmatprep.subr.bf16.mxu0 0
    %626 = vmatpush1.bf16.msra.mxu0 0
    %627 = vmatprep.subr.bf16.mxu0 0
    %628 = vmatpush1.bf16.msra.mxu0 0
    %629 = vmatprep.subr.bf16.mxu0 0
    %630 = vmatpush1.bf16.msra.mxu0 0
    %631 = vmatprep.subr.bf16.mxu0 0
    %632 = vmatpush1.bf16.msra.mxu0 0
    %633 = vmatprep.mubr.bf16.mxu0 0
    %634 = vmatmul.mubr.bf16.gmra.mrb[0].mxu0 %v526
    %v635 = vpop.f32.mrb[0].mxu0
    %v636 = vadd.f32 %v551, %v635
    %v637 = vpop.f32.mrb[0].mxu0
    %v638 = vpop.f32.mrb[0].mxu0
    %v639 = vadd.f32 %v551, %v638
    %v640 = vpop.f32.mrb[0].mxu0
    %641 = vmatprep.mubr.bf16.mxu0 0
    %642 = vmatmul.mubr.bf16.gmra.mrb[0].mxu0 %v527
    %v643 = vpop.f32.mrb[0].mxu0
    %v644 = vadd.f32 %v551, %v643
    %v645 = vpop.f32.mrb[0].mxu0
    %v646 = vpop.f32.mrb[0].mxu0
    %v647 = vadd.f32 %v551, %v646
    %v648 = vpop.f32.mrb[0].mxu0
    %649 = vdwg.mxu0
    %v650 = vmax.f32 %v636, 0.0
    %v651 = vmax.f32 %v639, 0.0
    %v652 = vmax.f32 %v644, 0.0
    %v653 = vmax.f32 %v647, 0.0
    %v654 = vadd.f32 %v106, %v650
    %v655 = vadd.f32 %v107, %v651
    %v656 = vadd.f32 %v108, %v652
    %v657 = vadd.f32 %v109, %v653
    %s658 = scalar_lea.vmem %s3, 2
    %v659 = vld [vmem:[%s658] sm:$0x1]
    %s660 = scalar_lea.vmem %s3, 3
    %v661 = vld [vmem:[%s660] sm:$0x1]
    %662 = vadd.xlane.f32.xlu0 %v654
    %v663 = vpop.xlane.xlu0 %662
    %664 = vadd.xlane.f32.xlu0 %v655
    %v665 = vpop.xlane.xlu0 %664
    %666 = vadd.xlane.f32.xlu0 %v656
    %v667 = vpop.xlane.xlu0 %666
    %668 = vadd.xlane.f32.xlu0 %v657
    %v669 = vpop.xlane.xlu0 %668
    %v670 = vmul.f32 %v663, 0.03125
    %v671 = vmul.f32 %v665, 0.03125
    %v672 = vmul.f32 %v667, 0.03125
    %v673 = vmul.f32 %v669, 0.03125
    %v674 = vsub.f32 %v654, %v670
    %v675 = vsub.f32 %v655, %v671
    %v676 = vsub.f32 %v656, %v672
    %v677 = vsub.f32 %v657, %v673
    %v678 = vmul.f32 %v674, %v71
    %v679 = vmul.f32 %v675, %v71
    %v680 = vmul.f32 %v676, %v71
    %v681 = vmul.f32 %v677, %v71
    %v682 = vmul.f32 %v678, %v678
    %v683 = vmul.f32 %v679, %v679
    %v684 = vmul.f32 %v680, %v680
    %v685 = vmul.f32 %v681, %v681
    %686 = vadd.xlane.f32.xlu0 %v682
    %v687 = vpop.xlane.xlu0 %686
    %688 = vadd.xlane.f32.xlu0 %v683
    %v689 = vpop.xlane.xlu0 %688
    %690 = vadd.xlane.f32.xlu0 %v684
    %v691 = vpop.xlane.xlu0 %690
    %692 = vadd.xlane.f32.xlu0 %v685
    %v693 = vpop.xlane.xlu0 %692
    %v694 = vmul.f32 %v687, 0.03125
    %v695 = vmul.f32 %v689, 0.03125
    %v696 = vmul.f32 %v691, 0.03125
    %v697 = vmul.f32 %v693, 0.03125
    %v698 = vadd.f32 %v694, 1e-05
    %v699 = vadd.f32 %v695, 1e-05
    %v700 = vadd.f32 %v696, 1e-05
    %v701 = vadd.f32 %v697, 1e-05
    %v702 = vrsqrt.pop %v698
    %v703 = vrsqrt.pop %v699
    %v704 = vrsqrt.pop %v700
    %v705 = vrsqrt.pop %v701
    %v706 = vmul.f32 %v678, %v702
    %v707 = vmul.f32 %v679, %v703
    %v708 = vmul.f32 %v680, %v704
    %v709 = vmul.f32 %v681, %v705
    %v711 = vlaneseq
    %v712 = vshrl.u32 %v711, 7
    %v713 = vsub.s32 0, %v712
    %v714 = vrot.slane %v659, %v713
    %v716 = vmul.f32 %v706, %v714
    %v717 = vmul.f32 %v707, %v714
    %v718 = vmul.f32 %v708, %v714
    %v719 = vmul.f32 %v709, %v714
    %v721 = vlaneseq
    %v722 = vshrl.u32 %v721, 7
    %v723 = vsub.s32 0, %v722
    %v724 = vrot.slane %v661, %v723
    %v726 = vadd.f32 %v716, %v724
    %v727 = vadd.f32 %v717, %v724
    %v728 = vadd.f32 %v718, %v724
    %v729 = vadd.f32 %v719, %v724
    %v730 = vmul.f32 %v726, %v63
    %v731 = vmul.f32 %v727, %v64
    %v732 = vmul.f32 %v728, %v65
    %v733 = vmul.f32 %v729, %v66
    %s734 = scalar_lea.vmem %s4, 16
    %v735 = vld [vmem:[%s734] sm:$0x1f]
    %v736 = vlaneseq
    %v737 = vshrl.u32 %v736, 7
    %v738 = vsub.s32 1, %v737
    %v739 = vrot.slane %v735, %v738
    %v740 = vmul.f32 %v730, %v739
    %v741 = vmul.f32 %v731, %v739
    %v742 = vmul.f32 %v732, %v739
    %v743 = vmul.f32 %v733, %v739
    %v744 = vrot.slane %v730, 7
    %v745 = vrot.slane %v731, 7
    %v746 = vrot.slane %v732, 7
    %v747 = vrot.slane %v733, 7
    %v748 = vsel %vm223, %v746, %v747
    %v749 = vsel %vm223, %v745, %v746
    %v750 = vsel %vm223, %v744, %v745
    %v751 = vsel %vm223, %v747, %v744
    %v752 = vlaneseq
    %v753 = vshrl.u32 %v752, 7
    %v754 = vsub.s32 0, %v753
    %v755 = vrot.slane %v735, %v754
    %v756 = vmul.f32 %v751, %v755
    %v757 = vmul.f32 %v750, %v755
    %v758 = vmul.f32 %v749, %v755
    %v759 = vmul.f32 %v748, %v755
    %v760 = vmul.f32 %v756, %v88
    %v761 = vmul.f32 %v757, %v89
    %v762 = vmul.f32 %v758, %v88
    %v763 = vmul.f32 %v759, %v89
    %v764 = vadd.f32 %v740, %v760
    %v765 = vadd.f32 %v741, %v761
    %v766 = vadd.f32 %v742, %v762
    %v767 = vadd.f32 %v743, %v763
    %v768 = vrot.slane %v730, 1
    %v769 = vrot.slane %v731, 1
    %v770 = vrot.slane %v732, 1
    %v771 = vrot.slane %v733, 1
    %v772 = vsel %vm248, %v770, %v771
    %v773 = vsel %vm248, %v769, %v770
    %v774 = vsel %vm248, %v768, %v769
    %v775 = vsel %vm248, %v771, %v768
    %v776 = vlaneseq
    %v777 = vshrl.u32 %v776, 7
    %v778 = vsub.s32 2, %v777
    %v779 = vrot.slane %v735, %v778
    %v780 = vmul.f32 %v774, %v779
    %v781 = vmul.f32 %v773, %v779
    %v782 = vmul.f32 %v772, %v779
    %v783 = vmul.f32 %v775, %v779
    %v784 = vmul.f32 %v780, %v82
    %v785 = vmul.f32 %v781, %v83
    %v786 = vmul.f32 %v782, %v82
    %v787 = vmul.f32 %v783, %v83
    %v788 = vadd.f32 %v764, %v784
    %v789 = vadd.f32 %v765, %v785
    %v790 = vadd.f32 %v766, %v786
    %v791 = vadd.f32 %v767, %v787
    %v792 = vpack.c.bf16 %v789, %v788
    %v793 = vpack.c.bf16 %v791, %v790
    %s794 = scalar_lea.vmem [#allocation4], 128
    %v795 = vld [vmem:[%s794] sm:$0xf]
    %v796 = vld [vmem:[%s794 + $0x4] sm:$0xf]
    %v797 = vld [vmem:[%s794 + $0x8] sm:$0xf]
    %v798 = vld [vmem:[%s794 + $0xc] sm:$0xf]
    %v799 = vld [vmem:[%s794 + $0x10] sm:$0xf]
    %v800 = vld [vmem:[%s794 + $0x14] sm:$0xf]
    %v801 = vld [vmem:[%s794 + $0x18] sm:$0xf]
    %v802 = vld [vmem:[%s794 + $0x1c] sm:$0xf]
    %v803 = vld [vmem:[%s794 + $0x20] sm:$0xf]
    %v804 = vld [vmem:[%s794 + $0x24] sm:$0xf]
    %v805 = vld [vmem:[%s794 + $0x28] sm:$0xf]
    %v806 = vld [vmem:[%s794 + $0x2c] sm:$0xf]
    %v807 = vld [vmem:[%s794 + $0x30] sm:$0xf]
    %v808 = vld [vmem:[%s794 + $0x34] sm:$0xf]
    %v809 = vld [vmem:[%s794 + $0x38] sm:$0xf]
    %v810 = vld [vmem:[%s794 + $0x3c] sm:$0xf]
    %s811 = scalar_lea.vmem %s6, 2
    %v812 = vld [vmem:[%s811] sm:$0x1]
    %v814 = vlaneseq
    %v815 = vshrl.u32 %v814, 7
    %v816 = vsub.s32 0, %v815
    %v817 = vrot.slane %v812, %v816
    %v835 = vunpack.c.l.b16 %v795
    %v836 = vunpack.c.l.b16 %v796
    %v837 = vunpack.c.l.b16 %v797
    %v838 = vunpack.c.l.b16 %v798
    %v839 = vunpack.c.l.b16 %v799
    %v840 = vunpack.c.l.b16 %v800
    %v841 = vunpack.c.l.b16 %v801
    %v842 = vunpack.c.l.b16 %v802
    %v843 = vunpack.c.l.b16 %v803
    %v844 = vunpack.c.l.b16 %v804
    %v845 = vunpack.c.l.b16 %v805
    %v846 = vunpack.c.l.b16 %v806
    %v847 = vunpack.c.l.b16 %v807
    %v848 = vunpack.c.l.b16 %v808
    %v849 = vunpack.c.l.b16 %v809
    %v850 = vunpack.c.l.b16 %v810
    %v851 = vpack.c.b16 %v836, %v835
    %v852 = vpack.c.b16 %v838, %v837
    %v853 = vpack.c.b16 %v840, %v839
    %v854 = vpack.c.b16 %v842, %v841
    %v855 = vpack.c.b16 %v844, %v843
    %v856 = vpack.c.b16 %v846, %v845
    %v857 = vpack.c.b16 %v848, %v847
    %v858 = vpack.c.b16 %v850, %v849
    %867 = vmatprep.subr.bf16.mxu0 0
    %868 = vmatpush1.bf16.msra.mxu0 %v851
    %869 = vmatprep.subr.bf16.mxu0 0
    %870 = vmatpush1.bf16.msra.mxu0 %v852
    %871 = vmatprep.subr.bf16.mxu0 0
    %872 = vmatpush1.bf16.msra.mxu0 %v853
    %873 = vmatprep.subr.bf16.mxu0 0
    %874 = vmatpush1.bf16.msra.mxu0 %v854
    %875 = vmatprep.subr.bf16.mxu0 0
    %876 = vmatpush1.bf16.msra.mxu0 %v855
    %877 = vmatprep.subr.bf16.mxu0 0
    %878 = vmatpush1.bf16.msra.mxu0 %v856
    %879 = vmatprep.subr.bf16.mxu0 0
    %880 = vmatpush1.bf16.msra.mxu0 %v857
    %881 = vmatprep.subr.bf16.mxu0 0
    %882 = vmatpush1.bf16.msra.mxu0 %v858
    %883 = vmatprep.subr.bf16.mxu0 0
    %884 = vmatpush1.bf16.msra.mxu0 0
    %885 = vmatprep.subr.bf16.mxu0 0
    %886 = vmatpush1.bf16.msra.mxu0 0
    %887 = vmatprep.subr.bf16.mxu0 0
    %888 = vmatpush1.bf16.msra.mxu0 0
    %889 = vmatprep.subr.bf16.mxu0 0
    %890 = vmatpush1.bf16.msra.mxu0 0
    %891 = vmatprep.subr.bf16.mxu0 0
    %892 = vmatpush1.bf16.msra.mxu0 0
    %893 = vmatprep.subr.bf16.mxu0 0
    %894 = vmatpush1.bf16.msra.mxu0 0
    %895 = vmatprep.subr.bf16.mxu0 0
    %896 = vmatpush1.bf16.msra.mxu0 0
    %897 = vmatprep.subr.bf16.mxu0 0
    %898 = vmatpush1.bf16.msra.mxu0 0
    %899 = vmatprep.mubr.bf16.mxu0 0
    %900 = vmatmul.mubr.bf16.gmra.mrb[0].mxu0 %v792
    %v901 = vpop.f32.mrb[0].mxu0
    %v902 = vadd.f32 %v817, %v901
    %v903 = vpop.f32.mrb[0].mxu0
    %v904 = vpop.f32.mrb[0].mxu0
    %v905 = vadd.f32 %v817, %v904
    %v906 = vpop.f32.mrb[0].mxu0
    %907 = vmatprep.mubr.bf16.mxu0 0
    %908 = vmatmul.mubr.bf16.gmra.mrb[0].mxu0 %v793
    %v909 = vpop.f32.mrb[0].mxu0
    %v910 = vadd.f32 %v817, %v909
    %v911 = vpop.f32.mrb[0].mxu0
    %v912 = vpop.f32.mrb[0].mxu0
    %v913 = vadd.f32 %v817, %v912
    %v914 = vpop.f32.mrb[0].mxu0
    %915 = vdwg.mxu0
    %v916 = vmax.f32 %v902, 0.0
    %v917 = vmax.f32 %v905, 0.0
    %v918 = vmax.f32 %v910, 0.0
    %v919 = vmax.f32 %v913, 0.0
    %s920 = scalar_lea.vmem %s4, 24
    %v921 = vld [vmem:[%s920] sm:$0x1f]
    %v922 = vlaneseq
    %v923 = vshrl.u32 %v922, 7
    %v924 = vsub.s32 1, %v923
    %v925 = vrot.slane %v921, %v924
    %v926 = vmul.f32 %v916, %v925
    %v927 = vmul.f32 %v917, %v925
    %v928 = vmul.f32 %v918, %v925
    %v929 = vmul.f32 %v919, %v925
    %v930 = vrot.slane %v916, 7
    %v931 = vrot.slane %v917, 7
    %v932 = vrot.slane %v918, 7
    %v933 = vrot.slane %v919, 7
    %v934 = vsel %vm223, %v932, %v933
    %v935 = vsel %vm223, %v931, %v932
    %v936 = vsel %vm223, %v930, %v931
    %v937 = vsel %vm223, %v933, %v930
    %v938 = vlaneseq
    %v939 = vshrl.u32 %v938, 7
    %v940 = vsub.s32 0, %v939
    %v941 = vrot.slane %v921, %v940
    %v942 = vmul.f32 %v937, %v941
    %v943 = vmul.f32 %v936, %v941
    %v944 = vmul.f32 %v935, %v941
    %v945 = vmul.f32 %v934, %v941
    %v946 = vmul.f32 %v942, %v88
    %v947 = vmul.f32 %v943, %v89
    %v948 = vmul.f32 %v944, %v88
    %v949 = vmul.f32 %v945, %v89
    %v950 = vadd.f32 %v926, %v946
    %v951 = vadd.f32 %v927, %v947
    %v952 = vadd.f32 %v928, %v948
    %v953 = vadd.f32 %v929, %v949
    %v954 = vrot.slane %v916, 1
    %v955 = vrot.slane %v917, 1
    %v956 = vrot.slane %v918, 1
    %v957 = vrot.slane %v919, 1
    %v958 = vsel %vm248, %v956, %v957
    %v959 = vsel %vm248, %v955, %v956
    %v960 = vsel %vm248, %v954, %v955
    %v961 = vsel %vm248, %v957, %v954
    %v962 = vlaneseq
    %v963 = vshrl.u32 %v962, 7
    %v964 = vsub.s32 2, %v963
    %v965 = vrot.slane %v921, %v964
    %v966 = vmul.f32 %v960, %v965
    %v967 = vmul.f32 %v959, %v965
    %v968 = vmul.f32 %v958, %v965
    %v969 = vmul.f32 %v961, %v965
    %v970 = vmul.f32 %v966, %v82
    %v971 = vmul.f32 %v967, %v83
    %v972 = vmul.f32 %v968, %v82
    %v973 = vmul.f32 %v969, %v83
    %v974 = vadd.f32 %v950, %v970
    %v975 = vadd.f32 %v951, %v971
    %v976 = vadd.f32 %v952, %v972
    %v977 = vadd.f32 %v953, %v973
    %v978 = vpack.c.bf16 %v975, %v974
    %v979 = vpack.c.bf16 %v977, %v976
    %s980 = scalar_lea.vmem [#allocation4], 192
    %v981 = vld [vmem:[%s980] sm:$0xf]
    %v982 = vld [vmem:[%s980 + $0x4] sm:$0xf]
    %v983 = vld [vmem:[%s980 + $0x8] sm:$0xf]
    %v984 = vld [vmem:[%s980 + $0xc] sm:$0xf]
    %v985 = vld [vmem:[%s980 + $0x10] sm:$0xf]
    %v986 = vld [vmem:[%s980 + $0x14] sm:$0xf]
    %v987 = vld [vmem:[%s980 + $0x18] sm:$0xf]
    %v988 = vld [vmem:[%s980 + $0x1c] sm:$0xf]
    %v989 = vld [vmem:[%s980 + $0x20] sm:$0xf]
    %v990 = vld [vmem:[%s980 + $0x24] sm:$0xf]
    %v991 = vld [vmem:[%s980 + $0x28] sm:$0xf]
    %v992 = vld [vmem:[%s980 + $0x2c] sm:$0xf]
    %v993 = vld [vmem:[%s980 + $0x30] sm:$0xf]
    %v994 = vld [vmem:[%s980 + $0x34] sm:$0xf]
    %v995 = vld [vmem:[%s980 + $0x38] sm:$0xf]
    %v996 = vld [vmem:[%s980 + $0x3c] sm:$0xf]
    %s997 = scalar_lea.vmem %s6, 3
    %v998 = vld [vmem:[%s997] sm:$0x1]
    %v1000 = vlaneseq
    %v1001 = vshrl.u32 %v1000, 7
    %v1002 = vsub.s32 0, %v1001
    %v1003 = vrot.slane %v998, %v1002
    %v1021 = vunpack.c.l.b16 %v981
    %v1022 = vunpack.c.l.b16 %v982
    %v1023 = vunpack.c.l.b16 %v983
    %v1024 = vunpack.c.l.b16 %v984
    %v1025 = vunpack.c.l.b16 %v985
    %v1026 = vunpack.c.l.b16 %v986
    %v1027 = vunpack.c.l.b16 %v987
    %v1028 = vunpack.c.l.b16 %v988
    %v1029 = vunpack.c.l.b16 %v989
    %v1030 = vunpack.c.l.b16 %v990
    %v1031 = vunpack.c.l.b16 %v991
    %v1032 = vunpack.c.l.b16 %v992
    %v1033 = vunpack.c.l.b16 %v993
    %v1034 = vunpack.c.l.b16 %v994
    %v1035 = vunpack.c.l.b16 %v995
    %v1036 = vunpack.c.l.b16 %v996
    %v1037 = vpack.c.b16 %v1022, %v1021
    %v1038 = vpack.c.b16 %v1024, %v1023
    %v1039 = vpack.c.b16 %v1026, %v1025
    %v1040 = vpack.c.b16 %v1028, %v1027
    %v1041 = vpack.c.b16 %v1030, %v1029
    %v1042 = vpack.c.b16 %v1032, %v1031
    %v1043 = vpack.c.b16 %v1034, %v1033
    %v1044 = vpack.c.b16 %v1036, %v1035
    %1053 = vmatprep.subr.bf16.mxu0 0
    %1054 = vmatpush1.bf16.msra.mxu0 %v1037
    %1055 = vmatprep.subr.bf16.mxu0 0
    %1056 = vmatpush1.bf16.msra.mxu0 %v1038
    %1057 = vmatprep.subr.bf16.mxu0 0
    %1058 = vmatpush1.bf16.msra.mxu0 %v1039
    %1059 = vmatprep.subr.bf16.mxu0 0
    %1060 = vmatpush1.bf16.msra.mxu0 %v1040
    %1061 = vmatprep.subr.bf16.mxu0 0
    %1062 = vmatpush1.bf16.msra.mxu0 %v1041
    %1063 = vmatprep.subr.bf16.mxu0 0
    %1064 = vmatpush1.bf16.msra.mxu0 %v1042
    %1065 = vmatprep.subr.bf16.mxu0 0
    %1066 = vmatpush1.bf16.msra.mxu0 %v1043
    %1067 = vmatprep.subr.bf16.mxu0 0
    %1068 = vmatpush1.bf16.msra.mxu0 %v1044
    %1069 = vmatprep.subr.bf16.mxu0 0
    %1070 = vmatpush1.bf16.msra.mxu0 0
    %1071 = vmatprep.subr.bf16.mxu0 0
    %1072 = vmatpush1.bf16.msra.mxu0 0
    %1073 = vmatprep.subr.bf16.mxu0 0
    %1074 = vmatpush1.bf16.msra.mxu0 0
    %1075 = vmatprep.subr.bf16.mxu0 0
    %1076 = vmatpush1.bf16.msra.mxu0 0
    %1077 = vmatprep.subr.bf16.mxu0 0
    %1078 = vmatpush1.bf16.msra.mxu0 0
    %1079 = vmatprep.subr.bf16.mxu0 0
    %1080 = vmatpush1.bf16.msra.mxu0 0
    %1081 = vmatprep.subr.bf16.mxu0 0
    %1082 = vmatpush1.bf16.msra.mxu0 0
    %1083 = vmatprep.subr.bf16.mxu0 0
    %1084 = vmatpush1.bf16.msra.mxu0 0
    %1085 = vmatprep.mubr.bf16.mxu0 0
    %1086 = vmatmul.mubr.bf16.gmra.mrb[0].mxu0 %v978
    %v1087 = vpop.f32.mrb[0].mxu0
    %v1088 = vadd.f32 %v1003, %v1087
    %v1089 = vpop.f32.mrb[0].mxu0
    %v1090 = vpop.f32.mrb[0].mxu0
    %v1091 = vadd.f32 %v1003, %v1090
    %v1092 = vpop.f32.mrb[0].mxu0
    %1093 = vmatprep.mubr.bf16.mxu0 0
    %1094 = vmatmul.mubr.bf16.gmra.mrb[0].mxu0 %v979
    %v1095 = vpop.f32.mrb[0].mxu0
    %v1096 = vadd.f32 %v1003, %v1095
    %v1097 = vpop.f32.mrb[0].mxu0
    %v1098 = vpop.f32.mrb[0].mxu0
    %v1099 = vadd.f32 %v1003, %v1098
    %v1100 = vpop.f32.mrb[0].mxu0
    %1101 = vdwg.mxu0
    %v1102 = vmax.f32 %v1088, 0.0
    %v1103 = vmax.f32 %v1091, 0.0
    %v1104 = vmax.f32 %v1096, 0.0
    %v1105 = vmax.f32 %v1099, 0.0
    %v1106 = vadd.f32 %v654, %v1102
    %v1107 = vadd.f32 %v655, %v1103
    %v1108 = vadd.f32 %v656, %v1104
    %v1109 = vadd.f32 %v657, %v1105
    %s1110 = scalar_lea.vmem %s3, 4
    %v1111 = vld [vmem:[%s1110] sm:$0x1]
    %s1112 = scalar_lea.vmem %s3, 5
    %v1113 = vld [vmem:[%s1112] sm:$0x1]
    %1114 = vadd.xlane.f32.xlu0 %v1106
    %v1115 = vpop.xlane.xlu0 %1114
    %1116 = vadd.xlane.f32.xlu0 %v1107
    %v1117 = vpop.xlane.xlu0 %1116
    %1118 = vadd.xlane.f32.xlu0 %v1108
    %v1119 = vpop.xlane.xlu0 %1118
    %1120 = vadd.xlane.f32.xlu0 %v1109
    %v1121 = vpop.xlane.xlu0 %1120
    %v1122 = vmul.f32 %v1115, 0.03125
    %v1123 = vmul.f32 %v1117, 0.03125
    %v1124 = vmul.f32 %v1119, 0.03125
    %v1125 = vmul.f32 %v1121, 0.03125
    %v1126 = vsub.f32 %v1106, %v1122
    %v1127 = vsub.f32 %v1107, %v1123
    %v1128 = vsub.f32 %v1108, %v1124
    %v1129 = vsub.f32 %v1109, %v1125
    %v1130 = vmul.f32 %v1126, %v71
    %v1131 = vmul.f32 %v1127, %v71
    %v1132 = vmul.f32 %v1128, %v71
    %v1133 = vmul.f32 %v1129, %v71
    %v1134 = vmul.f32 %v1130, %v1130
    %v1135 = vmul.f32 %v1131, %v1131
    %v1136 = vmul.f32 %v1132, %v1132
    %v1137 = vmul.f32 %v1133, %v1133
    %1138 = vadd.xlane.f32.xlu0 %v1134
    %v1139 = vpop.xlane.xlu0 %1138
    %1140 = vadd.xlane.f32.xlu0 %v1135
    %v1141 = vpop.xlane.xlu0 %1140
    %1142 = vadd.xlane.f32.xlu0 %v1136
    %v1143 = vpop.xlane.xlu0 %1142
    %1144 = vadd.xlane.f32.xlu0 %v1137
    %v1145 = vpop.xlane.xlu0 %1144
    %v1146 = vmul.f32 %v1139, 0.03125
    %v1147 = vmul.f32 %v1141, 0.03125
    %v1148 = vmul.f32 %v1143, 0.03125
    %v1149 = vmul.f32 %v1145, 0.03125
    %v1150 = vadd.f32 %v1146, 1e-05
    %v1151 = vadd.f32 %v1147, 1e-05
    %v1152 = vadd.f32 %v1148, 1e-05
    %v1153 = vadd.f32 %v1149, 1e-05
    %v1154 = vrsqrt.pop %v1150
    %v1155 = vrsqrt.pop %v1151
    %v1156 = vrsqrt.pop %v1152
    %v1157 = vrsqrt.pop %v1153
    %v1158 = vmul.f32 %v1130, %v1154
    %v1159 = vmul.f32 %v1131, %v1155
    %v1160 = vmul.f32 %v1132, %v1156
    %v1161 = vmul.f32 %v1133, %v1157
    %v1163 = vlaneseq
    %v1164 = vshrl.u32 %v1163, 7
    %v1165 = vsub.s32 0, %v1164
    %v1166 = vrot.slane %v1111, %v1165
    %v1168 = vmul.f32 %v1158, %v1166
    %v1169 = vmul.f32 %v1159, %v1166
    %v1170 = vmul.f32 %v1160, %v1166
    %v1171 = vmul.f32 %v1161, %v1166
    %v1173 = vlaneseq
    %v1174 = vshrl.u32 %v1173, 7
    %v1175 = vsub.s32 0, %v1174
    %v1176 = vrot.slane %v1113, %v1175
    %v1178 = vadd.f32 %v1168, %v1176
    %v1179 = vadd.f32 %v1169, %v1176
    %v1180 = vadd.f32 %v1170, %v1176
    %v1181 = vadd.f32 %v1171, %v1176
    %1182 = vst [vmem:[#allocation7] sm:$0xff] %v1178
    %1183 = vst [vmem:[#allocation7 + $0x8] sm:$0xff] %v1179
    %1184 = vst [vmem:[#allocation7 + $0x10] sm:$0xff] %v1180
    %1185 = vst [vmem:[#allocation7 + $0x18] sm:$0xff] %v1181
    // Predicated region
    $region30: #{tpu_custom_call.1} parent=1 // pred_check
      _
    $region31: #{tpu_custom_call.1} parent=1 // pred_check_branch
      %1187 = sbr.rel (0) target = $region33
    $region32: #{tpu_custom_call.1} parent=1 // pred_region
      %s1189 = ssub.s32 512, 512
      %1190 = vsyncadd [#allocation6], %s1189
      %s1191 = sshll.u32 [#allocation7], 4
      %s1192 = int_to_ptr.vmem [resolvable:$true] %s1191
      %1197 = dma.vmem_to_hbm [thread:$0]  %s1192, 512, %s7, [#allocation6], 128, 128, 8
    $region33: #{tpu_custom_call.1} parent=1 // pred_fallthru
      _
    // Predicated region
    $region34: #{tpu_custom_call.1} parent=1 // pred_check
      _
    $region35: #{tpu_custom_call.1} parent=1 // pred_check_branch
      %1199 = sbr.rel (0) target = $region37
    $region36: #{tpu_custom_call.1} parent=1 // pred_region
      %1200 = dma.done [#allocation6], 512
    $region37: #{tpu_custom_call.1} parent=1 // pred_fallthru
      _
    %1201 = vsyncpa [#allocation5], 1
    %1202 = vsyncpa [#allocation6], 1

</llo_original>
